<compile_context>
chip_gen: v5e
topology: v5e:2x2
jax: 0.10.0
libtpu: 0.0.40
codegen_flags: <defaults>
</compile_context>

<pallas_src>
import numpy as np
import jax
import jax.numpy as jnp
from jax.experimental import pallas as pl
from jax.experimental.pallas import tpu as pltpu

VMEM_SPEC = pl.BlockSpec(memory_space=pltpu.MemorySpace.VMEM)
NUM_LAYERS = 4


def _vmem_limit_bytes():
    """VMEM scoped limit with headroom (v7x physical VMEM is only 64 MiB/TC)."""
    try:
        cap = pltpu.get_tpu_info().vmem_capacity_bytes
    except Exception:
        cap = 64 * 1024 * 1024
    return min(int(cap * 3 // 4), 96 * 1024 * 1024)


def _bn_fold_linear(H2, gamma, beta, W, b):
    """Training-mode BatchNorm1d folded into the Linear that follows it.

    Hn = (H2 - mean) * rsqrt(var + eps) * gamma + beta;  returns Hn @ W + b
    computed as H2 @ (s*W) + ((beta - mean*s) @ W + b), so the full-tensor
    normalization pass never materializes (only the two reductions do).
    """
    mean = jnp.mean(H2, axis=0, keepdims=True)                       # (1, cin)
    mean_sq = jnp.mean(H2 * H2, axis=0, keepdims=True)               # (1, cin)
    var = jnp.maximum(mean_sq - mean * mean, 0.0)                    # clamp >= 0
    s = gamma * jax.lax.rsqrt(var + 1e-5)                            # (1, cin)
    Wf = W * s.reshape(W.shape[0], 1)                                # (cin, cout)
    bf = jnp.dot(beta - mean * s, W,
                 preferred_element_type=jnp.float32) + b             # (1, cout)
    return jnp.dot(H2.astype(jnp.bfloat16), Wf.astype(jnp.bfloat16),
                   preferred_element_type=jnp.float32) + bf


# ----------------------------------------------------------------------------
# Fused kernel: 4x GCNLayer (gather folded into layer 4) -> ChannelAttention ->
#               neigh_Conv2 (banded channel mix) -> BatchNorm1d(64)
# ----------------------------------------------------------------------------
def fused_gcn_kernel(h_ref, a_ref, idx_ref, *rest):
    """rest layout:
         rest[0 : 4*NUM_LAYERS]  : per layer (gamma(1,Cin), beta(1,Cin), W(Cin,Cout), b(1,Cout))
         rest[4*NUM_LAYERS : -1] : ca_w1_t(C,Cr), ca_w2_t(Cr,C), M_t(C,C),
                                   bconv(1,C), bn_gamma(1,C), bn_beta(1,C)
         rest[-1]                : out_ref (B, in_num, C)
    """
    layer_refs = rest[:4 * NUM_LAYERS]
    (ca_w1t_ref, ca_w2t_ref, mt_ref, bconv_ref,
     bng_ref, bnb_ref, out_ref) = rest[4 * NUM_LAYERS:]

    # ---- A_hat = I + D^-1/2 A D^-1/2, built ONCE, directly in bf16 ----------
    A = a_ref[...]                                          # (B, L, L) bf16
    B, L, _ = A.shape
    d = jnp.sum(A, axis=2, dtype=jnp.float32)               # f32 accumulation
    # Guard isolated nodes (torch would produce inf/NaN here) -- documented.
    dinv = jnp.where(d > 0, jax.lax.rsqrt(jnp.maximum(d, 1e-12)), 0.0)
    dinv_bf = dinv.astype(jnp.bfloat16)
    row = jax.lax.broadcasted_iota(jnp.int32, (L, L), 0)
    col = jax.lax.broadcasted_iota(jnp.int32, (L, L), 1)
    eye_bf = (row == col).astype(jnp.bfloat16)
    A_hat = dinv_bf[:, :, None] * A * dinv_bf[:, None, :] + eye_bf[None]

    # ---- Row-select A_hat for the training nodes (gather folded into layer 4)
    idx = idx_ref[...]                                      # (B, in_num) int32
    in_num = idx.shape[1]
    l_iota = jax.lax.broadcasted_iota(jnp.int32, (B, in_num, L), 2)
    onehot = (idx[:, :, None] == l_iota).astype(jnp.bfloat16)
    A_sel = jnp.einsum("bil,blm->bim", onehot, A_hat,
                       preferred_element_type=jnp.float32).astype(jnp.bfloat16)

    # ---- layers 0..2: BN folded into Linear, full-graph propagation ---------
    H = h_ref[...]                                          # (B, L, C0) f32
    for li in range(NUM_LAYERS - 1):
        gamma = layer_refs[4 * li + 0][...]
        beta = layer_refs[4 * li + 1][...]
        W = layer_refs[4 * li + 2][...]
        b = layer_refs[4 * li + 3][...]
        cin, cout = W.shape
        HW = _bn_fold_linear(H.reshape(B * L, cin), gamma, beta, W, b)
        out = jnp.einsum("bij,bjo->bio", A_hat,
                         HW.reshape(B, L, cout).astype(jnp.bfloat16),
                         preferred_element_type=jnp.float32)
        H = jnp.where(out > 0, out, 0.01 * out)             # LeakyReLU(0.01)

    # ---- layer 3: propagate ONLY the in_num selected rows (in_num << L) -----
    li = NUM_LAYERS - 1
    gamma = layer_refs[4 * li + 0][...]
    beta = layer_refs[4 * li + 1][...]
    W = layer_refs[4 * li + 2][...]
    b = layer_refs[4 * li + 3][...]
    cin, C = W.shape
    HW = _bn_fold_linear(H.reshape(B * L, cin), gamma, beta, W, b)
    out = jnp.einsum("bil,blo->bio", A_sel,
                     HW.reshape(B, L, C).astype(jnp.bfloat16),
                     preferred_element_type=jnp.float32)    # (B, in_num, C)
    y0 = jnp.where(out > 0, out, 0.01 * out)

    # ---- ChannelAttention: avg/max pool over spatial + shared 2-layer MLP ---
    w1t = ca_w1t_ref[...]                                   # (C, Cr)
    w2t = ca_w2t_ref[...]                                   # (Cr, C)
    avg = jnp.mean(y0, axis=1)                              # (B, C)
    mx = jnp.max(y0, axis=1)                                # (B, C)

    def fc(v):
        h1 = jnp.maximum(jnp.dot(v, w1t, preferred_element_type=jnp.float32), 0.0)
        return jnp.dot(h1, w2t, preferred_element_type=jnp.float32)

    att = jax.nn.sigmoid(fc(avg) + fc(mx))                  # (B, C)
    y = y0 * att[:, None, :]                                # (B, in_num, C)

    # ---- neigh_Conv2: banded channel mix (identity folded), tiny f32 matmul -
    z = jnp.dot(y.reshape(B * in_num, C), mt_ref[...],
                preferred_element_type=jnp.float32) + bconv_ref[...]

    # ---- BatchNorm1d(C): training-mode stats, clamped single-pass variance --
    zmean = jnp.mean(z, axis=0, keepdims=True)
    zvar = jnp.maximum(jnp.mean(z * z, axis=0, keepdims=True) - zmean * zmean, 0.0)
    zn = (z - zmean) * jax.lax.rsqrt(zvar + 1e-5) * bng_ref[...] + bnb_ref[...]

    out_ref[...] = zn.reshape(B, in_num, C)


# ----------------------------------------------------------------------------
# Wrapper (single pallas_call) and parameter construction
# ----------------------------------------------------------------------------
def gcn_forward(x, A, indexs_train, p):
    B, h, w, c = x.shape
    L = h * w
    in_num = indexs_train.shape[1]
    C = 64
    H0 = x.reshape(B, L, c).astype(jnp.float32)

    # A in bf16: halves the dominant HBM read and the resident L*L footprint.
    args = [H0, A.astype(jnp.bfloat16), indexs_train.astype(jnp.int32)]
    for gamma, beta, W, b in p["gcn_layers"]:
        cin, cout = W.shape
        args += [gamma.reshape(1, cin), beta.reshape(1, cin), W, b.reshape(1, cout)]
    # Head params pre-transposed in the wrapper (layout plumbing) so every
    # in-kernel matmul is lane-dense with no in-kernel transposes.
    args += [
        jnp.transpose(p["ca_w1"]),        # (C, Cr)
        jnp.transpose(p["ca_w2"]),        # (Cr, C)
        jnp.transpose(p["neigh_M"]),      # (C, C): kernel computes y @ M^T
        p["neigh_b"].reshape(1, C),
        p["bn_gamma"].reshape(1, C),
        p["bn_beta"].reshape(1, C),
    ]

    out = pl.pallas_call(
        fused_gcn_kernel,
        out_shape=jax.ShapeDtypeStruct((B, in_num, C), jnp.float32),
        in_specs=[VMEM_SPEC] * len(args),
        out_specs=VMEM_SPEC,
        compiler_params=pltpu.CompilerParams(vmem_limit_bytes=_vmem_limit_bytes()),
    )(*args)

    # The torch module returns (B, 64, in_num); this cheap transpose stays
    # outside the kernel.
    return jnp.transpose(out, (0, 2, 1))


def build_neigh_matrix(wconv, c, neigh):
    """Fold neigh_Conv2's per-channel 1x1 convs + residual into one (c, c) matrix."""
    wconv = np.asarray(wconv)
    start = (neigh - 1) // 2
    end = c - 1 - start
    M = np.zeros((c, c), dtype=np.float32)
    for i in range(c):
        if i == 0:
            s = i
        elif i < start:
            s = 0
        elif i <= end:
            s = i - start
        else:
            s = c - neigh
        M[i, s:s + neigh] += wconv[i]
        M[i, i] += 1.0  # "self_c +" residual
    return jnp.asarray(M)


def init_params(key, channel):
    dims = [(channel, 128), (128, 128), (128, 128), (128, 64)]
    keys = jax.random.split(key, 4 * len(dims) + 8)
    k = iter(keys)
    gcn_layers = []
    for cin, cout in dims:
        gamma = 1.0 + 0.1 * jax.random.normal(next(k), (cin,), jnp.float32)
        beta = 0.1 * jax.random.normal(next(k), (cin,), jnp.float32)
        W = 0.2 * jax.random.normal(next(k), (cin, cout), jnp.float32)
        b = 0.1 * jax.random.normal(next(k), (cout,), jnp.float32)
        gcn_layers.append((gamma, beta, W, b))

    C = 64
    ca_w1 = 0.2 * jax.random.normal(next(k), (C // 16, C), jnp.float32)  # Conv2d(64,4,1,bias=False)
    ca_w2 = 0.2 * jax.random.normal(next(k), (C, C // 16), jnp.float32)  # Conv2d(4,64,1,bias=False)
    neigh_w = 0.2 * jax.random.normal(next(k), (C, 3), jnp.float32)      # 64 x Conv2d(3,1,1)
    neigh_b = 0.1 * jax.random.normal(next(k), (C,), jnp.float32)
    bn_gamma = 1.0 + 0.1 * jax.random.normal(next(k), (C,), jnp.float32)
    bn_beta = 0.1 * jax.random.normal(next(k), (C,), jnp.float32)

    return {
        "gcn_layers": gcn_layers,
        "ca_w1": ca_w1,
        "ca_w2": ca_w2,
        "neigh_M": build_neigh_matrix(neigh_w, C, 3),
        "neigh_b": neigh_b,
        "bn_gamma": bn_gamma,
        "bn_beta": bn_beta,
    }


if __name__ == "__main__":
    key = jax.random.PRNGKey(0)
    k_x, k_a, k_idx, k_p = jax.random.split(key, 4)

    batch, h, w, c = 2, 8, 8, 8
    in_num = 16                      # multiple of 8 (sublane-friendly)
    num_nodes = h * w                # L = 64

    x = jax.random.normal(k_x, (batch, h, w, c), jnp.float32)
    # positive adjacency so D^-0.5 is finite (matches the intended use of A)
    A = jax.random.uniform(k_a, (batch, num_nodes, num_nodes), jnp.float32,
                           minval=0.1, maxval=1.0)
    indexs_train = jax.random.randint(k_idx, (batch, in_num), 0, num_nodes, jnp.int32)

    params = init_params(k_p, c)

    out = gcn_forward(x, A, indexs_train, params)
    out = jax.block_until_ready(out)
    assert out.shape == (batch, 64, in_num) and out.dtype == jnp.float32
    print("KERNEL_OK")
</pallas_src>

<mosaic_0001>
module attributes {stable_mosaic.version = 11 : i64} {
  func.func @fused_gcn_kernel(%arg0: memref<2x64x8xf32, #tpu.memory_space<vmem>>, %arg1: memref<2x64x64xbf16, #tpu.memory_space<vmem>>, %arg2: memref<2x16xi32, #tpu.memory_space<vmem>>, %arg3: memref<1x8xf32, #tpu.memory_space<vmem>>, %arg4: memref<1x8xf32, #tpu.memory_space<vmem>>, %arg5: memref<8x128xf32, #tpu.memory_space<vmem>>, %arg6: memref<1x128xf32, #tpu.memory_space<vmem>>, %arg7: memref<1x128xf32, #tpu.memory_space<vmem>>, %arg8: memref<1x128xf32, #tpu.memory_space<vmem>>, %arg9: memref<128x128xf32, #tpu.memory_space<vmem>>, %arg10: memref<1x128xf32, #tpu.memory_space<vmem>>, %arg11: memref<1x128xf32, #tpu.memory_space<vmem>>, %arg12: memref<1x128xf32, #tpu.memory_space<vmem>>, %arg13: memref<128x128xf32, #tpu.memory_space<vmem>>, %arg14: memref<1x128xf32, #tpu.memory_space<vmem>>, %arg15: memref<1x128xf32, #tpu.memory_space<vmem>>, %arg16: memref<1x128xf32, #tpu.memory_space<vmem>>, %arg17: memref<128x64xf32, #tpu.memory_space<vmem>>, %arg18: memref<1x64xf32, #tpu.memory_space<vmem>>, %arg19: memref<64x4xf32, #tpu.memory_space<vmem>>, %arg20: memref<4x64xf32, #tpu.memory_space<vmem>>, %arg21: memref<64x64xf32, #tpu.memory_space<vmem>>, %arg22: memref<1x64xf32, #tpu.memory_space<vmem>>, %arg23: memref<1x64xf32, #tpu.memory_space<vmem>>, %arg24: memref<1x64xf32, #tpu.memory_space<vmem>>, %arg25: memref<2x16x64xf32, #tpu.memory_space<vmem>>) attributes {dimension_semantics = [], scalar_prefetch = 0 : i64, scratch_operands = 0 : i64, tpu.core_type = #tpu.core_type<tc>} {
    %c0 = arith.constant 0 : index
    %c0_0 = arith.constant 0 : index
    %c0_1 = arith.constant 0 : index
    %0 = vector.load %arg1[%c0, %c0_0, %c0_1] : memref<2x64x64xbf16, #tpu.memory_space<vmem>>, vector<2x64x64xbf16>
    %1 = arith.extf %0 : vector<2x64x64xbf16> to vector<2x64x64xf32>
    %cst = arith.constant dense<0.000000e+00> : vector<2x64xf32>
    %2 = vector.multi_reduction <add>, %1, %cst [2] : vector<2x64x64xf32> to vector<2x64xf32>
    %cst_2 = arith.constant 0.000000e+00 : f32
    %3 = vector.broadcast %cst_2 : f32 to vector<2x64xf32>
    %4 = arith.cmpf ogt, %2, %3 : vector<2x64xf32>
    %cst_3 = arith.constant 9.99999996E-13 : f32
    %5 = vector.broadcast %cst_3 : f32 to vector<2x64xf32>
    %6 = arith.maximumf %2, %5 : vector<2x64xf32>
    %7 = math.rsqrt %6 : vector<2x64xf32>
    %cst_4 = arith.constant 0.000000e+00 : f32
    %8 = vector.broadcast %cst_4 : f32 to vector<2x64xf32>
    %9 = arith.select %4, %7, %8 : vector<2x64xi1>, vector<2x64xf32>
    %10 = arith.truncf %9 : vector<2x64xf32> to vector<2x64xbf16>
    %11 = tpu.iota {dimensions = array<i32: 0>} : vector<64x64xi32>
    %12 = tpu.iota {dimensions = array<i32: 1>} : vector<64x64xi32>
    %13 = arith.cmpi eq, %11, %12 : vector<64x64xi32>
    %14 = arith.extui %13 : vector<64x64xi1> to vector<64x64xi32>
    %15 = arith.sitofp %14 : vector<64x64xi32> to vector<64x64xf32>
    %16 = arith.truncf %15 : vector<64x64xf32> to vector<64x64xbf16>
    %17 = vector.shape_cast %10 : vector<2x64xbf16> to vector<2x64x1xbf16>
    %18 = vector.broadcast %17 : vector<2x64x1xbf16> to vector<2x64x64xbf16>
    %19 = arith.mulf %18, %0 : vector<2x64x64xbf16>
    %20 = vector.shape_cast %10 : vector<2x64xbf16> to vector<2x1x64xbf16>
    %21 = vector.broadcast %20 : vector<2x1x64xbf16> to vector<2x64x64xbf16>
    %22 = arith.mulf %19, %21 : vector<2x64x64xbf16>
    %23 = vector.shape_cast %16 : vector<64x64xbf16> to vector<1x64x64xbf16>
    %24 = vector.broadcast %23 : vector<1x64x64xbf16> to vector<2x64x64xbf16>
    %25 = arith.addf %22, %24 : vector<2x64x64xbf16>
    %c0_5 = arith.constant 0 : index
    %c0_6 = arith.constant 0 : index
    %26 = vector.load %arg2[%c0_5, %c0_6] : memref<2x16xi32, #tpu.memory_space<vmem>>, vector<2x16xi32>
    %27 = tpu.iota {dimensions = array<i32: 2>} : vector<2x16x64xi32>
    %28 = vector.shape_cast %26 : vector<2x16xi32> to vector<2x16x1xi32>
    %29 = vector.broadcast %28 : vector<2x16x1xi32> to vector<2x16x64xi32>
    %30 = arith.cmpi eq, %29, %27 : vector<2x16x64xi32>
    %31 = arith.extui %30 : vector<2x16x64xi1> to vector<2x16x64xi32>
    %32 = arith.sitofp %31 : vector<2x16x64xi32> to vector<2x16x64xf32>
    %33 = arith.truncf %32 : vector<2x16x64xf32> to vector<2x16x64xbf16>
    "tpu.trace_start"() <{level = 10 : i32, message = "bil,blm->bim"}> : () -> ()
    %cst_7 = arith.constant dense<0.000000e+00> : vector<2x16x64xf32>
    %34 = tpu.matmul %33, %25, %cst_7 {dimension_numbers = #tpu.dot_dimension_numbers<[2], [1], [1], [2], [0, 0, 0, 1, 1, 2], [0], [0]>} : vector<2x16x64xbf16>, vector<2x64x64xbf16>, vector<2x16x64xf32> -> vector<2x16x64xf32>
    "tpu.trace_stop"() : () -> ()
    %35 = arith.truncf %34 : vector<2x16x64xf32> to vector<2x16x64xbf16>
    %c0_8 = arith.constant 0 : index
    %c0_9 = arith.constant 0 : index
    %c0_10 = arith.constant 0 : index
    %36 = vector.load %arg0[%c0_8, %c0_9, %c0_10] : memref<2x64x8xf32, #tpu.memory_space<vmem>>, vector<2x64x8xf32>
    %c0_11 = arith.constant 0 : index
    %c0_12 = arith.constant 0 : index
    %37 = vector.load %arg3[%c0_11, %c0_12] : memref<1x8xf32, #tpu.memory_space<vmem>>, vector<1x8xf32>
    %c0_13 = arith.constant 0 : index
    %c0_14 = arith.constant 0 : index
    %38 = vector.load %arg4[%c0_13, %c0_14] : memref<1x8xf32, #tpu.memory_space<vmem>>, vector<1x8xf32>
    %c0_15 = arith.constant 0 : index
    %c0_16 = arith.constant 0 : index
    %39 = vector.load %arg5[%c0_15, %c0_16] : memref<8x128xf32, #tpu.memory_space<vmem>>, vector<8x128xf32>
    %c0_17 = arith.constant 0 : index
    %c0_18 = arith.constant 0 : index
    %40 = vector.load %arg6[%c0_17, %c0_18] : memref<1x128xf32, #tpu.memory_space<vmem>>, vector<1x128xf32>
    %41 = vector.shape_cast %36 : vector<2x64x8xf32> to vector<128x8xf32>
    %cst_19 = arith.constant dense<0.000000e+00> : vector<8xf32>
    %42 = vector.multi_reduction <add>, %41, %cst_19 [0] : vector<128x8xf32> to vector<8xf32>
    %43 = vector.shape_cast %42 : vector<8xf32> to vector<1x8xf32>
    %cst_20 = arith.constant 1.280000e+02 : f32
    %44 = vector.broadcast %cst_20 : f32 to vector<1x8xf32>
    %45 = arith.divf %43, %44 : vector<1x8xf32>
    %46 = arith.mulf %41, %41 : vector<128x8xf32>
    %cst_21 = arith.constant dense<0.000000e+00> : vector<8xf32>
    %47 = vector.multi_reduction <add>, %46, %cst_21 [0] : vector<128x8xf32> to vector<8xf32>
    %48 = vector.shape_cast %47 : vector<8xf32> to vector<1x8xf32>
    %cst_22 = arith.constant 1.280000e+02 : f32
    %49 = vector.broadcast %cst_22 : f32 to vector<1x8xf32>
    %50 = arith.divf %48, %49 : vector<1x8xf32>
    %51 = arith.mulf %45, %45 : vector<1x8xf32>
    %52 = arith.subf %50, %51 : vector<1x8xf32>
    %cst_23 = arith.constant 0.000000e+00 : f32
    %53 = vector.broadcast %cst_23 : f32 to vector<1x8xf32>
    %54 = arith.maximumf %52, %53 : vector<1x8xf32>
    %cst_24 = arith.constant 9.99999974E-6 : f32
    %55 = vector.broadcast %cst_24 : f32 to vector<1x8xf32>
    %56 = arith.addf %54, %55 : vector<1x8xf32>
    %57 = math.rsqrt %56 : vector<1x8xf32>
    %58 = arith.mulf %37, %57 : vector<1x8xf32>
    %59 = vector.shape_cast %58 : vector<1x8xf32> to vector<8x1xf32>
    %60 = vector.broadcast %59 : vector<8x1xf32> to vector<8x128xf32>
    %61 = arith.mulf %39, %60 : vector<8x128xf32>
    %62 = arith.mulf %45, %58 : vector<1x8xf32>
    %63 = arith.subf %38, %62 : vector<1x8xf32>
    %cst_25 = arith.constant dense<0.000000e+00> : vector<1x128xf32>
    %64 = tpu.matmul %63, %39, %cst_25 {dimension_numbers = #tpu.dot_dimension_numbers<[1], [0], [0], [1], [0, 0, 1, 1], [], []>} : vector<1x8xf32>, vector<8x128xf32>, vector<1x128xf32> -> vector<1x128xf32>
    %65 = arith.addf %64, %40 : vector<1x128xf32>
    %66 = arith.truncf %41 : vector<128x8xf32> to vector<128x8xbf16>
    %67 = arith.truncf %61 : vector<8x128xf32> to vector<8x128xbf16>
    %cst_26 = arith.constant dense<0.000000e+00> : vector<128x128xf32>
    %68 = tpu.matmul %66, %67, %cst_26 {dimension_numbers = #tpu.dot_dimension_numbers<[1], [0], [0], [1], [0, 0, 1, 1], [], []>} : vector<128x8xbf16>, vector<8x128xbf16>, vector<128x128xf32> -> vector<128x128xf32>
    %69 = vector.broadcast %65 : vector<1x128xf32> to vector<128x128xf32>
    %70 = arith.addf %68, %69 : vector<128x128xf32>
    %71 = vector.shape_cast %70 : vector<128x128xf32> to vector<2x64x128xf32>
    %72 = arith.truncf %71 : vector<2x64x128xf32> to vector<2x64x128xbf16>
    "tpu.trace_start"() <{level = 10 : i32, message = "bij,bjo->bio"}> : () -> ()
    %cst_27 = arith.constant dense<0.000000e+00> : vector<2x64x128xf32>
    %73 = tpu.matmul %25, %72, %cst_27 {dimension_numbers = #tpu.dot_dimension_numbers<[2], [1], [1], [2], [0, 0, 0, 1, 1, 2], [0], [0]>} : vector<2x64x64xbf16>, vector<2x64x128xbf16>, vector<2x64x128xf32> -> vector<2x64x128xf32>
    %cst_28 = arith.constant 0.000000e+00 : f32
    "tpu.trace_stop"() : () -> ()
    %74 = vector.broadcast %cst_28 : f32 to vector<2x64x128xf32>
    %75 = arith.cmpf ogt, %73, %74 : vector<2x64x128xf32>
    %cst_29 = arith.constant 0.00999999977 : f32
    %76 = vector.broadcast %cst_29 : f32 to vector<2x64x128xf32>
    %77 = arith.mulf %76, %73 : vector<2x64x128xf32>
    %78 = arith.select %75, %73, %77 : vector<2x64x128xi1>, vector<2x64x128xf32>
    %c0_30 = arith.constant 0 : index
    %c0_31 = arith.constant 0 : index
    %79 = vector.load %arg7[%c0_30, %c0_31] : memref<1x128xf32, #tpu.memory_space<vmem>>, vector<1x128xf32>
    %c0_32 = arith.constant 0 : index
    %c0_33 = arith.constant 0 : index
    %80 = vector.load %arg8[%c0_32, %c0_33] : memref<1x128xf32, #tpu.memory_space<vmem>>, vector<1x128xf32>
    %c0_34 = arith.constant 0 : index
    %c0_35 = arith.constant 0 : index
    %81 = vector.load %arg9[%c0_34, %c0_35] : memref<128x128xf32, #tpu.memory_space<vmem>>, vector<128x128xf32>
    %c0_36 = arith.constant 0 : index
    %c0_37 = arith.constant 0 : index
    %82 = vector.load %arg10[%c0_36, %c0_37] : memref<1x128xf32, #tpu.memory_space<vmem>>, vector<1x128xf32>
    %83 = vector.shape_cast %78 : vector<2x64x128xf32> to vector<128x128xf32>
    %cst_38 = arith.constant dense<0.000000e+00> : vector<128xf32>
    %84 = vector.multi_reduction <add>, %83, %cst_38 [0] : vector<128x128xf32> to vector<128xf32>
    %85 = vector.shape_cast %84 : vector<128xf32> to vector<1x128xf32>
    %cst_39 = arith.constant 1.280000e+02 : f32
    %86 = vector.broadcast %cst_39 : f32 to vector<1x128xf32>
    %87 = arith.divf %85, %86 : vector<1x128xf32>
    %88 = arith.mulf %83, %83 : vector<128x128xf32>
    %cst_40 = arith.constant dense<0.000000e+00> : vector<128xf32>
    %89 = vector.multi_reduction <add>, %88, %cst_40 [0] : vector<128x128xf32> to vector<128xf32>
    %90 = vector.shape_cast %89 : vector<128xf32> to vector<1x128xf32>
    %cst_41 = arith.constant 1.280000e+02 : f32
    %91 = vector.broadcast %cst_41 : f32 to vector<1x128xf32>
    %92 = arith.divf %90, %91 : vector<1x128xf32>
    %93 = arith.mulf %87, %87 : vector<1x128xf32>
    %94 = arith.subf %92, %93 : vector<1x128xf32>
    %cst_42 = arith.constant 0.000000e+00 : f32
    %95 = vector.broadcast %cst_42 : f32 to vector<1x128xf32>
    %96 = arith.maximumf %94, %95 : vector<1x128xf32>
    %cst_43 = arith.constant 9.99999974E-6 : f32
    %97 = vector.broadcast %cst_43 : f32 to vector<1x128xf32>
    %98 = arith.addf %96, %97 : vector<1x128xf32>
    %99 = math.rsqrt %98 : vector<1x128xf32>
    %100 = arith.mulf %79, %99 : vector<1x128xf32>
    %101 = vector.shape_cast %100 : vector<1x128xf32> to vector<128x1xf32>
    %102 = vector.broadcast %101 : vector<128x1xf32> to vector<128x128xf32>
    %103 = arith.mulf %81, %102 : vector<128x128xf32>
    %104 = arith.mulf %87, %100 : vector<1x128xf32>
    %105 = arith.subf %80, %104 : vector<1x128xf32>
    %cst_44 = arith.constant dense<0.000000e+00> : vector<1x128xf32>
    %106 = tpu.matmul %105, %81, %cst_44 {dimension_numbers = #tpu.dot_dimension_numbers<[1], [0], [0], [1], [0, 0, 1, 1], [], []>} : vector<1x128xf32>, vector<128x128xf32>, vector<1x128xf32> -> vector<1x128xf32>
    %107 = arith.addf %106, %82 : vector<1x128xf32>
    %108 = arith.truncf %83 : vector<128x128xf32> to vector<128x128xbf16>
    %109 = arith.truncf %103 : vector<128x128xf32> to vector<128x128xbf16>
    %cst_45 = arith.constant dense<0.000000e+00> : vector<128x128xf32>
    %110 = tpu.matmul %108, %109, %cst_45 {dimension_numbers = #tpu.dot_dimension_numbers<[1], [0], [0], [1], [0, 0, 1, 1], [], []>} : vector<128x128xbf16>, vector<128x128xbf16>, vector<128x128xf32> -> vector<128x128xf32>
    %111 = vector.broadcast %107 : vector<1x128xf32> to vector<128x128xf32>
    %112 = arith.addf %110, %111 : vector<128x128xf32>
    %113 = vector.shape_cast %112 : vector<128x128xf32> to vector<2x64x128xf32>
    %114 = arith.truncf %113 : vector<2x64x128xf32> to vector<2x64x128xbf16>
    "tpu.trace_start"() <{level = 10 : i32, message = "bij,bjo->bio"}> : () -> ()
    %cst_46 = arith.constant dense<0.000000e+00> : vector<2x64x128xf32>
    %115 = tpu.matmul %25, %114, %cst_46 {dimension_numbers = #tpu.dot_dimension_numbers<[2], [1], [1], [2], [0, 0, 0, 1, 1, 2], [0], [0]>} : vector<2x64x64xbf16>, vector<2x64x128xbf16>, vector<2x64x128xf32> -> vector<2x64x128xf32>
    %cst_47 = arith.constant 0.000000e+00 : f32
    "tpu.trace_stop"() : () -> ()
    %116 = vector.broadcast %cst_47 : f32 to vector<2x64x128xf32>
    %117 = arith.cmpf ogt, %115, %116 : vector<2x64x128xf32>
    %cst_48 = arith.constant 0.00999999977 : f32
    %118 = vector.broadcast %cst_48 : f32 to vector<2x64x128xf32>
    %119 = arith.mulf %118, %115 : vector<2x64x128xf32>
    %120 = arith.select %117, %115, %119 : vector<2x64x128xi1>, vector<2x64x128xf32>
    %c0_49 = arith.constant 0 : index
    %c0_50 = arith.constant 0 : index
    %121 = vector.load %arg11[%c0_49, %c0_50] : memref<1x128xf32, #tpu.memory_space<vmem>>, vector<1x128xf32>
    %c0_51 = arith.constant 0 : index
    %c0_52 = arith.constant 0 : index
    %122 = vector.load %arg12[%c0_51, %c0_52] : memref<1x128xf32, #tpu.memory_space<vmem>>, vector<1x128xf32>
    %c0_53 = arith.constant 0 : index
    %c0_54 = arith.constant 0 : index
    %123 = vector.load %arg13[%c0_53, %c0_54] : memref<128x128xf32, #tpu.memory_space<vmem>>, vector<128x128xf32>
    %c0_55 = arith.constant 0 : index
    %c0_56 = arith.constant 0 : index
    %124 = vector.load %arg14[%c0_55, %c0_56] : memref<1x128xf32, #tpu.memory_space<vmem>>, vector<1x128xf32>
    %125 = vector.shape_cast %120 : vector<2x64x128xf32> to vector<128x128xf32>
    %cst_57 = arith.constant dense<0.000000e+00> : vector<128xf32>
    %126 = vector.multi_reduction <add>, %125, %cst_57 [0] : vector<128x128xf32> to vector<128xf32>
    %127 = vector.shape_cast %126 : vector<128xf32> to vector<1x128xf32>
    %cst_58 = arith.constant 1.280000e+02 : f32
    %128 = vector.broadcast %cst_58 : f32 to vector<1x128xf32>
    %129 = arith.divf %127, %128 : vector<1x128xf32>
    %130 = arith.mulf %125, %125 : vector<128x128xf32>
    %cst_59 = arith.constant dense<0.000000e+00> : vector<128xf32>
    %131 = vector.multi_reduction <add>, %130, %cst_59 [0] : vector<128x128xf32> to vector<128xf32>
    %132 = vector.shape_cast %131 : vector<128xf32> to vector<1x128xf32>
    %cst_60 = arith.constant 1.280000e+02 : f32
    %133 = vector.broadcast %cst_60 : f32 to vector<1x128xf32>
    %134 = arith.divf %132, %133 : vector<1x128xf32>
    %135 = arith.mulf %129, %129 : vector<1x128xf32>
    %136 = arith.subf %134, %135 : vector<1x128xf32>
    %cst_61 = arith.constant 0.000000e+00 : f32
    %137 = vector.broadcast %cst_61 : f32 to vector<1x128xf32>
    %138 = arith.maximumf %136, %137 : vector<1x128xf32>
    %cst_62 = arith.constant 9.99999974E-6 : f32
    %139 = vector.broadcast %cst_62 : f32 to vector<1x128xf32>
    %140 = arith.addf %138, %139 : vector<1x128xf32>
    %141 = math.rsqrt %140 : vector<1x128xf32>
    %142 = arith.mulf %121, %141 : vector<1x128xf32>
    %143 = vector.shape_cast %142 : vector<1x128xf32> to vector<128x1xf32>
    %144 = vector.broadcast %143 : vector<128x1xf32> to vector<128x128xf32>
    %145 = arith.mulf %123, %144 : vector<128x128xf32>
    %146 = arith.mulf %129, %142 : vector<1x128xf32>
    %147 = arith.subf %122, %146 : vector<1x128xf32>
    %cst_63 = arith.constant dense<0.000000e+00> : vector<1x128xf32>
    %148 = tpu.matmul %147, %123, %cst_63 {dimension_numbers = #tpu.dot_dimension_numbers<[1], [0], [0], [1], [0, 0, 1, 1], [], []>} : vector<1x128xf32>, vector<128x128xf32>, vector<1x128xf32> -> vector<1x128xf32>
    %149 = arith.addf %148, %124 : vector<1x128xf32>
    %150 = arith.truncf %125 : vector<128x128xf32> to vector<128x128xbf16>
    %151 = arith.truncf %145 : vector<128x128xf32> to vector<128x128xbf16>
    %cst_64 = arith.constant dense<0.000000e+00> : vector<128x128xf32>
    %152 = tpu.matmul %150, %151, %cst_64 {dimension_numbers = #tpu.dot_dimension_numbers<[1], [0], [0], [1], [0, 0, 1, 1], [], []>} : vector<128x128xbf16>, vector<128x128xbf16>, vector<128x128xf32> -> vector<128x128xf32>
    %153 = vector.broadcast %149 : vector<1x128xf32> to vector<128x128xf32>
    %154 = arith.addf %152, %153 : vector<128x128xf32>
    %155 = vector.shape_cast %154 : vector<128x128xf32> to vector<2x64x128xf32>
    %156 = arith.truncf %155 : vector<2x64x128xf32> to vector<2x64x128xbf16>
    "tpu.trace_start"() <{level = 10 : i32, message = "bij,bjo->bio"}> : () -> ()
    %cst_65 = arith.constant dense<0.000000e+00> : vector<2x64x128xf32>
    %157 = tpu.matmul %25, %156, %cst_65 {dimension_numbers = #tpu.dot_dimension_numbers<[2], [1], [1], [2], [0, 0, 0, 1, 1, 2], [0], [0]>} : vector<2x64x64xbf16>, vector<2x64x128xbf16>, vector<2x64x128xf32> -> vector<2x64x128xf32>
    %cst_66 = arith.constant 0.000000e+00 : f32
    "tpu.trace_stop"() : () -> ()
    %158 = vector.broadcast %cst_66 : f32 to vector<2x64x128xf32>
    %159 = arith.cmpf ogt, %157, %158 : vector<2x64x128xf32>
    %cst_67 = arith.constant 0.00999999977 : f32
    %160 = vector.broadcast %cst_67 : f32 to vector<2x64x128xf32>
    %161 = arith.mulf %160, %157 : vector<2x64x128xf32>
    %162 = arith.select %159, %157, %161 : vector<2x64x128xi1>, vector<2x64x128xf32>
    %c0_68 = arith.constant 0 : index
    %c0_69 = arith.constant 0 : index
    %163 = vector.load %arg15[%c0_68, %c0_69] : memref<1x128xf32, #tpu.memory_space<vmem>>, vector<1x128xf32>
    %c0_70 = arith.constant 0 : index
    %c0_71 = arith.constant 0 : index
    %164 = vector.load %arg16[%c0_70, %c0_71] : memref<1x128xf32, #tpu.memory_space<vmem>>, vector<1x128xf32>
    %c0_72 = arith.constant 0 : index
    %c0_73 = arith.constant 0 : index
    %165 = vector.load %arg17[%c0_72, %c0_73] : memref<128x64xf32, #tpu.memory_space<vmem>>, vector<128x64xf32>
    %c0_74 = arith.constant 0 : index
    %c0_75 = arith.constant 0 : index
    %166 = vector.load %arg18[%c0_74, %c0_75] : memref<1x64xf32, #tpu.memory_space<vmem>>, vector<1x64xf32>
    %167 = vector.shape_cast %162 : vector<2x64x128xf32> to vector<128x128xf32>
    %cst_76 = arith.constant dense<0.000000e+00> : vector<128xf32>
    %168 = vector.multi_reduction <add>, %167, %cst_76 [0] : vector<128x128xf32> to vector<128xf32>
    %169 = vector.shape_cast %168 : vector<128xf32> to vector<1x128xf32>
    %cst_77 = arith.constant 1.280000e+02 : f32
    %170 = vector.broadcast %cst_77 : f32 to vector<1x128xf32>
    %171 = arith.divf %169, %170 : vector<1x128xf32>
    %172 = arith.mulf %167, %167 : vector<128x128xf32>
    %cst_78 = arith.constant dense<0.000000e+00> : vector<128xf32>
    %173 = vector.multi_reduction <add>, %172, %cst_78 [0] : vector<128x128xf32> to vector<128xf32>
    %174 = vector.shape_cast %173 : vector<128xf32> to vector<1x128xf32>
    %cst_79 = arith.constant 1.280000e+02 : f32
    %175 = vector.broadcast %cst_79 : f32 to vector<1x128xf32>
    %176 = arith.divf %174, %175 : vector<1x128xf32>
    %177 = arith.mulf %171, %171 : vector<1x128xf32>
    %178 = arith.subf %176, %177 : vector<1x128xf32>
    %cst_80 = arith.constant 0.000000e+00 : f32
    %179 = vector.broadcast %cst_80 : f32 to vector<1x128xf32>
    %180 = arith.maximumf %178, %179 : vector<1x128xf32>
    %cst_81 = arith.constant 9.99999974E-6 : f32
    %181 = vector.broadcast %cst_81 : f32 to vector<1x128xf32>
    %182 = arith.addf %180, %181 : vector<1x128xf32>
    %183 = math.rsqrt %182 : vector<1x128xf32>
    %184 = arith.mulf %163, %183 : vector<1x128xf32>
    %185 = vector.shape_cast %184 : vector<1x128xf32> to vector<128x1xf32>
    %186 = vector.broadcast %185 : vector<128x1xf32> to vector<128x64xf32>
    %187 = arith.mulf %165, %186 : vector<128x64xf32>
    %188 = arith.mulf %171, %184 : vector<1x128xf32>
    %189 = arith.subf %164, %188 : vector<1x128xf32>
    %cst_82 = arith.constant dense<0.000000e+00> : vector<1x64xf32>
    %190 = tpu.matmul %189, %165, %cst_82 {dimension_numbers = #tpu.dot_dimension_numbers<[1], [0], [0], [1], [0, 0, 1, 1], [], []>} : vector<1x128xf32>, vector<128x64xf32>, vector<1x64xf32> -> vector<1x64xf32>
    %191 = arith.addf %190, %166 : vector<1x64xf32>
    %192 = arith.truncf %167 : vector<128x128xf32> to vector<128x128xbf16>
    %193 = arith.truncf %187 : vector<128x64xf32> to vector<128x64xbf16>
    %cst_83 = arith.constant dense<0.000000e+00> : vector<128x64xf32>
    %194 = tpu.matmul %192, %193, %cst_83 {dimension_numbers = #tpu.dot_dimension_numbers<[1], [0], [0], [1], [0, 0, 1, 1], [], []>} : vector<128x128xbf16>, vector<128x64xbf16>, vector<128x64xf32> -> vector<128x64xf32>
    %195 = vector.broadcast %191 : vector<1x64xf32> to vector<128x64xf32>
    %196 = arith.addf %194, %195 : vector<128x64xf32>
    %197 = vector.shape_cast %196 : vector<128x64xf32> to vector<2x64x64xf32>
    %198 = arith.truncf %197 : vector<2x64x64xf32> to vector<2x64x64xbf16>
    "tpu.trace_start"() <{level = 10 : i32, message = "bil,blo->bio"}> : () -> ()
    %cst_84 = arith.constant dense<0.000000e+00> : vector<2x16x64xf32>
    %199 = tpu.matmul %35, %198, %cst_84 {dimension_numbers = #tpu.dot_dimension_numbers<[2], [1], [1], [2], [0, 0, 0, 1, 1, 2], [0], [0]>} : vector<2x16x64xbf16>, vector<2x64x64xbf16>, vector<2x16x64xf32> -> vector<2x16x64xf32>
    %cst_85 = arith.constant 0.000000e+00 : f32
    "tpu.trace_stop"() : () -> ()
    %200 = vector.broadcast %cst_85 : f32 to vector<2x16x64xf32>
    %201 = arith.cmpf ogt, %199, %200 : vector<2x16x64xf32>
    %cst_86 = arith.constant 0.00999999977 : f32
    %202 = vector.broadcast %cst_86 : f32 to vector<2x16x64xf32>
    %203 = arith.mulf %202, %199 : vector<2x16x64xf32>
    %204 = arith.select %201, %199, %203 : vector<2x16x64xi1>, vector<2x16x64xf32>
    %c0_87 = arith.constant 0 : index
    %c0_88 = arith.constant 0 : index
    %205 = vector.load %arg19[%c0_87, %c0_88] : memref<64x4xf32, #tpu.memory_space<vmem>>, vector<64x4xf32>
    %c0_89 = arith.constant 0 : index
    %c0_90 = arith.constant 0 : index
    %206 = vector.load %arg20[%c0_89, %c0_90] : memref<4x64xf32, #tpu.memory_space<vmem>>, vector<4x64xf32>
    %cst_91 = arith.constant dense<0.000000e+00> : vector<2x64xf32>
    %207 = vector.multi_reduction <add>, %204, %cst_91 [1] : vector<2x16x64xf32> to vector<2x64xf32>
    %cst_92 = arith.constant 1.600000e+01 : f32
    %208 = vector.broadcast %cst_92 : f32 to vector<2x64xf32>
    %209 = arith.divf %207, %208 : vector<2x64xf32>
    %cst_93 = arith.constant dense<0xFF800000> : vector<2x64xf32>
    %210 = vector.multi_reduction <maximumf>, %204, %cst_93 [1] : vector<2x16x64xf32> to vector<2x64xf32>
    %cst_94 = arith.constant dense<0.000000e+00> : vector<2x4xf32>
    %211 = tpu.matmul %209, %205, %cst_94 {dimension_numbers = #tpu.dot_dimension_numbers<[1], [0], [0], [1], [0, 0, 1, 1], [], []>} : vector<2x64xf32>, vector<64x4xf32>, vector<2x4xf32> -> vector<2x4xf32>
    %cst_95 = arith.constant 0.000000e+00 : f32
    %212 = vector.broadcast %cst_95 : f32 to vector<2x4xf32>
    %213 = arith.maximumf %211, %212 : vector<2x4xf32>
    %cst_96 = arith.constant dense<0.000000e+00> : vector<2x64xf32>
    %214 = tpu.matmul %213, %206, %cst_96 {dimension_numbers = #tpu.dot_dimension_numbers<[1], [0], [0], [1], [0, 0, 1, 1], [], []>} : vector<2x4xf32>, vector<4x64xf32>, vector<2x64xf32> -> vector<2x64xf32>
    %cst_97 = arith.constant dense<0.000000e+00> : vector<2x4xf32>
    %215 = tpu.matmul %210, %205, %cst_97 {dimension_numbers = #tpu.dot_dimension_numbers<[1], [0], [0], [1], [0, 0, 1, 1], [], []>} : vector<2x64xf32>, vector<64x4xf32>, vector<2x4xf32> -> vector<2x4xf32>
    %cst_98 = arith.constant 0.000000e+00 : f32
    %216 = vector.broadcast %cst_98 : f32 to vector<2x4xf32>
    %217 = arith.maximumf %215, %216 : vector<2x4xf32>
    %cst_99 = arith.constant dense<0.000000e+00> : vector<2x64xf32>
    %218 = tpu.matmul %217, %206, %cst_99 {dimension_numbers = #tpu.dot_dimension_numbers<[1], [0], [0], [1], [0, 0, 1, 1], [], []>} : vector<2x4xf32>, vector<4x64xf32>, vector<2x64xf32> -> vector<2x64xf32>
    %219 = arith.addf %214, %218 : vector<2x64xf32>
    %220 = arith.negf %219 : vector<2x64xf32>
    %221 = math.exp %220 : vector<2x64xf32>
    %cst_100 = arith.constant 1.000000e+00 : f32
    %222 = vector.broadcast %cst_100 : f32 to vector<2x64xf32>
    %223 = arith.addf %222, %221 : vector<2x64xf32>
    %224 = arith.divf %222, %223 : vector<2x64xf32>
    %225 = vector.shape_cast %224 : vector<2x64xf32> to vector<2x1x64xf32>
    %226 = vector.broadcast %225 : vector<2x1x64xf32> to vector<2x16x64xf32>
    %227 = arith.mulf %204, %226 : vector<2x16x64xf32>
    %228 = vector.shape_cast %227 : vector<2x16x64xf32> to vector<32x64xf32>
    %c0_101 = arith.constant 0 : index
    %c0_102 = arith.constant 0 : index
    %229 = vector.load %arg21[%c0_101, %c0_102] : memref<64x64xf32, #tpu.memory_space<vmem>>, vector<64x64xf32>
    %cst_103 = arith.constant dense<0.000000e+00> : vector<32x64xf32>
    %230 = tpu.matmul %228, %229, %cst_103 {dimension_numbers = #tpu.dot_dimension_numbers<[1], [0], [0], [1], [0, 0, 1, 1], [], []>} : vector<32x64xf32>, vector<64x64xf32>, vector<32x64xf32> -> vector<32x64xf32>
    %c0_104 = arith.constant 0 : index
    %c0_105 = arith.constant 0 : index
    %231 = vector.load %arg22[%c0_104, %c0_105] : memref<1x64xf32, #tpu.memory_space<vmem>>, vector<1x64xf32>
    %232 = vector.broadcast %231 : vector<1x64xf32> to vector<32x64xf32>
    %233 = arith.addf %230, %232 : vector<32x64xf32>
    %cst_106 = arith.constant dense<0.000000e+00> : vector<64xf32>
    %234 = vector.multi_reduction <add>, %233, %cst_106 [0] : vector<32x64xf32> to vector<64xf32>
    %235 = vector.shape_cast %234 : vector<64xf32> to vector<1x64xf32>
    %cst_107 = arith.constant 3.200000e+01 : f32
    %236 = vector.broadcast %cst_107 : f32 to vector<1x64xf32>
    %237 = arith.divf %235, %236 : vector<1x64xf32>
    %238 = arith.mulf %233, %233 : vector<32x64xf32>
    %cst_108 = arith.constant dense<0.000000e+00> : vector<64xf32>
    %239 = vector.multi_reduction <add>, %238, %cst_108 [0] : vector<32x64xf32> to vector<64xf32>
    %240 = vector.shape_cast %239 : vector<64xf32> to vector<1x64xf32>
    %cst_109 = arith.constant 3.200000e+01 : f32
    %241 = vector.broadcast %cst_109 : f32 to vector<1x64xf32>
    %242 = arith.divf %240, %241 : vector<1x64xf32>
    %243 = arith.mulf %237, %237 : vector<1x64xf32>
    %244 = arith.subf %242, %243 : vector<1x64xf32>
    %cst_110 = arith.constant 0.000000e+00 : f32
    %245 = vector.broadcast %cst_110 : f32 to vector<1x64xf32>
    %246 = arith.maximumf %244, %245 : vector<1x64xf32>
    %247 = vector.broadcast %237 : vector<1x64xf32> to vector<32x64xf32>
    %248 = arith.subf %233, %247 : vector<32x64xf32>
    %cst_111 = arith.constant 9.99999974E-6 : f32
    %249 = vector.broadcast %cst_111 : f32 to vector<1x64xf32>
    %250 = arith.addf %246, %249 : vector<1x64xf32>
    %251 = math.rsqrt %250 : vector<1x64xf32>
    %252 = vector.broadcast %251 : vector<1x64xf32> to vector<32x64xf32>
    %253 = arith.mulf %248, %252 : vector<32x64xf32>
    %c0_112 = arith.constant 0 : index
    %c0_113 = arith.constant 0 : index
    %254 = vector.load %arg23[%c0_112, %c0_113] : memref<1x64xf32, #tpu.memory_space<vmem>>, vector<1x64xf32>
    %255 = vector.broadcast %254 : vector<1x64xf32> to vector<32x64xf32>
    %256 = arith.mulf %253, %255 : vector<32x64xf32>
    %c0_114 = arith.constant 0 : index
    %c0_115 = arith.constant 0 : index
    %257 = vector.load %arg24[%c0_114, %c0_115] : memref<1x64xf32, #tpu.memory_space<vmem>>, vector<1x64xf32>
    %258 = vector.broadcast %257 : vector<1x64xf32> to vector<32x64xf32>
    %259 = arith.addf %256, %258 : vector<32x64xf32>
    %260 = vector.shape_cast %259 : vector<32x64xf32> to vector<2x16x64xf32>
    %c0_116 = arith.constant 0 : index
    %c0_117 = arith.constant 0 : index
    %c0_118 = arith.constant 0 : index
    %261 = vector.load %arg25[%c0_116, %c0_117, %c0_118] : memref<2x16x64xf32, #tpu.memory_space<vmem>>, vector<2x16x64xf32>
    tpu.vector_store %arg25[%c0_116, %c0_117, %c0_118], %260 {strides = array<i32>} : memref<2x16x64xf32, #tpu.memory_space<vmem>>, vector<2x16x64xf32>,
    return
  }
}

</mosaic_0001>

<llo_original>
// kernel: tpu_custom_call.1
$region0: #{tpu_custom_call.1}
  #allocation0 [shape = 'u32[]', space=smem, size = 0x4, offset = 0x4, fixed_abs, tag = 'smem constant byte address 0x4 - core index']
  #allocation1 [shape = 'u32[72,128]{1,0:T(1,128)}', space=vmem, size = 0x9000, scoped, tag = 'internal scratch']
  %s0 = inlined_call_operand.vmem [shape: f32[2,64,8], index: 0, kind: input, shape index: {}]
  %s1 = inlined_call_operand.vmem [shape: bf16[2,64,64], index: 1, kind: input, shape index: {}]
  %s2 = inlined_call_operand.hbm [shape: s32[2,16], index: 2, kind: input, shape index: {}]
  %s3 = inlined_call_operand.hbm [shape: f32[1,8], index: 3, kind: input, shape index: {}]
  %s4 = inlined_call_operand.hbm [shape: f32[1,8], index: 4, kind: input, shape index: {}]
  %s5 = inlined_call_operand.hbm [shape: f32[8,128], index: 5, kind: input, shape index: {}]
  %s6 = inlined_call_operand.vmem [shape: f32[1,128], index: 6, kind: input, shape index: {}]
  %s7 = inlined_call_operand.vmem [shape: f32[1,128], index: 7, kind: input, shape index: {}]
  %s8 = inlined_call_operand.vmem [shape: f32[1,128], index: 8, kind: input, shape index: {}]
  %s9 = inlined_call_operand.vmem [shape: f32[128,128], index: 9, kind: input, shape index: {}]
  %s10 = inlined_call_operand.vmem [shape: f32[1,128], index: 10, kind: input, shape index: {}]
  %s11 = inlined_call_operand.vmem [shape: f32[1,128], index: 11, kind: input, shape index: {}]
  %s12 = inlined_call_operand.hbm [shape: f32[1,128], index: 12, kind: input, shape index: {}]
  %s13 = inlined_call_operand.vmem [shape: f32[128,128], index: 13, kind: input, shape index: {}]
  %s14 = inlined_call_operand.hbm [shape: f32[1,128], index: 14, kind: input, shape index: {}]
  %s15 = inlined_call_operand.vmem [shape: f32[1,128], index: 15, kind: input, shape index: {}]
  %s16 = inlined_call_operand.vmem [shape: f32[1,128], index: 16, kind: input, shape index: {}]
  %s17 = inlined_call_operand.vmem [shape: f32[128,64], index: 17, kind: input, shape index: {}]
  %s18 = inlined_call_operand.vmem [shape: f32[1,64], index: 18, kind: input, shape index: {}]
  %s19 = inlined_call_operand.vmem [shape: f32[64,4], index: 19, kind: input, shape index: {}]
  %s20 = inlined_call_operand.vmem [shape: f32[4,64], index: 20, kind: input, shape index: {}]
  %s21 = inlined_call_operand.hbm [shape: f32[64,64], index: 21, kind: input, shape index: {}]
  %s22 = inlined_call_operand.vmem [shape: f32[1,64], index: 22, kind: input, shape index: {}]
  %s23 = inlined_call_operand.vmem [shape: f32[1,64], index: 23, kind: input, shape index: {}]
  %s24 = inlined_call_operand.vmem [shape: f32[1,64], index: 24, kind: input, shape index: {}]
  %s25 = inlined_call_operand.hbm [shape: f32[2,16,64], index: 25, kind: output, shape index: {}]
  %s26 = sld [smem:[#allocation0]]
  $region138: #{tpu_custom_call.1} parent=0
    _
  %s28 = ssub.s32 1, %s26
  %s29 = scalar_select 0, %s28, %s26
  $region1: #{tpu_custom_call.1} parent=0
    #allocation2 [shape = 'u8[1024]{0}', space=vmem, size = 0x400, scoped, tag = 'input window, operand 2, single buffered']
    #allocation3 [shape = 's32[1]{0}', space=sflag, size = 0x4, scoped, tag = 'scoped memory for tpu_custom_call.1']
    #allocation4 [shape = 's32[1]{0}', space=sflag, size = 0x4, scoped, tag = 'scoped memory for tpu_custom_call.1']
    #allocation5 [shape = 'u8[512]{0}', space=vmem, size = 0x400, scoped, tag = 'input window, operand 3, single buffered']
    #allocation6 [shape = 's32[1]{0}', space=sflag, size = 0x4, scoped, tag = 'scoped memory for tpu_custom_call.1']
    #allocation7 [shape = 'u8[512]{0}', space=vmem, size = 0x400, scoped, tag = 'input window, operand 4, single buffered']
    #allocation8 [shape = 'u8[4096]{0}', space=vmem, size = 0x1000, scoped, tag = 'input window, operand 5, single buffered']
    #allocation9 [shape = 's32[1]{0}', space=sflag, size = 0x4, scoped, tag = 'scoped memory for tpu_custom_call.1']
    #allocation10 [shape = 'u8[512]{0}', space=vmem, size = 0x400, scoped, tag = 'input window, operand 12, single buffered']
    #allocation11 [shape = 'u8[512]{0}', space=vmem, size = 0x400, scoped, tag = 'input window, operand 14, single buffered']
    #allocation12 [shape = 's32[1]{0}', space=sflag, size = 0x4, scoped, tag = 'scoped memory for tpu_custom_call.1']
    #allocation13 [shape = 'u8[32768]{0}', space=vmem, size = 0x8000, scoped, tag = 'input window, operand 21, single buffered']
    #allocation14 [shape = 'u8[16384]{0}', space=vmem, size = 0x4000, scoped, tag = 'output window, operand 0, single buffered']
    %30 = vsyncpa [#allocation3], 0
    %31 = vsyncpa [#allocation6], 0
    %32 = vsyncpa [#allocation9], 0
    %33 = vsyncpa [#allocation12], 0
    %34 = vsyncpa [#allocation4], 0
    // Predicated region
    $region2: #{tpu_custom_call.1} parent=1 // pred_check
      _
    $region3: #{tpu_custom_call.1} parent=1 // pred_check_branch
      %36 = sbr.rel (0) target = $region5
    $region4: #{tpu_custom_call.1} parent=1 // pred_region
      _
    $region5: #{tpu_custom_call.1} parent=1 // pred_fallthru
      _
    // Predicated region
    $region6: #{tpu_custom_call.1} parent=1 // pred_check
      _
    $region7: #{tpu_custom_call.1} parent=1 // pred_check_branch
      %38 = sbr.rel (0) target = $region9
    $region8: #{tpu_custom_call.1} parent=1 // pred_region
      _
    $region9: #{tpu_custom_call.1} parent=1 // pred_fallthru
      _
    // Predicated region
    $region10: #{tpu_custom_call.1} parent=1 // pred_check
      _
    $region11: #{tpu_custom_call.1} parent=1 // pred_check_branch
      %40 = sbr.rel (0) target = $region13
    $region12: #{tpu_custom_call.1} parent=1 // pred_region
      %42 = vsyncadd [#allocation3], 0
      %s44 = sshll.u32 %s2, 4
      %s45 = int_to_ptr.hbm [resolvable:$true] %s44
      %s46 = sshll.u32 [#allocation2], 4
      %s47 = int_to_ptr.vmem [resolvable:$true] %s46
      %49 = dma.hbm_to_vmem [thread:$0]  %s45, 32, %s47, [#allocation3]
    $region13: #{tpu_custom_call.1} parent=1 // pred_fallthru
      _
    // Predicated region
    $region14: #{tpu_custom_call.1} parent=1 // pred_check
      _
    $region15: #{tpu_custom_call.1} parent=1 // pred_check_branch
      %51 = sbr.rel (0) target = $region17
    $region16: #{tpu_custom_call.1} parent=1 // pred_region
      %53 = vsyncadd [#allocation6], 0
      %s55 = sshll.u32 %s3, 4
      %s56 = int_to_ptr.hbm [resolvable:$true] %s55
      %s57 = sshll.u32 [#allocation5], 4
      %s58 = int_to_ptr.vmem [resolvable:$true] %s57
      %60 = dma.hbm_to_vmem [thread:$0]  %s56, 16, %s58, [#allocation6]
    $region17: #{tpu_custom_call.1} parent=1 // pred_fallthru
      _
    // Predicated region
    $region18: #{tpu_custom_call.1} parent=1 // pred_check
      _
    $region19: #{tpu_custom_call.1} parent=1 // pred_check_branch
      %62 = sbr.rel (0) target = $region21
    $region20: #{tpu_custom_call.1} parent=1 // pred_region
      %64 = vsyncadd [#allocation6], 0
      %s66 = sshll.u32 %s4, 4
      %s67 = int_to_ptr.hbm [resolvable:$true] %s66
      %s68 = sshll.u32 [#allocation7], 4
      %s69 = int_to_ptr.vmem [resolvable:$true] %s68
      %71 = dma.hbm_to_vmem [thread:$0]  %s67, 16, %s69, [#allocation6]
    $region21: #{tpu_custom_call.1} parent=1 // pred_fallthru
      _
    // Predicated region
    $region22: #{tpu_custom_call.1} parent=1 // pred_check
      _
    $region23: #{tpu_custom_call.1} parent=1 // pred_check_branch
      %73 = sbr.rel (0) target = $region25
    $region24: #{tpu_custom_call.1} parent=1 // pred_region
      %75 = vsyncadd [#allocation9], 0
      %s77 = sshll.u32 %s5, 4
      %s78 = int_to_ptr.hbm [resolvable:$true] %s77
      %s79 = sshll.u32 [#allocation8], 4
      %s80 = int_to_ptr.vmem [resolvable:$true] %s79
      %82 = dma.hbm_to_vmem [thread:$0]  %s78, 128, %s80, [#allocation9]
    $region25: #{tpu_custom_call.1} parent=1 // pred_fallthru
      _
    // Predicated region
    $region26: #{tpu_custom_call.1} parent=1 // pred_check
      _
    $region27: #{tpu_custom_call.1} parent=1 // pred_check_branch
      %84 = sbr.rel (0) target = $region29
    $region28: #{tpu_custom_call.1} parent=1 // pred_region
      _
    $region29: #{tpu_custom_call.1} parent=1 // pred_fallthru
      _
    // Predicated region
    $region30: #{tpu_custom_call.1} parent=1 // pred_check
      _
    $region31: #{tpu_custom_call.1} parent=1 // pred_check_branch
      %86 = sbr.rel (0) target = $region33
    $region32: #{tpu_custom_call.1} parent=1 // pred_region
      _
    $region33: #{tpu_custom_call.1} parent=1 // pred_fallthru
      _
    // Predicated region
    $region34: #{tpu_custom_call.1} parent=1 // pred_check
      _
    $region35: #{tpu_custom_call.1} parent=1 // pred_check_branch
      %88 = sbr.rel (0) target = $region37
    $region36: #{tpu_custom_call.1} parent=1 // pred_region
      _
    $region37: #{tpu_custom_call.1} parent=1 // pred_fallthru
      _
    // Predicated region
    $region38: #{tpu_custom_call.1} parent=1 // pred_check
      _
    $region39: #{tpu_custom_call.1} parent=1 // pred_check_branch
      %90 = sbr.rel (0) target = $region41
    $region40: #{tpu_custom_call.1} parent=1 // pred_region
      _
    $region41: #{tpu_custom_call.1} parent=1 // pred_fallthru
      _
    // Predicated region
    $region42: #{tpu_custom_call.1} parent=1 // pred_check
      _
    $region43: #{tpu_custom_call.1} parent=1 // pred_check_branch
      %92 = sbr.rel (0) target = $region45
    $region44: #{tpu_custom_call.1} parent=1 // pred_region
      _
    $region45: #{tpu_custom_call.1} parent=1 // pred_fallthru
      _
    // Predicated region
    $region46: #{tpu_custom_call.1} parent=1 // pred_check
      _
    $region47: #{tpu_custom_call.1} parent=1 // pred_check_branch
      %94 = sbr.rel (0) target = $region49
    $region48: #{tpu_custom_call.1} parent=1 // pred_region
      _
    $region49: #{tpu_custom_call.1} parent=1 // pred_fallthru
      _
    // Predicated region
    $region50: #{tpu_custom_call.1} parent=1 // pred_check
      _
    $region51: #{tpu_custom_call.1} parent=1 // pred_check_branch
      %96 = sbr.rel (0) target = $region53
    $region52: #{tpu_custom_call.1} parent=1 // pred_region
      %98 = vsyncadd [#allocation9], 0
      %s100 = sshll.u32 %s12, 4
      %s101 = int_to_ptr.hbm [resolvable:$true] %s100
      %s102 = sshll.u32 [#allocation10], 4
      %s103 = int_to_ptr.vmem [resolvable:$true] %s102
      %105 = dma.hbm_to_vmem [thread:$0]  %s101, 16, %s103, [#allocation9]
    $region53: #{tpu_custom_call.1} parent=1 // pred_fallthru
      _
    // Predicated region
    $region54: #{tpu_custom_call.1} parent=1 // pred_check
      _
    $region55: #{tpu_custom_call.1} parent=1 // pred_check_branch
      %107 = sbr.rel (0) target = $region57
    $region56: #{tpu_custom_call.1} parent=1 // pred_region
      _
    $region57: #{tpu_custom_call.1} parent=1 // pred_fallthru
      _
    // Predicated region
    $region58: #{tpu_custom_call.1} parent=1 // pred_check
      _
    $region59: #{tpu_custom_call.1} parent=1 // pred_check_branch
      %109 = sbr.rel (0) target = $region61
    $region60: #{tpu_custom_call.1} parent=1 // pred_region
      %111 = vsyncadd [#allocation12], 0
      %s113 = sshll.u32 %s14, 4
      %s114 = int_to_ptr.hbm [resolvable:$true] %s113
      %s115 = sshll.u32 [#allocation11], 4
      %s116 = int_to_ptr.vmem [resolvable:$true] %s115
      %118 = dma.hbm_to_vmem [thread:$0]  %s114, 16, %s116, [#allocation12]
    $region61: #{tpu_custom_call.1} parent=1 // pred_fallthru
      _
    // Predicated region
    $region62: #{tpu_custom_call.1} parent=1 // pred_check
      _
    $region63: #{tpu_custom_call.1} parent=1 // pred_check_branch
      %120 = sbr.rel (0) target = $region65
    $region64: #{tpu_custom_call.1} parent=1 // pred_region
      _
    $region65: #{tpu_custom_call.1} parent=1 // pred_fallthru
      _
    // Predicated region
    $region66: #{tpu_custom_call.1} parent=1 // pred_check
      _
    $region67: #{tpu_custom_call.1} parent=1 // pred_check_branch
      %122 = sbr.rel (0) target = $region69
    $region68: #{tpu_custom_call.1} parent=1 // pred_region
      _
    $region69: #{tpu_custom_call.1} parent=1 // pred_fallthru
      _
    // Predicated region
    $region70: #{tpu_custom_call.1} parent=1 // pred_check
      _
    $region71: #{tpu_custom_call.1} parent=1 // pred_check_branch
      %124 = sbr.rel (0) target = $region73
    $region72: #{tpu_custom_call.1} parent=1 // pred_region
      _
    $region73: #{tpu_custom_call.1} parent=1 // pred_fallthru
      _
    // Predicated region
    $region74: #{tpu_custom_call.1} parent=1 // pred_check
      _
    $region75: #{tpu_custom_call.1} parent=1 // pred_check_branch
      %126 = sbr.rel (0) target = $region77
    $region76: #{tpu_custom_call.1} parent=1 // pred_region
      _
    $region77: #{tpu_custom_call.1} parent=1 // pred_fallthru
      _
    // Predicated region
    $region78: #{tpu_custom_call.1} parent=1 // pred_check
      _
    $region79: #{tpu_custom_call.1} parent=1 // pred_check_branch
      %128 = sbr.rel (0) target = $region81
    $region80: #{tpu_custom_call.1} parent=1 // pred_region
      _
    $region81: #{tpu_custom_call.1} parent=1 // pred_fallthru
      _
    // Predicated region
    $region82: #{tpu_custom_call.1} parent=1 // pred_check
      _
    $region83: #{tpu_custom_call.1} parent=1 // pred_check_branch
      %130 = sbr.rel (0) target = $region85
    $region84: #{tpu_custom_call.1} parent=1 // pred_region
      _
    $region85: #{tpu_custom_call.1} parent=1 // pred_fallthru
      _
    // Predicated region
    $region86: #{tpu_custom_call.1} parent=1 // pred_check
      _
    $region87: #{tpu_custom_call.1} parent=1 // pred_check_branch
      %132 = sbr.rel (0) target = $region89
    $region88: #{tpu_custom_call.1} parent=1 // pred_region
      %134 = vsyncadd [#allocation12], 0
      %s135 = sshll.u32 %s21, 4
      %s136 = int_to_ptr.hbm [resolvable:$true] %s135
      %s137 = sshll.u32 [#allocation13], 4
      %s138 = int_to_ptr.vmem [resolvable:$true] %s137
      %143 = dma.hbm_to_vmem [thread:$0]  %s136, 1024, %s138, [#allocation12], 128, 128, 8
    $region89: #{tpu_custom_call.1} parent=1 // pred_fallthru
      _
    // Predicated region
    $region90: #{tpu_custom_call.1} parent=1 // pred_check
      _
    $region91: #{tpu_custom_call.1} parent=1 // pred_check_branch
      %145 = sbr.rel (0) target = $region93
    $region92: #{tpu_custom_call.1} parent=1 // pred_region
      _
    $region93: #{tpu_custom_call.1} parent=1 // pred_fallthru
      _
    // Predicated region
    $region94: #{tpu_custom_call.1} parent=1 // pred_check
      _
    $region95: #{tpu_custom_call.1} parent=1 // pred_check_branch
      %147 = sbr.rel (0) target = $region97
    $region96: #{tpu_custom_call.1} parent=1 // pred_region
      _
    $region97: #{tpu_custom_call.1} parent=1 // pred_fallthru
      _
    // Predicated region
    $region98: #{tpu_custom_call.1} parent=1 // pred_check
      _
    $region99: #{tpu_custom_call.1} parent=1 // pred_check_branch
      %149 = sbr.rel (0) target = $region101
    $region100: #{tpu_custom_call.1} parent=1 // pred_region
      _
    $region101: #{tpu_custom_call.1} parent=1 // pred_fallthru
      _
    // Predicated region
    $region102: #{tpu_custom_call.1} parent=1 // pred_check
      _
    $region103: #{tpu_custom_call.1} parent=1 // pred_check_branch
      %151 = sbr.rel (0) target = $region105
    $region104: #{tpu_custom_call.1} parent=1 // pred_region
      %153 = dma.done [#allocation3], 32
    $region105: #{tpu_custom_call.1} parent=1 // pred_fallthru
      _
    // Predicated region
    $region106: #{tpu_custom_call.1} parent=1 // pred_check
      _
    $region107: #{tpu_custom_call.1} parent=1 // pred_check_branch
      %155 = sbr.rel (0) target = $region109
    $region108: #{tpu_custom_call.1} parent=1 // pred_region
      %157 = dma.done [#allocation6], 16
    $region109: #{tpu_custom_call.1} parent=1 // pred_fallthru
      _
    // Predicated region
    $region110: #{tpu_custom_call.1} parent=1 // pred_check
      _
    $region111: #{tpu_custom_call.1} parent=1 // pred_check_branch
      %159 = sbr.rel (0) target = $region113
    $region112: #{tpu_custom_call.1} parent=1 // pred_region
      %161 = dma.done [#allocation6], 16
    $region113: #{tpu_custom_call.1} parent=1 // pred_fallthru
      _
    // Predicated region
    $region114: #{tpu_custom_call.1} parent=1 // pred_check
      _
    $region115: #{tpu_custom_call.1} parent=1 // pred_check_branch
      %163 = sbr.rel (0) target = $region117
    $region116: #{tpu_custom_call.1} parent=1 // pred_region
      %165 = dma.done [#allocation9], 128
    $region117: #{tpu_custom_call.1} parent=1 // pred_fallthru
      _
    // Predicated region
    $region118: #{tpu_custom_call.1} parent=1 // pred_check
      _
    $region119: #{tpu_custom_call.1} parent=1 // pred_check_branch
      %167 = sbr.rel (0) target = $region121
    $region120: #{tpu_custom_call.1} parent=1 // pred_region
      %169 = dma.done [#allocation9], 16
    $region121: #{tpu_custom_call.1} parent=1 // pred_fallthru
      _
    // Predicated region
    $region122: #{tpu_custom_call.1} parent=1 // pred_check
      _
    $region123: #{tpu_custom_call.1} parent=1 // pred_check_branch
      %171 = sbr.rel (0) target = $region125
    $region124: #{tpu_custom_call.1} parent=1 // pred_region
      %173 = dma.done [#allocation12], 16
    $region125: #{tpu_custom_call.1} parent=1 // pred_fallthru
      _
    // Predicated region
    $region126: #{tpu_custom_call.1} parent=1 // pred_check
      _
    $region127: #{tpu_custom_call.1} parent=1 // pred_check_branch
      %175 = sbr.rel (0) target = $region129
    $region128: #{tpu_custom_call.1} parent=1 // pred_region
      %177 = dma.done [#allocation12], 1024
    $region129: #{tpu_custom_call.1} parent=1 // pred_fallthru
      _
    %v179 = vld [vmem:[%s1] sm:$0xf]
    %v180 = vld [vmem:[%s1 + $0x4] sm:$0xf]
    %v181 = vld [vmem:[%s1 + $0x8] sm:$0xf]
    %v182 = vld [vmem:[%s1 + $0xc] sm:$0xf]
    %v183 = vld [vmem:[%s1 + $0x10] sm:$0xf]
    %v184 = vld [vmem:[%s1 + $0x14] sm:$0xf]
    %v185 = vld [vmem:[%s1 + $0x18] sm:$0xf]
    %v186 = vld [vmem:[%s1 + $0x1c] sm:$0xf]
    %v187 = vld [vmem:[%s1 + $0x20] sm:$0xf]
    %v188 = vld [vmem:[%s1 + $0x24] sm:$0xf]
    %v189 = vld [vmem:[%s1 + $0x28] sm:$0xf]
    %v190 = vld [vmem:[%s1 + $0x2c] sm:$0xf]
    %v191 = vld [vmem:[%s1 + $0x30] sm:$0xf]
    %v192 = vld [vmem:[%s1 + $0x34] sm:$0xf]
    %v193 = vld [vmem:[%s1 + $0x38] sm:$0xf]
    %v194 = vld [vmem:[%s1 + $0x3c] sm:$0xf]
    %v195 = vunpack.c.l.bf16 %v179
    %v196 = vunpack.c.l.bf16 %v180
    %v197 = vunpack.c.l.bf16 %v181
    %v198 = vunpack.c.l.bf16 %v182
    %v199 = vunpack.c.l.bf16 %v183
    %v200 = vunpack.c.l.bf16 %v184
    %v201 = vunpack.c.l.bf16 %v185
    %v202 = vunpack.c.l.bf16 %v186
    %v203 = vunpack.c.l.bf16 %v187
    %v204 = vunpack.c.l.bf16 %v188
    %v205 = vunpack.c.l.bf16 %v189
    %v206 = vunpack.c.l.bf16 %v190
    %v207 = vunpack.c.l.bf16 %v191
    %v208 = vunpack.c.l.bf16 %v192
    %v209 = vunpack.c.l.bf16 %v193
    %v210 = vunpack.c.l.bf16 %v194
    %vm211 = vcmask 523264
    %v212 = vsel %vm211, %v195, 0.0
    %213 = vadd.xlane.f32.xlu0 %v212
    %v214 = vpop.xlane.xlu0 %213
    %v215 = vsel %vm211, %v196, 0.0
    %216 = vadd.xlane.f32.xlu0 %v215
    %v217 = vpop.xlane.xlu0 %216
    %v218 = vsel %vm211, %v197, 0.0
    %219 = vadd.xlane.f32.xlu0 %v218
    %v220 = vpop.xlane.xlu0 %219
    %v221 = vsel %vm211, %v198, 0.0
    %222 = vadd.xlane.f32.xlu0 %v221
    %v223 = vpop.xlane.xlu0 %222
    %v224 = vsel %vm211, %v199, 0.0
    %225 = vadd.xlane.f32.xlu0 %v224
    %v226 = vpop.xlane.xlu0 %225
    %v227 = vsel %vm211, %v200, 0.0
    %228 = vadd.xlane.f32.xlu0 %v227
    %v229 = vpop.xlane.xlu0 %228
    %v230 = vsel %vm211, %v201, 0.0
    %231 = vadd.xlane.f32.xlu0 %v230
    %v232 = vpop.xlane.xlu0 %231
    %v233 = vsel %vm211, %v202, 0.0
    %234 = vadd.xlane.f32.xlu0 %v233
    %v235 = vpop.xlane.xlu0 %234
    %v236 = vsel %vm211, %v203, 0.0
    %237 = vadd.xlane.f32.xlu0 %v236
    %v238 = vpop.xlane.xlu0 %237
    %v239 = vsel %vm211, %v204, 0.0
    %240 = vadd.xlane.f32.xlu0 %v239
    %v241 = vpop.xlane.xlu0 %240
    %v242 = vsel %vm211, %v205, 0.0
    %243 = vadd.xlane.f32.xlu0 %v242
    %v244 = vpop.xlane.xlu0 %243
    %v245 = vsel %vm211, %v206, 0.0
    %246 = vadd.xlane.f32.xlu0 %v245
    %v247 = vpop.xlane.xlu0 %246
    %v248 = vsel %vm211, %v207, 0.0
    %249 = vadd.xlane.f32.xlu0 %v248
    %v250 = vpop.xlane.xlu0 %249
    %v251 = vsel %vm211, %v208, 0.0
    %252 = vadd.xlane.f32.xlu0 %v251
    %v253 = vpop.xlane.xlu0 %252
    %v254 = vsel %vm211, %v209, 0.0
    %255 = vadd.xlane.f32.xlu0 %v254
    %v256 = vpop.xlane.xlu0 %255
    %v257 = vsel %vm211, %v210, 0.0
    %258 = vadd.xlane.f32.xlu0 %v257
    %v259 = vpop.xlane.xlu0 %258
    %vm260 = vcmp.gt.f32.partialorder %v214, 0.0
    %vm261 = vcmp.gt.f32.partialorder %v217, 0.0
    %vm262 = vcmp.gt.f32.partialorder %v220, 0.0
    %vm263 = vcmp.gt.f32.partialorder %v223, 0.0
    %vm264 = vcmp.gt.f32.partialorder %v226, 0.0
    %vm265 = vcmp.gt.f32.partialorder %v229, 0.0
    %vm266 = vcmp.gt.f32.partialorder %v232, 0.0
    %vm267 = vcmp.gt.f32.partialorder %v235, 0.0
    %vm268 = vcmp.gt.f32.partialorder %v238, 0.0
    %vm269 = vcmp.gt.f32.partialorder %v241, 0.0
    %vm270 = vcmp.gt.f32.partialorder %v244, 0.0
    %vm271 = vcmp.gt.f32.partialorder %v247, 0.0
    %vm272 = vcmp.gt.f32.partialorder %v250, 0.0
    %vm273 = vcmp.gt.f32.partialorder %v253, 0.0
    %vm274 = vcmp.gt.f32.partialorder %v256, 0.0
    %vm275 = vcmp.gt.f32.partialorder %v259, 0.0
    %v276 = vmax.f32 %v214, 1e-12
    %v277 = vmax.f32 %v217, 1e-12
    %v278 = vmax.f32 %v220, 1e-12
    %v279 = vmax.f32 %v223, 1e-12
    %v280 = vmax.f32 %v226, 1e-12
    %v281 = vmax.f32 %v229, 1e-12
    %v282 = vmax.f32 %v232, 1e-12
    %v283 = vmax.f32 %v235, 1e-12
    %v284 = vmax.f32 %v238, 1e-12
    %v285 = vmax.f32 %v241, 1e-12
    %v286 = vmax.f32 %v244, 1e-12
    %v287 = vmax.f32 %v247, 1e-12
    %v288 = vmax.f32 %v250, 1e-12
    %v289 = vmax.f32 %v253, 1e-12
    %v290 = vmax.f32 %v256, 1e-12
    %v291 = vmax.f32 %v259, 1e-12
    %v292 = vrsqrt.pop %v276
    %v293 = vmul.f32 %v292, %v276
    %v294 = vmul.f32 %v293, %v292
    %v295 = vmul.f32 0.5, %v294
    %v296 = vsub.f32 1.5, %v295
    %v297 = vmul.f32 %v292, %v296
    %vm298 = vweird.f32 %v276
    %vm299 = vweird.f32 %v292
    %vm300 = vmor %vm298, %vm299
    %v301 = vsel %vm300, %v292, %v297
    %v302 = vrsqrt.pop %v277
    %v303 = vmul.f32 %v302, %v277
    %v304 = vmul.f32 %v303, %v302
    %v305 = vmul.f32 0.5, %v304
    %v306 = vsub.f32 1.5, %v305
    %v307 = vmul.f32 %v302, %v306
    %vm308 = vweird.f32 %v277
    %vm309 = vweird.f32 %v302
    %vm310 = vmor %vm308, %vm309
    %v311 = vsel %vm310, %v302, %v307
    %v312 = vrsqrt.pop %v278
    %v313 = vmul.f32 %v312, %v278
    %v314 = vmul.f32 %v313, %v312
    %v315 = vmul.f32 0.5, %v314
    %v316 = vsub.f32 1.5, %v315
    %v317 = vmul.f32 %v312, %v316
    %vm318 = vweird.f32 %v278
    %vm319 = vweird.f32 %v312
    %vm320 = vmor %vm318, %vm319
    %v321 = vsel %vm320, %v312, %v317
    %v322 = vrsqrt.pop %v279
    %v323 = vmul.f32 %v322, %v279
    %v324 = vmul.f32 %v323, %v322
    %v325 = vmul.f32 0.5, %v324
    %v326 = vsub.f32 1.5, %v325
    %v327 = vmul.f32 %v322, %v326
    %vm328 = vweird.f32 %v279
    %vm329 = vweird.f32 %v322
    %vm330 = vmor %vm328, %vm329
    %v331 = vsel %vm330, %v322, %v327
    %v332 = vrsqrt.pop %v280
    %v333 = vmul.f32 %v332, %v280
    %v334 = vmul.f32 %v333, %v332
    %v335 = vmul.f32 0.5, %v334
    %v336 = vsub.f32 1.5, %v335
    %v337 = vmul.f32 %v332, %v336
    %vm338 = vweird.f32 %v280
    %vm339 = vweird.f32 %v332
    %vm340 = vmor %vm338, %vm339
    %v341 = vsel %vm340, %v332, %v337
    %v342 = vrsqrt.pop %v281
    %v343 = vmul.f32 %v342, %v281
    %v344 = vmul.f32 %v343, %v342
    %v345 = vmul.f32 0.5, %v344
    %v346 = vsub.f32 1.5, %v345
    %v347 = vmul.f32 %v342, %v346
    %vm348 = vweird.f32 %v281
    %vm349 = vweird.f32 %v342
    %vm350 = vmor %vm348, %vm349
    %v351 = vsel %vm350, %v342, %v347
    %v352 = vrsqrt.pop %v282
    %v353 = vmul.f32 %v352, %v282
    %v354 = vmul.f32 %v353, %v352
    %v355 = vmul.f32 0.5, %v354
    %v356 = vsub.f32 1.5, %v355
    %v357 = vmul.f32 %v352, %v356
    %vm358 = vweird.f32 %v282
    %vm359 = vweird.f32 %v352
    %vm360 = vmor %vm358, %vm359
    %v361 = vsel %vm360, %v352, %v357
    %v362 = vrsqrt.pop %v283
    %v363 = vmul.f32 %v362, %v283
    %v364 = vmul.f32 %v363, %v362
    %v365 = vmul.f32 0.5, %v364
    %v366 = vsub.f32 1.5, %v365
    %v367 = vmul.f32 %v362, %v366
    %vm368 = vweird.f32 %v283
    %vm369 = vweird.f32 %v362
    %vm370 = vmor %vm368, %vm369
    %v371 = vsel %vm370, %v362, %v367
    %v372 = vrsqrt.pop %v284
    %v373 = vmul.f32 %v372, %v284
    %v374 = vmul.f32 %v373, %v372
    %v375 = vmul.f32 0.5, %v374
    %v376 = vsub.f32 1.5, %v375
    %v377 = vmul.f32 %v372, %v376
    %vm378 = vweird.f32 %v284
    %vm379 = vweird.f32 %v372
    %vm380 = vmor %vm378, %vm379
    %v381 = vsel %vm380, %v372, %v377
    %v382 = vrsqrt.pop %v285
    %v383 = vmul.f32 %v382, %v285
    %v384 = vmul.f32 %v383, %v382
    %v385 = vmul.f32 0.5, %v384
    %v386 = vsub.f32 1.5, %v385
    %v387 = vmul.f32 %v382, %v386
    %vm388 = vweird.f32 %v285
    %vm389 = vweird.f32 %v382
    %vm390 = vmor %vm388, %vm389
    %v391 = vsel %vm390, %v382, %v387
    %v392 = vrsqrt.pop %v286
    %v393 = vmul.f32 %v392, %v286
    %v394 = vmul.f32 %v393, %v392
    %v395 = vmul.f32 0.5, %v394
    %v396 = vsub.f32 1.5, %v395
    %v397 = vmul.f32 %v392, %v396
    %vm398 = vweird.f32 %v286
    %vm399 = vweird.f32 %v392
    %vm400 = vmor %vm398, %vm399
    %v401 = vsel %vm400, %v392, %v397
    %v402 = vrsqrt.pop %v287
    %v403 = vmul.f32 %v402, %v287
    %v404 = vmul.f32 %v403, %v402
    %v405 = vmul.f32 0.5, %v404
    %v406 = vsub.f32 1.5, %v405
    %v407 = vmul.f32 %v402, %v406
    %vm408 = vweird.f32 %v287
    %vm409 = vweird.f32 %v402
    %vm410 = vmor %vm408, %vm409
    %v411 = vsel %vm410, %v402, %v407
    %v412 = vrsqrt.pop %v288
    %v413 = vmul.f32 %v412, %v288
    %v414 = vmul.f32 %v413, %v412
    %v415 = vmul.f32 0.5, %v414
    %v416 = vsub.f32 1.5, %v415
    %v417 = vmul.f32 %v412, %v416
    %vm418 = vweird.f32 %v288
    %vm419 = vweird.f32 %v412
    %vm420 = vmor %vm418, %vm419
    %v421 = vsel %vm420, %v412, %v417
    %v422 = vrsqrt.pop %v289
    %v423 = vmul.f32 %v422, %v289
    %v424 = vmul.f32 %v423, %v422
    %v425 = vmul.f32 0.5, %v424
    %v426 = vsub.f32 1.5, %v425
    %v427 = vmul.f32 %v422, %v426
    %vm428 = vweird.f32 %v289
    %vm429 = vweird.f32 %v422
    %vm430 = vmor %vm428, %vm429
    %v431 = vsel %vm430, %v422, %v427
    %v432 = vrsqrt.pop %v290
    %v433 = vmul.f32 %v432, %v290
    %v434 = vmul.f32 %v433, %v432
    %v435 = vmul.f32 0.5, %v434
    %v436 = vsub.f32 1.5, %v435
    %v437 = vmul.f32 %v432, %v436
    %vm438 = vweird.f32 %v290
    %vm439 = vweird.f32 %v432
    %vm440 = vmor %vm438, %vm439
    %v441 = vsel %vm440, %v432, %v437
    %v442 = vrsqrt.pop %v291
    %v443 = vmul.f32 %v442, %v291
    %v444 = vmul.f32 %v443, %v442
    %v445 = vmul.f32 0.5, %v444
    %v446 = vsub.f32 1.5, %v445
    %v447 = vmul.f32 %v442, %v446
    %vm448 = vweird.f32 %v291
    %vm449 = vweird.f32 %v442
    %vm450 = vmor %vm448, %vm449
    %v451 = vsel %vm450, %v442, %v447
    %v452 = vsel %vm260, %v301, 0.0
    %v453 = vsel %vm261, %v311, 0.0
    %v454 = vsel %vm262, %v321, 0.0
    %v455 = vsel %vm263, %v331, 0.0
    %v456 = vsel %vm264, %v341, 0.0
    %v457 = vsel %vm265, %v351, 0.0
    %v458 = vsel %vm266, %v361, 0.0
    %v459 = vsel %vm267, %v371, 0.0
    %v460 = vsel %vm268, %v381, 0.0
    %v461 = vsel %vm269, %v391, 0.0
    %v462 = vsel %vm270, %v401, 0.0
    %v463 = vsel %vm271, %v411, 0.0
    %v464 = vsel %vm272, %v421, 0.0
    %v465 = vsel %vm273, %v431, 0.0
    %v466 = vsel %vm274, %v441, 0.0
    %v467 = vsel %vm275, %v451, 0.0
    %v468 = vpack.c.bf16 %v452, %v452
    %v469 = vpack.c.bf16 %v453, %v453
    %v470 = vpack.c.bf16 %v454, %v454
    %v471 = vpack.c.bf16 %v455, %v455
    %v472 = vpack.c.bf16 %v456, %v456
    %v473 = vpack.c.bf16 %v457, %v457
    %v474 = vpack.c.bf16 %v458, %v458
    %v475 = vpack.c.bf16 %v459, %v459
    %v476 = vpack.c.bf16 %v460, %v460
    %v477 = vpack.c.bf16 %v461, %v461
    %v478 = vpack.c.bf16 %v462, %v462
    %v479 = vpack.c.bf16 %v463, %v463
    %v480 = vpack.c.bf16 %v464, %v464
    %v481 = vpack.c.bf16 %v465, %v465
    %v482 = vpack.c.bf16 %v466, %v466
    %v483 = vpack.c.bf16 %v467, %v467
    %v484 = vlaneseq
    %v485 = vshrl.u32 %v484, 7
    %v486 = vadd.s32 %v485, 8
    %v487 = vadd.s32 %v485, 16
    %v488 = vadd.s32 %v485, 24
    %v489 = vadd.s32 %v485, 32
    %v490 = vadd.s32 %v485, 40
    %v491 = vadd.s32 %v485, 48
    %v492 = vadd.s32 %v485, 56
    %v493 = vlaneseq
    %v494 = vand.u32 %v493, 127
    %vm495 = vcmp.eq.s32.totalorder %v485, %v494
    %vm496 = vcmp.eq.s32.totalorder %v486, %v494
    %vm497 = vcmp.eq.s32.totalorder %v487, %v494
    %vm498 = vcmp.eq.s32.totalorder %v488, %v494
    %vm499 = vcmp.eq.s32.totalorder %v489, %v494
    %vm500 = vcmp.eq.s32.totalorder %v490, %v494
    %vm501 = vcmp.eq.s32.totalorder %v491, %v494
    %vm502 = vcmp.eq.s32.totalorder %v492, %v494
    %v503 = vsel %vm495, 1, 0
    %v504 = vsel %vm496, 1, 0
    %v505 = vsel %vm497, 1, 0
    %v506 = vsel %vm498, 1, 0
    %v507 = vsel %vm499, 1, 0
    %v508 = vsel %vm500, 1, 0
    %v509 = vsel %vm501, 1, 0
    %v510 = vsel %vm502, 1, 0
    %v511 = vcvt.s32.f32 %v503
    %v512 = vcvt.s32.f32 %v504
    %v513 = vcvt.s32.f32 %v505
    %v514 = vcvt.s32.f32 %v506
    %v515 = vcvt.s32.f32 %v507
    %v516 = vcvt.s32.f32 %v508
    %v517 = vcvt.s32.f32 %v509
    %v518 = vcvt.s32.f32 %v510
    %v519 = vpack.c.bf16 %v511, %v511
    %v520 = vpack.c.bf16 %v512, %v512
    %v521 = vpack.c.bf16 %v513, %v513
    %v522 = vpack.c.bf16 %v514, %v514
    %v523 = vpack.c.bf16 %v515, %v515
    %v524 = vpack.c.bf16 %v516, %v516
    %v525 = vpack.c.bf16 %v517, %v517
    %v526 = vpack.c.bf16 %v518, %v518
    %v527 = vunpack.c.l.bf16 %v468
    %v528 = vunpack.c.l.bf16 %v469
    %v529 = vunpack.c.l.bf16 %v470
    %v530 = vunpack.c.l.bf16 %v471
    %v531 = vunpack.c.l.bf16 %v472
    %v532 = vunpack.c.l.bf16 %v473
    %v533 = vunpack.c.l.bf16 %v474
    %v534 = vunpack.c.l.bf16 %v475
    %v535 = vunpack.c.l.bf16 %v476
    %v536 = vunpack.c.l.bf16 %v477
    %v537 = vunpack.c.l.bf16 %v478
    %v538 = vunpack.c.l.bf16 %v479
    %v539 = vunpack.c.l.bf16 %v480
    %v540 = vunpack.c.l.bf16 %v481
    %v541 = vunpack.c.l.bf16 %v482
    %v542 = vunpack.c.l.bf16 %v483
    %v543 = vmul.f32 %v527, %v195
    %v544 = vmul.f32 %v528, %v196
    %v545 = vmul.f32 %v529, %v197
    %v546 = vmul.f32 %v530, %v198
    %v547 = vmul.f32 %v531, %v199
    %v548 = vmul.f32 %v532, %v200
    %v549 = vmul.f32 %v533, %v201
    %v550 = vmul.f32 %v534, %v202
    %v551 = vmul.f32 %v535, %v203
    %v552 = vmul.f32 %v536, %v204
    %v553 = vmul.f32 %v537, %v205
    %v554 = vmul.f32 %v538, %v206
    %v555 = vmul.f32 %v539, %v207
    %v556 = vmul.f32 %v540, %v208
    %v557 = vmul.f32 %v541, %v209
    %v558 = vmul.f32 %v542, %v210
    %v559 = vpack.c.bf16 %v543, %v543
    %v560 = vpack.c.bf16 %v544, %v544
    %v561 = vpack.c.bf16 %v545, %v545
    %v562 = vpack.c.bf16 %v546, %v546
    %v563 = vpack.c.bf16 %v547, %v547
    %v564 = vpack.c.bf16 %v548, %v548
    %v565 = vpack.c.bf16 %v549, %v549
    %v566 = vpack.c.bf16 %v550, %v550
    %v567 = vpack.c.bf16 %v551, %v551
    %v568 = vpack.c.bf16 %v552, %v552
    %v569 = vpack.c.bf16 %v553, %v553
    %v570 = vpack.c.bf16 %v554, %v554
    %v571 = vpack.c.bf16 %v555, %v555
    %v572 = vpack.c.bf16 %v556, %v556
    %v573 = vpack.c.bf16 %v557, %v557
    %v574 = vpack.c.bf16 %v558, %v558
    %v575 = vunpack.c.l.bf16 %v559
    %v576 = vunpack.c.l.bf16 %v560
    %v577 = vunpack.c.l.bf16 %v561
    %v578 = vunpack.c.l.bf16 %v562
    %v579 = vunpack.c.l.bf16 %v563
    %v580 = vunpack.c.l.bf16 %v564
    %v581 = vunpack.c.l.bf16 %v565
    %v582 = vunpack.c.l.bf16 %v566
    %v583 = vunpack.c.l.bf16 %v567
    %v584 = vunpack.c.l.bf16 %v568
    %v585 = vunpack.c.l.bf16 %v569
    %v586 = vunpack.c.l.bf16 %v570
    %v587 = vunpack.c.l.bf16 %v571
    %v588 = vunpack.c.l.bf16 %v572
    %v589 = vunpack.c.l.bf16 %v573
    %v590 = vunpack.c.l.bf16 %v574
    %v607 = vperm.slane %v527, %v494
    %v608 = vadd.s32 %v494, 4294967288
    %v609 = vperm.slane %v528, %v608
    %vm610 = vcmask 130112
    %v611 = vsel %vm610, %v609, %v607
    %v612 = vadd.s32 %v494, 4294967280
    %v613 = vperm.slane %v529, %v612
    %vm614 = vcmask 195712
    %v615 = vsel %vm614, %v613, %v611
    %v616 = vadd.s32 %v494, 4294967272
    %v617 = vperm.slane %v530, %v616
    %vm618 = vcmask 261312
    %v619 = vsel %vm618, %v617, %v615
    %v620 = vadd.s32 %v494, 4294967264
    %v621 = vperm.slane %v531, %v620
    %vm622 = vcmask 326912
    %v623 = vsel %vm622, %v621, %v619
    %v624 = vadd.s32 %v494, 4294967256
    %v625 = vperm.slane %v532, %v624
    %vm626 = vcmask 392512
    %v627 = vsel %vm626, %v625, %v623
    %v628 = vadd.s32 %v494, 4294967248
    %v629 = vperm.slane %v533, %v628
    %vm630 = vcmask 458112
    %v631 = vsel %vm630, %v629, %v627
    %v632 = vadd.s32 %v494, 4294967240
    %v633 = vperm.slane %v534, %v632
    %vm634 = vcmask 523712
    %v635 = vsel %vm634, %v633, %v631
    %v636 = vperm.slane %v535, %v494
    %v637 = vperm.slane %v536, %v608
    %v638 = vsel %vm610, %v637, %v636
    %v639 = vperm.slane %v537, %v612
    %v640 = vsel %vm614, %v639, %v638
    %v641 = vperm.slane %v538, %v616
    %v642 = vsel %vm618, %v641, %v640
    %v643 = vperm.slane %v539, %v620
    %v644 = vsel %vm622, %v643, %v642
    %v645 = vperm.slane %v540, %v624
    %v646 = vsel %vm626, %v645, %v644
    %v647 = vperm.slane %v541, %v628
    %v648 = vsel %vm630, %v647, %v646
    %v649 = vperm.slane %v542, %v632
    %v650 = vsel %vm634, %v649, %v648
    %vm651 = vcmask 1041409
    %vm652 = vcmask 1042434
    %v653 = vsel %vm652, %v635, %v635
    %vm654 = vcmask 1043459
    %v655 = vsel %vm654, %v635, %v653
    %vm656 = vcmask 1044484
    %v657 = vsel %vm656, %v635, %v655
    %vm658 = vcmask 1045509
    %v659 = vsel %vm658, %v635, %v657
    %vm660 = vcmask 1046534
    %v661 = vsel %vm660, %v635, %v659
    %vm662 = vcmask 1047559
    %v663 = vsel %vm662, %v635, %v661
    %v664 = vsel %vm652, %v650, %v650
    %v665 = vsel %vm654, %v650, %v664
    %v666 = vsel %vm656, %v650, %v665
    %v667 = vsel %vm658, %v650, %v666
    %v668 = vsel %vm660, %v650, %v667
    %v669 = vsel %vm662, %v650, %v668
    %v672 = vmul.f32 %v575, %v663
    %v673 = vmul.f32 %v576, %v663
    %v674 = vmul.f32 %v577, %v663
    %v675 = vmul.f32 %v578, %v663
    %v676 = vmul.f32 %v579, %v663
    %v677 = vmul.f32 %v580, %v663
    %v678 = vmul.f32 %v581, %v663
    %v679 = vmul.f32 %v582, %v663
    %v680 = vmul.f32 %v583, %v669
    %v681 = vmul.f32 %v584, %v669
    %v682 = vmul.f32 %v585, %v669
    %v683 = vmul.f32 %v586, %v669
    %v684 = vmul.f32 %v587, %v669
    %v685 = vmul.f32 %v588, %v669
    %v686 = vmul.f32 %v589, %v669
    %v687 = vmul.f32 %v590, %v669
    %v688 = vpack.c.bf16 %v672, %v672
    %v689 = vpack.c.bf16 %v673, %v673
    %v690 = vpack.c.bf16 %v674, %v674
    %v691 = vpack.c.bf16 %v675, %v675
    %v692 = vpack.c.bf16 %v676, %v676
    %v693 = vpack.c.bf16 %v677, %v677
    %v694 = vpack.c.bf16 %v678, %v678
    %v695 = vpack.c.bf16 %v679, %v679
    %v696 = vpack.c.bf16 %v680, %v680
    %v697 = vpack.c.bf16 %v681, %v681
    %v698 = vpack.c.bf16 %v682, %v682
    %v699 = vpack.c.bf16 %v683, %v683
    %v700 = vpack.c.bf16 %v684, %v684
    %v701 = vpack.c.bf16 %v685, %v685
    %v702 = vpack.c.bf16 %v686, %v686
    %v703 = vpack.c.bf16 %v687, %v687
    %v704 = vunpack.c.l.bf16 %v688
    %v705 = vunpack.c.l.bf16 %v689
    %v706 = vunpack.c.l.bf16 %v690
    %v707 = vunpack.c.l.bf16 %v691
    %v708 = vunpack.c.l.bf16 %v692
    %v709 = vunpack.c.l.bf16 %v693
    %v710 = vunpack.c.l.bf16 %v694
    %v711 = vunpack.c.l.bf16 %v695
    %v712 = vunpack.c.l.bf16 %v696
    %v713 = vunpack.c.l.bf16 %v697
    %v714 = vunpack.c.l.bf16 %v698
    %v715 = vunpack.c.l.bf16 %v699
    %v716 = vunpack.c.l.bf16 %v700
    %v717 = vunpack.c.l.bf16 %v701
    %v718 = vunpack.c.l.bf16 %v702
    %v719 = vunpack.c.l.bf16 %v703
    %v720 = vunpack.c.l.bf16 %v519
    %v721 = vunpack.c.l.bf16 %v520
    %v722 = vunpack.c.l.bf16 %v521
    %v723 = vunpack.c.l.bf16 %v522
    %v724 = vunpack.c.l.bf16 %v523
    %v725 = vunpack.c.l.bf16 %v524
    %v726 = vunpack.c.l.bf16 %v525
    %v727 = vunpack.c.l.bf16 %v526
    %v728 = vadd.f32 %v704, %v720
    %v729 = vadd.f32 %v705, %v721
    %v730 = vadd.f32 %v706, %v722
    %v731 = vadd.f32 %v707, %v723
    %v732 = vadd.f32 %v708, %v724
    %v733 = vadd.f32 %v709, %v725
    %v734 = vadd.f32 %v710, %v726
    %v735 = vadd.f32 %v711, %v727
    %v736 = vadd.f32 %v712, %v720
    %v737 = vadd.f32 %v713, %v721
    %v738 = vadd.f32 %v714, %v722
    %v739 = vadd.f32 %v715, %v723
    %v740 = vadd.f32 %v716, %v724
    %v741 = vadd.f32 %v717, %v725
    %v742 = vadd.f32 %v718, %v726
    %v743 = vadd.f32 %v719, %v727
    %v744 = vpack.c.bf16 %v728, %v728
    %v745 = vpack.c.bf16 %v729, %v729
    %v746 = vpack.c.bf16 %v730, %v730
    %v747 = vpack.c.bf16 %v731, %v731
    %v748 = vpack.c.bf16 %v732, %v732
    %v749 = vpack.c.bf16 %v733, %v733
    %v750 = vpack.c.bf16 %v734, %v734
    %v751 = vpack.c.bf16 %v735, %v735
    %v752 = vpack.c.bf16 %v736, %v736
    %v753 = vpack.c.bf16 %v737, %v737
    %v754 = vpack.c.bf16 %v738, %v738
    %v755 = vpack.c.bf16 %v739, %v739
    %v756 = vpack.c.bf16 %v740, %v740
    %v757 = vpack.c.bf16 %v741, %v741
    %v758 = vpack.c.bf16 %v742, %v742
    %v759 = vpack.c.bf16 %v743, %v743
    %v760 = vld [vmem:[#allocation2] sm:$0x3]
    %v761 = vperm.slane %v760, 0
    %v762 = vlaneseq
    %v763 = vshrl.u32 %v762, 7
    %765 = vset.pattern.permute.xlu0 %v763
    %766 = vperm.xlu0 %765, %v761
    %v767 = vpop.permute.xlu0 %766
    %v768 = vlaneseq
    %v769 = vshrl.u32 %v768, 7
    %v770 = vadd.s32 %v769, 8
    %771 = vset.pattern.permute.xlu0 %v770
    %772 = vperm.xlu0 %771, %v761
    %v773 = vpop.permute.xlu0 %772
    %v774 = vperm.slane %v760, 1
    %v775 = vlaneseq
    %v776 = vshrl.u32 %v775, 7
    %778 = vset.pattern.permute.xlu0 %v776
    %779 = vperm.xlu0 %778, %v774
    %v780 = vpop.permute.xlu0 %779
    %v781 = vlaneseq
    %v782 = vshrl.u32 %v781, 7
    %v783 = vadd.s32 %v782, 8
    %784 = vset.pattern.permute.xlu0 %v783
    %785 = vperm.xlu0 %784, %v774
    %v786 = vpop.permute.xlu0 %785
    %vm787 = vcmp.eq.s32.totalorder %v767, %v494
    %vm788 = vcmp.eq.s32.totalorder %v773, %v494
    %vm789 = vcmp.eq.s32.totalorder %v780, %v494
    %vm790 = vcmp.eq.s32.totalorder %v786, %v494
    %v791 = vsel %vm787, 1, 0
    %v792 = vsel %vm788, 1, 0
    %v793 = vsel %vm789, 1, 0
    %v794 = vsel %vm790, 1, 0
    %v795 = vcvt.s32.f32 %v791
    %v796 = vcvt.s32.f32 %v792
    %v797 = vcvt.s32.f32 %v793
    %v798 = vcvt.s32.f32 %v794
    %v799 = vpack.c.bf16 %v795, %v795
    %v800 = vpack.c.bf16 %v796, %v796
    %v801 = vpack.c.bf16 %v797, %v797
    %v802 = vpack.c.bf16 %v798, %v798
    %v805 = vunpack.c.l.b16 %v799
    %v806 = vunpack.c.l.b16 %v800
    %v807 = vpack.c.b16 %v806, %v805
    %v816 = vunpack.c.l.b16 %v744
    %v817 = vunpack.c.l.b16 %v745
    %v818 = vunpack.c.l.b16 %v746
    %v819 = vunpack.c.l.b16 %v747
    %v820 = vunpack.c.l.b16 %v748
    %v821 = vunpack.c.l.b16 %v749
    %v822 = vunpack.c.l.b16 %v750
    %v823 = vunpack.c.l.b16 %v751
    %v824 = vpack.c.b16 %v817, %v816
    %v825 = vpack.c.b16 %v819, %v818
    %v826 = vpack.c.b16 %v821, %v820
    %v827 = vpack.c.b16 %v823, %v822
    %v833 = vsel %vm211, %v807, 0
    %835 = vmatpush.bf16.msra.mxu0 0
    %836 = vmatpush.bf16.msra.mxu0 0
    %837 = vmatpush.bf16.msra.mxu0 0
    %838 = vmatpush.bf16.msra.mxu0 0
    %839 = vmatpush.bf16.msra.mxu0 %v827
    %840 = vmatpush.bf16.msra.mxu0 %v826
    %841 = vmatpush.bf16.msra.mxu0 %v825
    %842 = vmatpush.bf16.msra.mxu0 %v824
    %843 = vmatmul.bf16.gmra.mxu0 %v833
    %v844 = vpop.f32.mrf.mxu0
    %v845 = vadd.f32 0.0, %v844
    %v846 = vpop.f32.mrf.mxu0
    %v847 = vadd.f32 0.0, %v846
    %848 = vdwg.mxu0
    %v851 = vunpack.c.l.b16 %v801
    %v852 = vunpack.c.l.b16 %v802
    %v853 = vpack.c.b16 %v852, %v851
    %v862 = vunpack.c.l.b16 %v752
    %v863 = vunpack.c.l.b16 %v753
    %v864 = vunpack.c.l.b16 %v754
    %v865 = vunpack.c.l.b16 %v755
    %v866 = vunpack.c.l.b16 %v756
    %v867 = vunpack.c.l.b16 %v757
    %v868 = vunpack.c.l.b16 %v758
    %v869 = vunpack.c.l.b16 %v759
    %v870 = vpack.c.b16 %v863, %v862
    %v871 = vpack.c.b16 %v865, %v864
    %v872 = vpack.c.b16 %v867, %v866
    %v873 = vpack.c.b16 %v869, %v868
    %v879 = vsel %vm211, %v853, 0
    %881 = vmatpush.bf16.msra.mxu0 0
    %882 = vmatpush.bf16.msra.mxu0 0
    %883 = vmatpush.bf16.msra.mxu0 0
    %884 = vmatpush.bf16.msra.mxu0 0
    %885 = vmatpush.bf16.msra.mxu0 %v873
    %886 = vmatpush.bf16.msra.mxu0 %v872
    %887 = vmatpush.bf16.msra.mxu0 %v871
    %888 = vmatpush.bf16.msra.mxu0 %v870
    %889 = vmatmul.bf16.gmra.mxu0 %v879
    %v890 = vpop.f32.mrf.mxu0
    %v891 = vadd.f32 0.0, %v890
    %v892 = vpop.f32.mrf.mxu0
    %v893 = vadd.f32 0.0, %v892
    %894 = vdwg.mxu0
    %v895 = vpack.c.bf16 %v845, %v845
    %v896 = vpack.c.bf16 %v847, %v847
    %v897 = vpack.c.bf16 %v891, %v891
    %v898 = vpack.c.bf16 %v893, %v893
    %v899 = vld [vmem:[%s0] sm:$0xff]
    %v900 = vld [vmem:[%s0 + $0x8] sm:$0xff]
    %v901 = vld [vmem:[%s0 + $0x10] sm:$0xff]
    %v902 = vld [vmem:[%s0 + $0x18] sm:$0xff]
    %v903 = vld [vmem:[%s0 + $0x20] sm:$0xff]
    %v904 = vld [vmem:[%s0 + $0x28] sm:$0xff]
    %v905 = vld [vmem:[%s0 + $0x30] sm:$0xff]
    %v906 = vld [vmem:[%s0 + $0x38] sm:$0xff]
    %v907 = vld [vmem:[%s0 + $0x40] sm:$0xff]
    %v908 = vld [vmem:[%s0 + $0x48] sm:$0xff]
    %v909 = vld [vmem:[%s0 + $0x50] sm:$0xff]
    %v910 = vld [vmem:[%s0 + $0x58] sm:$0xff]
    %v911 = vld [vmem:[%s0 + $0x60] sm:$0xff]
    %v912 = vld [vmem:[%s0 + $0x68] sm:$0xff]
    %v913 = vld [vmem:[%s0 + $0x70] sm:$0xff]
    %v914 = vld [vmem:[%s0 + $0x78] sm:$0xff]
    %v915 = vld [vmem:[#allocation5] sm:$0x1]
    %v916 = vld [vmem:[#allocation7] sm:$0x1]
    %v917 = vld [vmem:[#allocation8] sm:$0xff]
    %v918 = vld [vmem:[%s6] sm:$0x1]
    %vm919 = vcmask 64512
    %v920 = vsel %vm919, %v899, 0.0
    %v921 = vsel %vm919, %v900, 0.0
    %v922 = vadd.f32 %v920, %v921
    %v923 = vsel %vm919, %v901, 0.0
    %v924 = vadd.f32 %v922, %v923
    %v925 = vsel %vm919, %v902, 0.0
    %v926 = vadd.f32 %v924, %v925
    %v927 = vsel %vm919, %v903, 0.0
    %v928 = vadd.f32 %v926, %v927
    %v929 = vsel %vm919, %v904, 0.0
    %v930 = vadd.f32 %v928, %v929
    %v931 = vsel %vm919, %v905, 0.0
    %v932 = vadd.f32 %v930, %v931
    %v933 = vsel %vm919, %v906, 0.0
    %v934 = vadd.f32 %v932, %v933
    %v935 = vsel %vm919, %v907, 0.0
    %v936 = vadd.f32 %v934, %v935
    %v937 = vsel %vm919, %v908, 0.0
    %v938 = vadd.f32 %v936, %v937
    %v939 = vsel %vm919, %v909, 0.0
    %v940 = vadd.f32 %v938, %v939
    %v941 = vsel %vm919, %v910, 0.0
    %v942 = vadd.f32 %v940, %v941
    %v943 = vsel %vm919, %v911, 0.0
    %v944 = vadd.f32 %v942, %v943
    %v945 = vsel %vm919, %v912, 0.0
    %v946 = vadd.f32 %v944, %v945
    %v947 = vsel %vm919, %v913, 0.0
    %v948 = vadd.f32 %v946, %v947
    %v949 = vsel %vm919, %v914, 0.0
    %v950 = vadd.f32 %v948, %v949
    %v951 = vrot.slane %v950, 4
    %v952 = vadd.f32 %v950, %v951
    %v953 = vrot.slane %v952, 2
    %v954 = vadd.f32 %v952, %v953
    %v955 = vrot.slane %v954, 1
    %v956 = vadd.f32 %v954, %v955
    %v957 = vrcp.pop 128.0
    %v958 = vmul.f32 128.0, %v957
    %v959 = vsub.f32 1.0, %v958
    %v960 = vmul.f32 %v957, %v959
    %v961 = vadd.f32 %v957, %v960
    %vm962 = vweird.f32 %v957
    %v963 = vsel %vm962, %v957, %v961
    %v964 = vmul.f32 %v956, %v963
    %v965 = vmul.f32 %v899, %v899
    %v966 = vmul.f32 %v900, %v900
    %v967 = vmul.f32 %v901, %v901
    %v968 = vmul.f32 %v902, %v902
    %v969 = vmul.f32 %v903, %v903
    %v970 = vmul.f32 %v904, %v904
    %v971 = vmul.f32 %v905, %v905
    %v972 = vmul.f32 %v906, %v906
    %v973 = vmul.f32 %v907, %v907
    %v974 = vmul.f32 %v908, %v908
    %v975 = vmul.f32 %v909, %v909
    %v976 = vmul.f32 %v910, %v910
    %v977 = vmul.f32 %v911, %v911
    %v978 = vmul.f32 %v912, %v912
    %v979 = vmul.f32 %v913, %v913
    %v980 = vmul.f32 %v914, %v914
    %v981 = vsel %vm919, %v965, 0.0
    %v982 = vsel %vm919, %v966, 0.0
    %v983 = vadd.f32 %v981, %v982
    %v984 = vsel %vm919, %v967, 0.0
    %v985 = vadd.f32 %v983, %v984
    %v986 = vsel %vm919, %v968, 0.0
    %v987 = vadd.f32 %v985, %v986
    %v988 = vsel %vm919, %v969, 0.0
    %v989 = vadd.f32 %v987, %v988
    %v990 = vsel %vm919, %v970, 0.0
    %v991 = vadd.f32 %v989, %v990
    %v992 = vsel %vm919, %v971, 0.0
    %v993 = vadd.f32 %v991, %v992
    %v994 = vsel %vm919, %v972, 0.0
    %v995 = vadd.f32 %v993, %v994
    %v996 = vsel %vm919, %v973, 0.0
    %v997 = vadd.f32 %v995, %v996
    %v998 = vsel %vm919, %v974, 0.0
    %v999 = vadd.f32 %v997, %v998
    %v1000 = vsel %vm919, %v975, 0.0
    %v1001 = vadd.f32 %v999, %v1000
    %v1002 = vsel %vm919, %v976, 0.0
    %v1003 = vadd.f32 %v1001, %v1002
    %v1004 = vsel %vm919, %v977, 0.0
    %v1005 = vadd.f32 %v1003, %v1004
    %v1006 = vsel %vm919, %v978, 0.0
    %v1007 = vadd.f32 %v1005, %v1006
    %v1008 = vsel %vm919, %v979, 0.0
    %v1009 = vadd.f32 %v1007, %v1008
    %v1010 = vsel %vm919, %v980, 0.0
    %v1011 = vadd.f32 %v1009, %v1010
    %v1012 = vrot.slane %v1011, 4
    %v1013 = vadd.f32 %v1011, %v1012
    %v1014 = vrot.slane %v1013, 2
    %v1015 = vadd.f32 %v1013, %v1014
    %v1016 = vrot.slane %v1015, 1
    %v1017 = vadd.f32 %v1015, %v1016
    %v1018 = vmul.f32 %v1017, %v963
    %v1019 = vmul.f32 %v964, %v964
    %v1020 = vsub.f32 %v1018, %v1019
    %v1021 = vmax.f32 %v1020, 0.0
    %v1022 = vadd.f32 %v1021, 1e-05
    %v1023 = vrsqrt.pop %v1022
    %v1024 = vmul.f32 %v1023, %v1022
    %v1025 = vmul.f32 %v1024, %v1023
    %v1026 = vmul.f32 0.5, %v1025
    %v1027 = vsub.f32 1.5, %v1026
    %v1028 = vmul.f32 %v1023, %v1027
    %vm1029 = vweird.f32 %v1022
    %vm1030 = vweird.f32 %v1023
    %vm1031 = vmor %vm1029, %vm1030
    %v1032 = vsel %vm1031, %v1023, %v1028
    %v1033 = vmul.f32 %v915, %v1032
    %v1034 = vperm.slane %v1033, 0
    %v1035 = vlaneseq
    %v1036 = vshrl.u32 %v1035, 7
    %1038 = vset.pattern.permute.xlu0 %v1036
    %1039 = vperm.xlu0 %1038, %v1034
    %v1040 = vpop.permute.xlu0 %1039
    %v1041 = vmul.f32 %v917, %v1040
    %v1042 = vmul.f32 %v964, %v1033
    %v1043 = vsub.f32 %v916, %v1042
    %v1045 = vsel %vm919, %v1043, 0
    %1047 = vmatpush.msra.mxu0 0.0
    %1048 = vmatpush.msra.mxu0 0.0
    %1049 = vmatpush.msra.mxu0 0.0
    %1050 = vmatpush.msra.mxu0 0.0
    %1051 = vmatpush.msra.mxu0 0.0
    %1052 = vmatpush.msra.mxu0 0.0
    %1053 = vmatpush.msra.mxu0 0.0
    %1054 = vmatpush.msra.mxu0 0.0
    %1055 = vmatpush.msra.mxu0 0.0
    %1056 = vmatpush.msra.mxu0 0.0
    %1057 = vmatpush.msra.mxu0 0.0
    %1058 = vmatpush.msra.mxu0 0.0
    %1059 = vmatpush.msra.mxu0 0.0
    %1060 = vmatpush.msra.mxu0 0.0
    %1061 = vmatpush.msra.mxu0 0.0
    %1062 = vmatpush.msra.mxu0 %v917
    %1063 = vmatmul.f32.gmra.mxu0 %v1045
    %v1064 = vpop.f32.mrf.mxu0
    %v1065 = vadd.f32 %v918, %v1064
    %1066 = vdwg.mxu0
    %v1067 = vpack.c.bf16 %v900, %v899
    %v1068 = vpack.c.bf16 %v902, %v901
    %v1069 = vpack.c.bf16 %v904, %v903
    %v1070 = vpack.c.bf16 %v906, %v905
    %v1071 = vpack.c.bf16 %v908, %v907
    %v1072 = vpack.c.bf16 %v910, %v909
    %v1073 = vpack.c.bf16 %v912, %v911
    %v1074 = vpack.c.bf16 %v914, %v913
    %v1075 = vpack.c.bf16 %v1041, %v1041
    %v1076 = vperm.slane %v1065, 0
    %v1078 = vsel %vm919, %v1067, 0
    %v1081 = vsel %vm919, %v1068, 0
    %v1084 = vsel %vm919, %v1069, 0
    %v1087 = vsel %vm919, %v1070, 0
    %v1090 = vsel %vm919, %v1071, 0
    %v1093 = vsel %vm919, %v1072, 0
    %v1096 = vsel %vm919, %v1073, 0
    %v1099 = vsel %vm919, %v1074, 0
    %vm1101 = vcmask 1043456
    %v1103 = vsel %vm1101, %v1075, 0
    %1105 = vmatpush.bf16.msra.mxu0 0
    %1106 = vmatpush.bf16.msra.mxu0 0
    %1107 = vmatpush.bf16.msra.mxu0 0
    %1108 = vmatpush.bf16.msra.mxu0 0
    %1109 = vmatpush.bf16.msra.mxu0 0
    %1110 = vmatpush.bf16.msra.mxu0 0
    %1111 = vmatpush.bf16.msra.mxu0 0
    %1112 = vmatpush.bf16.msra.mxu0 %v1103
    %1113 = vmatmul.bf16.gmra.mxu0 %v1078
    %v1114 = vpop.f32.mrf.mxu0
    %v1115 = vadd.f32 %v1076, %v1114
    %v1116 = vpop.f32.mrf.mxu0
    %v1117 = vadd.f32 %v1076, %v1116
    %1118 = vmatmul.bf16.gmra.mxu0 %v1081
    %v1119 = vpop.f32.mrf.mxu0
    %v1120 = vadd.f32 %v1076, %v1119
    %v1121 = vpop.f32.mrf.mxu0
    %v1122 = vadd.f32 %v1076, %v1121
    %1123 = vmatmul.bf16.gmra.mxu0 %v1084
    %v1124 = vpop.f32.mrf.mxu0
    %v1125 = vadd.f32 %v1076, %v1124
    %v1126 = vpop.f32.mrf.mxu0
    %v1127 = vadd.f32 %v1076, %v1126
    %1128 = vmatmul.bf16.gmra.mxu0 %v1087
    %v1129 = vpop.f32.mrf.mxu0
    %v1130 = vadd.f32 %v1076, %v1129
    %v1131 = vpop.f32.mrf.mxu0
    %v1132 = vadd.f32 %v1076, %v1131
    %1133 = vmatmul.bf16.gmra.mxu0 %v1090
    %v1134 = vpop.f32.mrf.mxu0
    %v1135 = vadd.f32 %v1076, %v1134
    %v1136 = vpop.f32.mrf.mxu0
    %v1137 = vadd.f32 %v1076, %v1136
    %1138 = vmatmul.bf16.gmra.mxu0 %v1093
    %v1139 = vpop.f32.mrf.mxu0
    %v1140 = vadd.f32 %v1076, %v1139
    %v1141 = vpop.f32.mrf.mxu0
    %v1142 = vadd.f32 %v1076, %v1141
    %1143 = vmatmul.bf16.gmra.mxu0 %v1096
    %v1144 = vpop.f32.mrf.mxu0
    %v1145 = vadd.f32 %v1076, %v1144
    %v1146 = vpop.f32.mrf.mxu0
    %v1147 = vadd.f32 %v1076, %v1146
    %1148 = vmatmul.bf16.gmra.mxu0 %v1099
    %v1149 = vpop.f32.mrf.mxu0
    %v1150 = vadd.f32 %v1076, %v1149
    %v1151 = vpop.f32.mrf.mxu0
    %v1152 = vadd.f32 %v1076, %v1151
    %1153 = vdwg.mxu0
    %v1154 = vpack.c.bf16 %v1115, %v1115
    %v1155 = vpack.c.bf16 %v1117, %v1117
    %v1156 = vpack.c.bf16 %v1120, %v1120
    %v1157 = vpack.c.bf16 %v1122, %v1122
    %v1158 = vpack.c.bf16 %v1125, %v1125
    %v1159 = vpack.c.bf16 %v1127, %v1127
    %v1160 = vpack.c.bf16 %v1130, %v1130
    %v1161 = vpack.c.bf16 %v1132, %v1132
    %v1162 = vpack.c.bf16 %v1135, %v1135
    %v1163 = vpack.c.bf16 %v1137, %v1137
    %v1164 = vpack.c.bf16 %v1140, %v1140
    %v1165 = vpack.c.bf16 %v1142, %v1142
    %v1166 = vpack.c.bf16 %v1145, %v1145
    %v1167 = vpack.c.bf16 %v1147, %v1147
    %v1168 = vpack.c.bf16 %v1150, %v1150
    %v1169 = vpack.c.bf16 %v1152, %v1152
    %v1178 = vunpack.c.l.b16 %v1154
    %v1179 = vunpack.c.l.b16 %v1155
    %v1180 = vunpack.c.l.b16 %v1156
    %v1181 = vunpack.c.l.b16 %v1157
    %v1182 = vunpack.c.l.b16 %v1158
    %v1183 = vunpack.c.l.b16 %v1159
    %v1184 = vunpack.c.l.b16 %v1160
    %v1185 = vunpack.c.l.b16 %v1161
    %v1186 = vpack.c.b16 %v1179, %v1178
    %v1187 = vpack.c.b16 %v1181, %v1180
    %v1188 = vpack.c.b16 %v1183, %v1182
    %v1189 = vpack.c.b16 %v1185, %v1184
    %v1195 = vsel %vm211, %v824, 0
    %v1198 = vsel %vm211, %v825, 0
    %v1201 = vsel %vm211, %v826, 0
    %v1204 = vsel %vm211, %v827, 0
    %1206 = vmatpush.bf16.msra.mxu0 0
    %1207 = vmatpush.bf16.msra.mxu0 0
    %1208 = vmatpush.bf16.msra.mxu0 0
    %1209 = vmatpush.bf16.msra.mxu0 0
    %1210 = vmatpush.bf16.msra.mxu0 %v1189
    %1211 = vmatpush.bf16.msra.mxu0 %v1188
    %1212 = vmatpush.bf16.msra.mxu0 %v1187
    %1213 = vmatpush.bf16.msra.mxu0 %v1186
    %1214 = vmatmul.bf16.gmra.mxu0 %v1195
    %v1215 = vpop.f32.mrf.mxu0
    %v1216 = vadd.f32 0.0, %v1215
    %v1217 = vpop.f32.mrf.mxu0
    %v1218 = vadd.f32 0.0, %v1217
    %1219 = vmatmul.bf16.gmra.mxu0 %v1198
    %v1220 = vpop.f32.mrf.mxu0
    %v1221 = vadd.f32 0.0, %v1220
    %v1222 = vpop.f32.mrf.mxu0
    %v1223 = vadd.f32 0.0, %v1222
    %1224 = vmatmul.bf16.gmra.mxu0 %v1201
    %v1225 = vpop.f32.mrf.mxu0
    %v1226 = vadd.f32 0.0, %v1225
    %v1227 = vpop.f32.mrf.mxu0
    %v1228 = vadd.f32 0.0, %v1227
    %1229 = vmatmul.bf16.gmra.mxu0 %v1204
    %v1230 = vpop.f32.mrf.mxu0
    %v1231 = vadd.f32 0.0, %v1230
    %v1232 = vpop.f32.mrf.mxu0
    %v1233 = vadd.f32 0.0, %v1232
    %1234 = vdwg.mxu0
    %v1243 = vunpack.c.l.b16 %v1162
    %v1244 = vunpack.c.l.b16 %v1163
    %v1245 = vunpack.c.l.b16 %v1164
    %v1246 = vunpack.c.l.b16 %v1165
    %v1247 = vunpack.c.l.b16 %v1166
    %v1248 = vunpack.c.l.b16 %v1167
    %v1249 = vunpack.c.l.b16 %v1168
    %v1250 = vunpack.c.l.b16 %v1169
    %v1251 = vpack.c.b16 %v1244, %v1243
    %v1252 = vpack.c.b16 %v1246, %v1245
    %v1253 = vpack.c.b16 %v1248, %v1247
    %v1254 = vpack.c.b16 %v1250, %v1249
    %v1260 = vsel %vm211, %v870, 0
    %v1263 = vsel %vm211, %v871, 0
    %v1266 = vsel %vm211, %v872, 0
    %v1269 = vsel %vm211, %v873, 0
    %1271 = vmatpush.bf16.msra.mxu0 0
    %1272 = vmatpush.bf16.msra.mxu0 0
    %1273 = vmatpush.bf16.msra.mxu0 0
    %1274 = vmatpush.bf16.msra.mxu0 0
    %1275 = vmatpush.bf16.msra.mxu0 %v1254
    %1276 = vmatpush.bf16.msra.mxu0 %v1253
    %1277 = vmatpush.bf16.msra.mxu0 %v1252
    %1278 = vmatpush.bf16.msra.mxu0 %v1251
    %1279 = vmatmul.bf16.gmra.mxu0 %v1260
    %v1280 = vpop.f32.mrf.mxu0
    %v1281 = vadd.f32 0.0, %v1280
    %v1282 = vpop.f32.mrf.mxu0
    %v1283 = vadd.f32 0.0, %v1282
    %1284 = vmatmul.bf16.gmra.mxu0 %v1263
    %v1285 = vpop.f32.mrf.mxu0
    %v1286 = vadd.f32 0.0, %v1285
    %v1287 = vpop.f32.mrf.mxu0
    %v1288 = vadd.f32 0.0, %v1287
    %1289 = vmatmul.bf16.gmra.mxu0 %v1266
    %v1290 = vpop.f32.mrf.mxu0
    %v1291 = vadd.f32 0.0, %v1290
    %v1292 = vpop.f32.mrf.mxu0
    %v1293 = vadd.f32 0.0, %v1292
    %1294 = vmatmul.bf16.gmra.mxu0 %v1269
    %v1295 = vpop.f32.mrf.mxu0
    %v1296 = vadd.f32 0.0, %v1295
    %v1297 = vpop.f32.mrf.mxu0
    %v1298 = vadd.f32 0.0, %v1297
    %1299 = vdwg.mxu0
    %vm1300 = vcmp.gt.f32.partialorder %v1216, 0.0
    %vm1301 = vcmp.gt.f32.partialorder %v1218, 0.0
    %vm1302 = vcmp.gt.f32.partialorder %v1221, 0.0
    %vm1303 = vcmp.gt.f32.partialorder %v1223, 0.0
    %vm1304 = vcmp.gt.f32.partialorder %v1226, 0.0
    %vm1305 = vcmp.gt.f32.partialorder %v1228, 0.0
    %vm1306 = vcmp.gt.f32.partialorder %v1231, 0.0
    %vm1307 = vcmp.gt.f32.partialorder %v1233, 0.0
    %vm1308 = vcmp.gt.f32.partialorder %v1281, 0.0
    %vm1309 = vcmp.gt.f32.partialorder %v1283, 0.0
    %vm1310 = vcmp.gt.f32.partialorder %v1286, 0.0
    %vm1311 = vcmp.gt.f32.partialorder %v1288, 0.0
    %vm1312 = vcmp.gt.f32.partialorder %v1291, 0.0
    %vm1313 = vcmp.gt.f32.partialorder %v1293, 0.0
    %vm1314 = vcmp.gt.f32.partialorder %v1296, 0.0
    %vm1315 = vcmp.gt.f32.partialorder %v1298, 0.0
    %v1316 = vmul.f32 %v1216, 0.01
    %v1317 = vmul.f32 %v1218, 0.01
    %v1318 = vmul.f32 %v1221, 0.01
    %v1319 = vmul.f32 %v1223, 0.01
    %v1320 = vmul.f32 %v1226, 0.01
    %v1321 = vmul.f32 %v1228, 0.01
    %v1322 = vmul.f32 %v1231, 0.01
    %v1323 = vmul.f32 %v1233, 0.01
    %v1324 = vmul.f32 %v1281, 0.01
    %v1325 = vmul.f32 %v1283, 0.01
    %v1326 = vmul.f32 %v1286, 0.01
    %v1327 = vmul.f32 %v1288, 0.01
    %v1328 = vmul.f32 %v1291, 0.01
    %v1329 = vmul.f32 %v1293, 0.01
    %v1330 = vmul.f32 %v1296, 0.01
    %v1331 = vmul.f32 %v1298, 0.01
    %v1332 = vsel %vm1300, %v1216, %v1316
    %v1333 = vsel %vm1301, %v1218, %v1317
    %v1334 = vsel %vm1302, %v1221, %v1318
    %v1335 = vsel %vm1303, %v1223, %v1319
    %v1336 = vsel %vm1304, %v1226, %v1320
    %v1337 = vsel %vm1305, %v1228, %v1321
    %v1338 = vsel %vm1306, %v1231, %v1322
    %v1339 = vsel %vm1307, %v1233, %v1323
    %v1340 = vsel %vm1308, %v1281, %v1324
    %v1341 = vsel %vm1309, %v1283, %v1325
    %v1342 = vsel %vm1310, %v1286, %v1326
    %v1343 = vsel %vm1311, %v1288, %v1327
    %v1344 = vsel %vm1312, %v1291, %v1328
    %v1345 = vsel %vm1313, %v1293, %v1329
    %v1346 = vsel %vm1314, %v1296, %v1330
    %v1347 = vsel %vm1315, %v1298, %v1331
    %v1348 = vld [vmem:[%s7] sm:$0x1]
    %v1349 = vld [vmem:[%s8] sm:$0x1]
    %v1350 = vld [vmem:[%s9] sm:$0xff]
    %v1351 = vld [vmem:[%s9 + $0x8] sm:$0xff]
    %v1352 = vld [vmem:[%s9 + $0x10] sm:$0xff]
    %v1353 = vld [vmem:[%s9 + $0x18] sm:$0xff]
    %v1354 = vld [vmem:[%s9 + $0x20] sm:$0xff]
    %v1355 = vld [vmem:[%s9 + $0x28] sm:$0xff]
    %v1356 = vld [vmem:[%s9 + $0x30] sm:$0xff]
    %v1357 = vld [vmem:[%s9 + $0x38] sm:$0xff]
    %v1358 = vld [vmem:[%s9 + $0x40] sm:$0xff]
    %v1359 = vld [vmem:[%s9 + $0x48] sm:$0xff]
    %v1360 = vld [vmem:[%s9 + $0x50] sm:$0xff]
    %v1361 = vld [vmem:[%s9 + $0x58] sm:$0xff]
    %v1362 = vld [vmem:[%s9 + $0x60] sm:$0xff]
    %v1363 = vld [vmem:[%s9 + $0x68] sm:$0xff]
    %v1364 = vld [vmem:[%s9 + $0x70] sm:$0xff]
    %v1365 = vld [vmem:[%s9 + $0x78] sm:$0xff]
    %v1366 = vld [vmem:[%s10] sm:$0x1]
    %v1367 = vadd.f32 %v1332, %v1333
    %v1368 = vadd.f32 %v1367, %v1334
    %v1369 = vadd.f32 %v1368, %v1335
    %v1370 = vadd.f32 %v1369, %v1336
    %v1371 = vadd.f32 %v1370, %v1337
    %v1372 = vadd.f32 %v1371, %v1338
    %v1373 = vadd.f32 %v1372, %v1339
    %v1374 = vadd.f32 %v1373, %v1340
    %v1375 = vadd.f32 %v1374, %v1341
    %v1376 = vadd.f32 %v1375, %v1342
    %v1377 = vadd.f32 %v1376, %v1343
    %v1378 = vadd.f32 %v1377, %v1344
    %v1379 = vadd.f32 %v1378, %v1345
    %v1380 = vadd.f32 %v1379, %v1346
    %v1381 = vadd.f32 %v1380, %v1347
    %v1382 = vrot.slane %v1381, 4
    %v1383 = vadd.f32 %v1381, %v1382
    %v1384 = vrot.slane %v1383, 2
    %v1385 = vadd.f32 %v1383, %v1384
    %v1386 = vrot.slane %v1385, 1
    %v1387 = vadd.f32 %v1385, %v1386
    %v1388 = vmul.f32 %v1387, %v963
    %v1389 = vmul.f32 %v1332, %v1332
    %v1390 = vmul.f32 %v1333, %v1333
    %v1391 = vmul.f32 %v1334, %v1334
    %v1392 = vmul.f32 %v1335, %v1335
    %v1393 = vmul.f32 %v1336, %v1336
    %v1394 = vmul.f32 %v1337, %v1337
    %v1395 = vmul.f32 %v1338, %v1338
    %v1396 = vmul.f32 %v1339, %v1339
    %v1397 = vmul.f32 %v1340, %v1340
    %v1398 = vmul.f32 %v1341, %v1341
    %v1399 = vmul.f32 %v1342, %v1342
    %v1400 = vmul.f32 %v1343, %v1343
    %v1401 = vmul.f32 %v1344, %v1344
    %v1402 = vmul.f32 %v1345, %v1345
    %v1403 = vmul.f32 %v1346, %v1346
    %v1404 = vmul.f32 %v1347, %v1347
    %v1405 = vadd.f32 %v1389, %v1390
    %v1406 = vadd.f32 %v1405, %v1391
    %v1407 = vadd.f32 %v1406, %v1392
    %v1408 = vadd.f32 %v1407, %v1393
    %v1409 = vadd.f32 %v1408, %v1394
    %v1410 = vadd.f32 %v1409, %v1395
    %v1411 = vadd.f32 %v1410, %v1396
    %v1412 = vadd.f32 %v1411, %v1397
    %v1413 = vadd.f32 %v1412, %v1398
    %v1414 = vadd.f32 %v1413, %v1399
    %v1415 = vadd.f32 %v1414, %v1400
    %v1416 = vadd.f32 %v1415, %v1401
    %v1417 = vadd.f32 %v1416, %v1402
    %v1418 = vadd.f32 %v1417, %v1403
    %v1419 = vadd.f32 %v1418, %v1404
    %v1420 = vrot.slane %v1419, 4
    %v1421 = vadd.f32 %v1419, %v1420
    %v1422 = vrot.slane %v1421, 2
    %v1423 = vadd.f32 %v1421, %v1422
    %v1424 = vrot.slane %v1423, 1
    %v1425 = vadd.f32 %v1423, %v1424
    %v1426 = vmul.f32 %v1425, %v963
    %v1427 = vmul.f32 %v1388, %v1388
    %v1428 = vsub.f32 %v1426, %v1427
    %v1429 = vmax.f32 %v1428, 0.0
    %v1430 = vadd.f32 %v1429, 1e-05
    %v1431 = vrsqrt.pop %v1430
    %v1432 = vmul.f32 %v1431, %v1430
    %v1433 = vmul.f32 %v1432, %v1431
    %v1434 = vmul.f32 0.5, %v1433
    %v1435 = vsub.f32 1.5, %v1434
    %v1436 = vmul.f32 %v1431, %v1435
    %vm1437 = vweird.f32 %v1430
    %vm1438 = vweird.f32 %v1431
    %vm1439 = vmor %vm1437, %vm1438
    %v1440 = vsel %vm1439, %v1431, %v1436
    %v1441 = vmul.f32 %v1348, %v1440
    %v1442 = vperm.slane %v1441, 0
    %v1443 = vlaneseq
    %v1444 = vshrl.u32 %v1443, 7
    %1446 = vset.pattern.permute.xlu0 %v1444
    %1447 = vperm.xlu0 %1446, %v1442
    %v1448 = vpop.permute.xlu0 %1447
    %v1449 = vlaneseq
    %v1450 = vshrl.u32 %v1449, 7
    %v1451 = vadd.s32 %v1450, 8
    %1452 = vset.pattern.permute.xlu0 %v1451
    %1453 = vperm.xlu0 %1452, %v1442
    %v1454 = vpop.permute.xlu0 %1453
    %v1455 = vlaneseq
    %v1456 = vshrl.u32 %v1455, 7
    %v1457 = vadd.s32 %v1456, 16
    %1458 = vset.pattern.permute.xlu0 %v1457
    %1459 = vperm.xlu0 %1458, %v1442
    %v1460 = vpop.permute.xlu0 %1459
    %v1461 = vlaneseq
    %v1462 = vshrl.u32 %v1461, 7
    %v1463 = vadd.s32 %v1462, 24
    %1464 = vset.pattern.permute.xlu0 %v1463
    %1465 = vperm.xlu0 %1464, %v1442
    %v1466 = vpop.permute.xlu0 %1465
    %v1467 = vlaneseq
    %v1468 = vshrl.u32 %v1467, 7
    %v1469 = vadd.s32 %v1468, 32
    %1470 = vset.pattern.permute.xlu0 %v1469
    %1471 = vperm.xlu0 %1470, %v1442
    %v1472 = vpop.permute.xlu0 %1471
    %v1473 = vlaneseq
    %v1474 = vshrl.u32 %v1473, 7
    %v1475 = vadd.s32 %v1474, 40
    %1476 = vset.pattern.permute.xlu0 %v1475
    %1477 = vperm.xlu0 %1476, %v1442
    %v1478 = vpop.permute.xlu0 %1477
    %v1479 = vlaneseq
    %v1480 = vshrl.u32 %v1479, 7
    %v1481 = vadd.s32 %v1480, 48
    %1482 = vset.pattern.permute.xlu0 %v1481
    %1483 = vperm.xlu0 %1482, %v1442
    %v1484 = vpop.permute.xlu0 %1483
    %v1485 = vlaneseq
    %v1486 = vshrl.u32 %v1485, 7
    %v1487 = vadd.s32 %v1486, 56
    %1488 = vset.pattern.permute.xlu0 %v1487
    %1489 = vperm.xlu0 %1488, %v1442
    %v1490 = vpop.permute.xlu0 %1489
    %v1491 = vlaneseq
    %v1492 = vshrl.u32 %v1491, 7
    %v1493 = vadd.s32 %v1492, 64
    %1494 = vset.pattern.permute.xlu0 %v1493
    %1495 = vperm.xlu0 %1494, %v1442
    %v1496 = vpop.permute.xlu0 %1495
    %v1497 = vlaneseq
    %v1498 = vshrl.u32 %v1497, 7
    %v1499 = vadd.s32 %v1498, 72
    %1500 = vset.pattern.permute.xlu0 %v1499
    %1501 = vperm.xlu0 %1500, %v1442
    %v1502 = vpop.permute.xlu0 %1501
    %v1503 = vlaneseq
    %v1504 = vshrl.u32 %v1503, 7
    %v1505 = vadd.s32 %v1504, 80
    %1506 = vset.pattern.permute.xlu0 %v1505
    %1507 = vperm.xlu0 %1506, %v1442
    %v1508 = vpop.permute.xlu0 %1507
    %v1509 = vlaneseq
    %v1510 = vshrl.u32 %v1509, 7
    %v1511 = vadd.s32 %v1510, 88
    %1512 = vset.pattern.permute.xlu0 %v1511
    %1513 = vperm.xlu0 %1512, %v1442
    %v1514 = vpop.permute.xlu0 %1513
    %v1515 = vlaneseq
    %v1516 = vshrl.u32 %v1515, 7
    %v1517 = vadd.s32 %v1516, 96
    %1518 = vset.pattern.permute.xlu0 %v1517
    %1519 = vperm.xlu0 %1518, %v1442
    %v1520 = vpop.permute.xlu0 %1519
    %v1521 = vlaneseq
    %v1522 = vshrl.u32 %v1521, 7
    %v1523 = vadd.s32 %v1522, 104
    %1524 = vset.pattern.permute.xlu0 %v1523
    %1525 = vperm.xlu0 %1524, %v1442
    %v1526 = vpop.permute.xlu0 %1525
    %v1527 = vlaneseq
    %v1528 = vshrl.u32 %v1527, 7
    %v1529 = vadd.s32 %v1528, 112
    %1530 = vset.pattern.permute.xlu0 %v1529
    %1531 = vperm.xlu0 %1530, %v1442
    %v1532 = vpop.permute.xlu0 %1531
    %v1533 = vlaneseq
    %v1534 = vshrl.u32 %v1533, 7
    %v1535 = vadd.s32 %v1534, 120
    %1536 = vset.pattern.permute.xlu0 %v1535
    %1537 = vperm.xlu0 %1536, %v1442
    %v1538 = vpop.permute.xlu0 %1537
    %v1539 = vmul.f32 %v1350, %v1448
    %v1540 = vmul.f32 %v1351, %v1454
    %v1541 = vmul.f32 %v1352, %v1460
    %v1542 = vmul.f32 %v1353, %v1466
    %v1543 = vmul.f32 %v1354, %v1472
    %v1544 = vmul.f32 %v1355, %v1478
    %v1545 = vmul.f32 %v1356, %v1484
    %v1546 = vmul.f32 %v1357, %v1490
    %v1547 = vmul.f32 %v1358, %v1496
    %v1548 = vmul.f32 %v1359, %v1502
    %v1549 = vmul.f32 %v1360, %v1508
    %v1550 = vmul.f32 %v1361, %v1514
    %v1551 = vmul.f32 %v1362, %v1520
    %v1552 = vmul.f32 %v1363, %v1526
    %v1553 = vmul.f32 %v1364, %v1532
    %v1554 = vmul.f32 %v1365, %v1538
    %v1555 = vmul.f32 %v1388, %v1441
    %v1556 = vsub.f32 %v1349, %v1555
    %1557 = vmatpush.msra.mxu0 %v1365
    %1558 = vmatpush.msra.mxu0 %v1364
    %1559 = vmatpush.msra.mxu0 %v1363
    %1560 = vmatpush.msra.mxu0 %v1362
    %1561 = vmatpush.msra.mxu0 %v1361
    %1562 = vmatpush.msra.mxu0 %v1360
    %1563 = vmatpush.msra.mxu0 %v1359
    %1564 = vmatpush.msra.mxu0 %v1358
    %1565 = vmatpush.msra.mxu0 %v1357
    %1566 = vmatpush.msra.mxu0 %v1356
    %1567 = vmatpush.msra.mxu0 %v1355
    %1568 = vmatpush.msra.mxu0 %v1354
    %1569 = vmatpush.msra.mxu0 %v1353
    %1570 = vmatpush.msra.mxu0 %v1352
    %1571 = vmatpush.msra.mxu0 %v1351
    %1572 = vmatpush.msra.mxu0 %v1350
    %1573 = vmatmul.f32.gmra.mxu0 %v1556
    %v1574 = vpop.f32.mrf.mxu0
    %v1575 = vadd.f32 %v1366, %v1574
    %1576 = vdwg.mxu0
    %v1577 = vpack.c.bf16 %v1333, %v1332
    %v1578 = vpack.c.bf16 %v1335, %v1334
    %v1579 = vpack.c.bf16 %v1337, %v1336
    %v1580 = vpack.c.bf16 %v1339, %v1338
    %v1581 = vpack.c.bf16 %v1341, %v1340
    %v1582 = vpack.c.bf16 %v1343, %v1342
    %v1583 = vpack.c.bf16 %v1345, %v1344
    %v1584 = vpack.c.bf16 %v1347, %v1346
    %v1585 = vpack.c.bf16 %v1540, %v1539
    %v1586 = vpack.c.bf16 %v1542, %v1541
    %v1587 = vpack.c.bf16 %v1544, %v1543
    %v1588 = vpack.c.bf16 %v1546, %v1545
    %v1589 = vpack.c.bf16 %v1548, %v1547
    %v1590 = vpack.c.bf16 %v1550, %v1549
    %v1591 = vpack.c.bf16 %v1552, %v1551
    %v1592 = vpack.c.bf16 %v1554, %v1553
    %v1593 = vperm.slane %v1575, 0
    %1594 = vmatpush.bf16.msra.mxu0 %v1592
    %1595 = vmatpush.bf16.msra.mxu0 %v1591
    %1596 = vmatpush.bf16.msra.mxu0 %v1590
    %1597 = vmatpush.bf16.msra.mxu0 %v1589
    %1598 = vmatpush.bf16.msra.mxu0 %v1588
    %1599 = vmatpush.bf16.msra.mxu0 %v1587
    %1600 = vmatpush.bf16.msra.mxu0 %v1586
    %1601 = vmatpush.bf16.msra.mxu0 %v1585
    %1602 = vmatmul.bf16.gmra.mxu0 %v1577
    %v1603 = vpop.f32.mrf.mxu0
    %v1604 = vadd.f32 %v1593, %v1603
    %v1605 = vpop.f32.mrf.mxu0
    %v1606 = vadd.f32 %v1593, %v1605
    %1607 = vmatmul.bf16.gmra.mxu0 %v1578
    %v1608 = vpop.f32.mrf.mxu0
    %v1609 = vadd.f32 %v1593, %v1608
    %v1610 = vpop.f32.mrf.mxu0
    %v1611 = vadd.f32 %v1593, %v1610
    %1612 = vmatmul.bf16.gmra.mxu0 %v1579
    %v1613 = vpop.f32.mrf.mxu0
    %v1614 = vadd.f32 %v1593, %v1613
    %v1615 = vpop.f32.mrf.mxu0
    %v1616 = vadd.f32 %v1593, %v1615
    %1617 = vmatmul.bf16.gmra.mxu0 %v1580
    %v1618 = vpop.f32.mrf.mxu0
    %v1619 = vadd.f32 %v1593, %v1618
    %v1620 = vpop.f32.mrf.mxu0
    %v1621 = vadd.f32 %v1593, %v1620
    %1622 = vmatmul.bf16.gmra.mxu0 %v1581
    %v1623 = vpop.f32.mrf.mxu0
    %v1624 = vadd.f32 %v1593, %v1623
    %v1625 = vpop.f32.mrf.mxu0
    %v1626 = vadd.f32 %v1593, %v1625
    %1627 = vmatmul.bf16.gmra.mxu0 %v1582
    %v1628 = vpop.f32.mrf.mxu0
    %v1629 = vadd.f32 %v1593, %v1628
    %v1630 = vpop.f32.mrf.mxu0
    %v1631 = vadd.f32 %v1593, %v1630
    %1632 = vmatmul.bf16.gmra.mxu0 %v1583
    %v1633 = vpop.f32.mrf.mxu0
    %v1634 = vadd.f32 %v1593, %v1633
    %v1635 = vpop.f32.mrf.mxu0
    %v1636 = vadd.f32 %v1593, %v1635
    %1637 = vmatmul.bf16.gmra.mxu0 %v1584
    %v1638 = vpop.f32.mrf.mxu0
    %v1639 = vadd.f32 %v1593, %v1638
    %v1640 = vpop.f32.mrf.mxu0
    %v1641 = vadd.f32 %v1593, %v1640
    %1642 = vdwg.mxu0
    %v1643 = vpack.c.bf16 %v1604, %v1604
    %v1644 = vpack.c.bf16 %v1606, %v1606
    %v1645 = vpack.c.bf16 %v1609, %v1609
    %v1646 = vpack.c.bf16 %v1611, %v1611
    %v1647 = vpack.c.bf16 %v1614, %v1614
    %v1648 = vpack.c.bf16 %v1616, %v1616
    %v1649 = vpack.c.bf16 %v1619, %v1619
    %v1650 = vpack.c.bf16 %v1621, %v1621
    %v1651 = vpack.c.bf16 %v1624, %v1624
    %v1652 = vpack.c.bf16 %v1626, %v1626
    %v1653 = vpack.c.bf16 %v1629, %v1629
    %v1654 = vpack.c.bf16 %v1631, %v1631
    %v1655 = vpack.c.bf16 %v1634, %v1634
    %v1656 = vpack.c.bf16 %v1636, %v1636
    %v1657 = vpack.c.bf16 %v1639, %v1639
    %v1658 = vpack.c.bf16 %v1641, %v1641
    %v1667 = vunpack.c.l.b16 %v1643
    %v1668 = vunpack.c.l.b16 %v1644
    %v1669 = vunpack.c.l.b16 %v1645
    %v1670 = vunpack.c.l.b16 %v1646
    %v1671 = vunpack.c.l.b16 %v1647
    %v1672 = vunpack.c.l.b16 %v1648
    %v1673 = vunpack.c.l.b16 %v1649
    %v1674 = vunpack.c.l.b16 %v1650
    %v1675 = vpack.c.b16 %v1668, %v1667
    %v1676 = vpack.c.b16 %v1670, %v1669
    %v1677 = vpack.c.b16 %v1672, %v1671
    %v1678 = vpack.c.b16 %v1674, %v1673
    %1683 = vmatpush.bf16.msra.mxu0 0
    %1684 = vmatpush.bf16.msra.mxu0 0
    %1685 = vmatpush.bf16.msra.mxu0 0
    %1686 = vmatpush.bf16.msra.mxu0 0
    %1687 = vmatpush.bf16.msra.mxu0 %v1678
    %1688 = vmatpush.bf16.msra.mxu0 %v1677
    %1689 = vmatpush.bf16.msra.mxu0 %v1676
    %1690 = vmatpush.bf16.msra.mxu0 %v1675
    %1691 = vmatmul.bf16.gmra.mxu0 %v1195
    %v1692 = vpop.f32.mrf.mxu0
    %v1693 = vadd.f32 0.0, %v1692
    %v1694 = vpop.f32.mrf.mxu0
    %v1695 = vadd.f32 0.0, %v1694
    %1696 = vmatmul.bf16.gmra.mxu0 %v1198
    %v1697 = vpop.f32.mrf.mxu0
    %v1698 = vadd.f32 0.0, %v1697
    %v1699 = vpop.f32.mrf.mxu0
    %v1700 = vadd.f32 0.0, %v1699
    %1701 = vmatmul.bf16.gmra.mxu0 %v1201
    %v1702 = vpop.f32.mrf.mxu0
    %v1703 = vadd.f32 0.0, %v1702
    %v1704 = vpop.f32.mrf.mxu0
    %v1705 = vadd.f32 0.0, %v1704
    %1706 = vmatmul.bf16.gmra.mxu0 %v1204
    %v1707 = vpop.f32.mrf.mxu0
    %v1708 = vadd.f32 0.0, %v1707
    %v1709 = vpop.f32.mrf.mxu0
    %v1710 = vadd.f32 0.0, %v1709
    %1711 = vdwg.mxu0
    %v1720 = vunpack.c.l.b16 %v1651
    %v1721 = vunpack.c.l.b16 %v1652
    %v1722 = vunpack.c.l.b16 %v1653
    %v1723 = vunpack.c.l.b16 %v1654
    %v1724 = vunpack.c.l.b16 %v1655
    %v1725 = vunpack.c.l.b16 %v1656
    %v1726 = vunpack.c.l.b16 %v1657
    %v1727 = vunpack.c.l.b16 %v1658
    %v1728 = vpack.c.b16 %v1721, %v1720
    %v1729 = vpack.c.b16 %v1723, %v1722
    %v1730 = vpack.c.b16 %v1725, %v1724
    %v1731 = vpack.c.b16 %v1727, %v1726
    %1736 = vmatpush.bf16.msra.mxu0 0
    %1737 = vmatpush.bf16.msra.mxu0 0
    %1738 = vmatpush.bf16.msra.mxu0 0
    %1739 = vmatpush.bf16.msra.mxu0 0
    %1740 = vmatpush.bf16.msra.mxu0 %v1731
    %1741 = vmatpush.bf16.msra.mxu0 %v1730
    %1742 = vmatpush.bf16.msra.mxu0 %v1729
    %1743 = vmatpush.bf16.msra.mxu0 %v1728
    %1744 = vmatmul.bf16.gmra.mxu0 %v1260
    %v1745 = vpop.f32.mrf.mxu0
    %v1746 = vadd.f32 0.0, %v1745
    %v1747 = vpop.f32.mrf.mxu0
    %v1748 = vadd.f32 0.0, %v1747
    %1749 = vmatmul.bf16.gmra.mxu0 %v1263
    %v1750 = vpop.f32.mrf.mxu0
    %v1751 = vadd.f32 0.0, %v1750
    %v1752 = vpop.f32.mrf.mxu0
    %v1753 = vadd.f32 0.0, %v1752
    %1754 = vmatmul.bf16.gmra.mxu0 %v1266
    %v1755 = vpop.f32.mrf.mxu0
    %v1756 = vadd.f32 0.0, %v1755
    %v1757 = vpop.f32.mrf.mxu0
    %v1758 = vadd.f32 0.0, %v1757
    %1759 = vmatmul.bf16.gmra.mxu0 %v1269
    %v1760 = vpop.f32.mrf.mxu0
    %v1761 = vadd.f32 0.0, %v1760
    %v1762 = vpop.f32.mrf.mxu0
    %v1763 = vadd.f32 0.0, %v1762
    %1764 = vdwg.mxu0
    %vm1765 = vcmp.gt.f32.partialorder %v1693, 0.0
    %vm1766 = vcmp.gt.f32.partialorder %v1695, 0.0
    %vm1767 = vcmp.gt.f32.partialorder %v1698, 0.0
    %vm1768 = vcmp.gt.f32.partialorder %v1700, 0.0
    %vm1769 = vcmp.gt.f32.partialorder %v1703, 0.0
    %vm1770 = vcmp.gt.f32.partialorder %v1705, 0.0
    %vm1771 = vcmp.gt.f32.partialorder %v1708, 0.0
    %vm1772 = vcmp.gt.f32.partialorder %v1710, 0.0
    %vm1773 = vcmp.gt.f32.partialorder %v1746, 0.0
    %vm1774 = vcmp.gt.f32.partialorder %v1748, 0.0
    %vm1775 = vcmp.gt.f32.partialorder %v1751, 0.0
    %vm1776 = vcmp.gt.f32.partialorder %v1753, 0.0
    %vm1777 = vcmp.gt.f32.partialorder %v1756, 0.0
    %vm1778 = vcmp.gt.f32.partialorder %v1758, 0.0
    %vm1779 = vcmp.gt.f32.partialorder %v1761, 0.0
    %vm1780 = vcmp.gt.f32.partialorder %v1763, 0.0
    %v1781 = vmul.f32 %v1693, 0.01
    %v1782 = vmul.f32 %v1695, 0.01
    %v1783 = vmul.f32 %v1698, 0.01
    %v1784 = vmul.f32 %v1700, 0.01
    %v1785 = vmul.f32 %v1703, 0.01
    %v1786 = vmul.f32 %v1705, 0.01
    %v1787 = vmul.f32 %v1708, 0.01
    %v1788 = vmul.f32 %v1710, 0.01
    %v1789 = vmul.f32 %v1746, 0.01
    %v1790 = vmul.f32 %v1748, 0.01
    %v1791 = vmul.f32 %v1751, 0.01
    %v1792 = vmul.f32 %v1753, 0.01
    %v1793 = vmul.f32 %v1756, 0.01
    %v1794 = vmul.f32 %v1758, 0.01
    %v1795 = vmul.f32 %v1761, 0.01
    %v1796 = vmul.f32 %v1763, 0.01
    %v1797 = vsel %vm1765, %v1693, %v1781
    %v1798 = vsel %vm1766, %v1695, %v1782
    %v1799 = vsel %vm1767, %v1698, %v1783
    %v1800 = vsel %vm1768, %v1700, %v1784
    %v1801 = vsel %vm1769, %v1703, %v1785
    %v1802 = vsel %vm1770, %v1705, %v1786
    %v1803 = vsel %vm1771, %v1708, %v1787
    %v1804 = vsel %vm1772, %v1710, %v1788
    %v1805 = vsel %vm1773, %v1746, %v1789
    %v1806 = vsel %vm1774, %v1748, %v1790
    %v1807 = vsel %vm1775, %v1751, %v1791
    %v1808 = vsel %vm1776, %v1753, %v1792
    %v1809 = vsel %vm1777, %v1756, %v1793
    %v1810 = vsel %vm1778, %v1758, %v1794
    %v1811 = vsel %vm1779, %v1761, %v1795
    %v1812 = vsel %vm1780, %v1763, %v1796
    %v1813 = vld [vmem:[%s11] sm:$0x1]
    %v1814 = vld [vmem:[#allocation10] sm:$0x1]
    %v1815 = vld [vmem:[%s13] sm:$0xff]
    %v1816 = vld [vmem:[%s13 + $0x8] sm:$0xff]
    %v1817 = vld [vmem:[%s13 + $0x10] sm:$0xff]
    %v1818 = vld [vmem:[%s13 + $0x18] sm:$0xff]
    %v1819 = vld [vmem:[%s13 + $0x20] sm:$0xff]
    %v1820 = vld [vmem:[%s13 + $0x28] sm:$0xff]
    %v1821 = vld [vmem:[%s13 + $0x30] sm:$0xff]
    %v1822 = vld [vmem:[%s13 + $0x38] sm:$0xff]
    %v1823 = vld [vmem:[%s13 + $0x40] sm:$0xff]
    %v1824 = vld [vmem:[%s13 + $0x48] sm:$0xff]
    %v1825 = vld [vmem:[%s13 + $0x50] sm:$0xff]
    %v1826 = vld [vmem:[%s13 + $0x58] sm:$0xff]
    %v1827 = vld [vmem:[%s13 + $0x60] sm:$0xff]
    %v1828 = vld [vmem:[%s13 + $0x68] sm:$0xff]
    %v1829 = vld [vmem:[%s13 + $0x70] sm:$0xff]
    %v1830 = vld [vmem:[%s13 + $0x78] sm:$0xff]
    %v1831 = vld [vmem:[#allocation11] sm:$0x1]
    %v1832 = vadd.f32 %v1797, %v1798
    %v1833 = vadd.f32 %v1832, %v1799
    %v1834 = vadd.f32 %v1833, %v1800
    %v1835 = vadd.f32 %v1834, %v1801
    %v1836 = vadd.f32 %v1835, %v1802
    %v1837 = vadd.f32 %v1836, %v1803
    %v1838 = vadd.f32 %v1837, %v1804
    %v1839 = vadd.f32 %v1838, %v1805
    %v1840 = vadd.f32 %v1839, %v1806
    %v1841 = vadd.f32 %v1840, %v1807
    %v1842 = vadd.f32 %v1841, %v1808
    %v1843 = vadd.f32 %v1842, %v1809
    %v1844 = vadd.f32 %v1843, %v1810
    %v1845 = vadd.f32 %v1844, %v1811
    %v1846 = vadd.f32 %v1845, %v1812
    %v1847 = vrot.slane %v1846, 4
    %v1848 = vadd.f32 %v1846, %v1847
    %v1849 = vrot.slane %v1848, 2
    %v1850 = vadd.f32 %v1848, %v1849
    %v1851 = vrot.slane %v1850, 1
    %v1852 = vadd.f32 %v1850, %v1851
    %v1853 = vmul.f32 %v1852, %v963
    %v1854 = vmul.f32 %v1797, %v1797
    %v1855 = vmul.f32 %v1798, %v1798
    %v1856 = vmul.f32 %v1799, %v1799
    %v1857 = vmul.f32 %v1800, %v1800
    %v1858 = vmul.f32 %v1801, %v1801
    %v1859 = vmul.f32 %v1802, %v1802
    %v1860 = vmul.f32 %v1803, %v1803
    %v1861 = vmul.f32 %v1804, %v1804
    %v1862 = vmul.f32 %v1805, %v1805
    %v1863 = vmul.f32 %v1806, %v1806
    %v1864 = vmul.f32 %v1807, %v1807
    %v1865 = vmul.f32 %v1808, %v1808
    %v1866 = vmul.f32 %v1809, %v1809
    %v1867 = vmul.f32 %v1810, %v1810
    %v1868 = vmul.f32 %v1811, %v1811
    %v1869 = vmul.f32 %v1812, %v1812
    %v1870 = vadd.f32 %v1854, %v1855
    %v1871 = vadd.f32 %v1870, %v1856
    %v1872 = vadd.f32 %v1871, %v1857
    %v1873 = vadd.f32 %v1872, %v1858
    %v1874 = vadd.f32 %v1873, %v1859
    %v1875 = vadd.f32 %v1874, %v1860
    %v1876 = vadd.f32 %v1875, %v1861
    %v1877 = vadd.f32 %v1876, %v1862
    %v1878 = vadd.f32 %v1877, %v1863
    %v1879 = vadd.f32 %v1878, %v1864
    %v1880 = vadd.f32 %v1879, %v1865
    %v1881 = vadd.f32 %v1880, %v1866
    %v1882 = vadd.f32 %v1881, %v1867
    %v1883 = vadd.f32 %v1882, %v1868
    %v1884 = vadd.f32 %v1883, %v1869
    %v1885 = vrot.slane %v1884, 4
    %v1886 = vadd.f32 %v1884, %v1885
    %v1887 = vrot.slane %v1886, 2
    %v1888 = vadd.f32 %v1886, %v1887
    %v1889 = vrot.slane %v1888, 1
    %v1890 = vadd.f32 %v1888, %v1889
    %v1891 = vmul.f32 %v1890, %v963
    %v1892 = vmul.f32 %v1853, %v1853
    %v1893 = vsub.f32 %v1891, %v1892
    %v1894 = vmax.f32 %v1893, 0.0
    %v1895 = vadd.f32 %v1894, 1e-05
    %v1896 = vrsqrt.pop %v1895
    %v1897 = vmul.f32 %v1896, %v1895
    %v1898 = vmul.f32 %v1897, %v1896
    %v1899 = vmul.f32 0.5, %v1898
    %v1900 = vsub.f32 1.5, %v1899
    %v1901 = vmul.f32 %v1896, %v1900
    %vm1902 = vweird.f32 %v1895
    %vm1903 = vweird.f32 %v1896
    %vm1904 = vmor %vm1902, %vm1903
    %v1905 = vsel %vm1904, %v1896, %v1901
    %v1906 = vmul.f32 %v1813, %v1905
    %v1907 = vperm.slane %v1906, 0
    %v1908 = vlaneseq
    %v1909 = vshrl.u32 %v1908, 7
    %1911 = vset.pattern.permute.xlu0 %v1909
    %1912 = vperm.xlu0 %1911, %v1907
    %v1913 = vpop.permute.xlu0 %1912
    %v1914 = vlaneseq
    %v1915 = vshrl.u32 %v1914, 7
    %v1916 = vadd.s32 %v1915, 8
    %1917 = vset.pattern.permute.xlu0 %v1916
    %1918 = vperm.xlu0 %1917, %v1907
    %v1919 = vpop.permute.xlu0 %1918
    %v1920 = vlaneseq
    %v1921 = vshrl.u32 %v1920, 7
    %v1922 = vadd.s32 %v1921, 16
    %1923 = vset.pattern.permute.xlu0 %v1922
    %1924 = vperm.xlu0 %1923, %v1907
    %v1925 = vpop.permute.xlu0 %1924
    %v1926 = vlaneseq
    %v1927 = vshrl.u32 %v1926, 7
    %v1928 = vadd.s32 %v1927, 24
    %1929 = vset.pattern.permute.xlu0 %v1928
    %1930 = vperm.xlu0 %1929, %v1907
    %v1931 = vpop.permute.xlu0 %1930
    %v1932 = vlaneseq
    %v1933 = vshrl.u32 %v1932, 7
    %v1934 = vadd.s32 %v1933, 32
    %1935 = vset.pattern.permute.xlu0 %v1934
    %1936 = vperm.xlu0 %1935, %v1907
    %v1937 = vpop.permute.xlu0 %1936
    %v1938 = vlaneseq
    %v1939 = vshrl.u32 %v1938, 7
    %v1940 = vadd.s32 %v1939, 40
    %1941 = vset.pattern.permute.xlu0 %v1940
    %1942 = vperm.xlu0 %1941, %v1907
    %v1943 = vpop.permute.xlu0 %1942
    %v1944 = vlaneseq
    %v1945 = vshrl.u32 %v1944, 7
    %v1946 = vadd.s32 %v1945, 48
    %1947 = vset.pattern.permute.xlu0 %v1946
    %1948 = vperm.xlu0 %1947, %v1907
    %v1949 = vpop.permute.xlu0 %1948
    %v1950 = vlaneseq
    %v1951 = vshrl.u32 %v1950, 7
    %v1952 = vadd.s32 %v1951, 56
    %1953 = vset.pattern.permute.xlu0 %v1952
    %1954 = vperm.xlu0 %1953, %v1907
    %v1955 = vpop.permute.xlu0 %1954
    %v1956 = vlaneseq
    %v1957 = vshrl.u32 %v1956, 7
    %v1958 = vadd.s32 %v1957, 64
    %1959 = vset.pattern.permute.xlu0 %v1958
    %1960 = vperm.xlu0 %1959, %v1907
    %v1961 = vpop.permute.xlu0 %1960
    %v1962 = vlaneseq
    %v1963 = vshrl.u32 %v1962, 7
    %v1964 = vadd.s32 %v1963, 72
    %1965 = vset.pattern.permute.xlu0 %v1964
    %1966 = vperm.xlu0 %1965, %v1907
    %v1967 = vpop.permute.xlu0 %1966
    %v1968 = vlaneseq
    %v1969 = vshrl.u32 %v1968, 7
    %v1970 = vadd.s32 %v1969, 80
    %1971 = vset.pattern.permute.xlu0 %v1970
    %1972 = vperm.xlu0 %1971, %v1907
    %v1973 = vpop.permute.xlu0 %1972
    %v1974 = vlaneseq
    %v1975 = vshrl.u32 %v1974, 7
    %v1976 = vadd.s32 %v1975, 88
    %1977 = vset.pattern.permute.xlu0 %v1976
    %1978 = vperm.xlu0 %1977, %v1907
    %v1979 = vpop.permute.xlu0 %1978
    %v1980 = vlaneseq
    %v1981 = vshrl.u32 %v1980, 7
    %v1982 = vadd.s32 %v1981, 96
    %1983 = vset.pattern.permute.xlu0 %v1982
    %1984 = vperm.xlu0 %1983, %v1907
    %v1985 = vpop.permute.xlu0 %1984
    %v1986 = vlaneseq
    %v1987 = vshrl.u32 %v1986, 7
    %v1988 = vadd.s32 %v1987, 104
    %1989 = vset.pattern.permute.xlu0 %v1988
    %1990 = vperm.xlu0 %1989, %v1907
    %v1991 = vpop.permute.xlu0 %1990
    %v1992 = vlaneseq
    %v1993 = vshrl.u32 %v1992, 7
    %v1994 = vadd.s32 %v1993, 112
    %1995 = vset.pattern.permute.xlu0 %v1994
    %1996 = vperm.xlu0 %1995, %v1907
    %v1997 = vpop.permute.xlu0 %1996
    %v1998 = vlaneseq
    %v1999 = vshrl.u32 %v1998, 7
    %v2000 = vadd.s32 %v1999, 120
    %2001 = vset.pattern.permute.xlu0 %v2000
    %2002 = vperm.xlu0 %2001, %v1907
    %v2003 = vpop.permute.xlu0 %2002
    %v2004 = vmul.f32 %v1815, %v1913
    %v2005 = vmul.f32 %v1816, %v1919
    %v2006 = vmul.f32 %v1817, %v1925
    %v2007 = vmul.f32 %v1818, %v1931
    %v2008 = vmul.f32 %v1819, %v1937
    %v2009 = vmul.f32 %v1820, %v1943
    %v2010 = vmul.f32 %v1821, %v1949
    %v2011 = vmul.f32 %v1822, %v1955
    %v2012 = vmul.f32 %v1823, %v1961
    %v2013 = vmul.f32 %v1824, %v1967
    %v2014 = vmul.f32 %v1825, %v1973
    %v2015 = vmul.f32 %v1826, %v1979
    %v2016 = vmul.f32 %v1827, %v1985
    %v2017 = vmul.f32 %v1828, %v1991
    %v2018 = vmul.f32 %v1829, %v1997
    %v2019 = vmul.f32 %v1830, %v2003
    %v2020 = vmul.f32 %v1853, %v1906
    %v2021 = vsub.f32 %v1814, %v2020
    %2022 = vmatpush.msra.mxu0 %v1830
    %2023 = vmatpush.msra.mxu0 %v1829
    %2024 = vmatpush.msra.mxu0 %v1828
    %2025 = vmatpush.msra.mxu0 %v1827
    %2026 = vmatpush.msra.mxu0 %v1826
    %2027 = vmatpush.msra.mxu0 %v1825
    %2028 = vmatpush.msra.mxu0 %v1824
    %2029 = vmatpush.msra.mxu0 %v1823
    %2030 = vmatpush.msra.mxu0 %v1822
    %2031 = vmatpush.msra.mxu0 %v1821
    %2032 = vmatpush.msra.mxu0 %v1820
    %2033 = vmatpush.msra.mxu0 %v1819
    %2034 = vmatpush.msra.mxu0 %v1818
    %2035 = vmatpush.msra.mxu0 %v1817
    %2036 = vmatpush.msra.mxu0 %v1816
    %2037 = vmatpush.msra.mxu0 %v1815
    %2038 = vmatmul.f32.gmra.mxu0 %v2021
    %v2039 = vpop.f32.mrf.mxu0
    %v2040 = vadd.f32 %v1831, %v2039
    %2041 = vdwg.mxu0
    %v2042 = vpack.c.bf16 %v1798, %v1797
    %v2043 = vpack.c.bf16 %v1800, %v1799
    %v2044 = vpack.c.bf16 %v1802, %v1801
    %v2045 = vpack.c.bf16 %v1804, %v1803
    %v2046 = vpack.c.bf16 %v1806, %v1805
    %v2047 = vpack.c.bf16 %v1808, %v1807
    %v2048 = vpack.c.bf16 %v1810, %v1809
    %v2049 = vpack.c.bf16 %v1812, %v1811
    %v2050 = vpack.c.bf16 %v2005, %v2004
    %v2051 = vpack.c.bf16 %v2007, %v2006
    %v2052 = vpack.c.bf16 %v2009, %v2008
    %v2053 = vpack.c.bf16 %v2011, %v2010
    %v2054 = vpack.c.bf16 %v2013, %v2012
    %v2055 = vpack.c.bf16 %v2015, %v2014
    %v2056 = vpack.c.bf16 %v2017, %v2016
    %v2057 = vpack.c.bf16 %v2019, %v2018
    %v2058 = vperm.slane %v2040, 0
    %2059 = vmatpush.bf16.msra.mxu0 %v2057
    %2060 = vmatpush.bf16.msra.mxu0 %v2056
    %2061 = vmatpush.bf16.msra.mxu0 %v2055
    %2062 = vmatpush.bf16.msra.mxu0 %v2054
    %2063 = vmatpush.bf16.msra.mxu0 %v2053
    %2064 = vmatpush.bf16.msra.mxu0 %v2052
    %2065 = vmatpush.bf16.msra.mxu0 %v2051
    %2066 = vmatpush.bf16.msra.mxu0 %v2050
    %2067 = vmatmul.bf16.gmra.mxu0 %v2042
    %v2068 = vpop.f32.mrf.mxu0
    %v2069 = vadd.f32 %v2058, %v2068
    %v2070 = vpop.f32.mrf.mxu0
    %v2071 = vadd.f32 %v2058, %v2070
    %2072 = vmatmul.bf16.gmra.mxu0 %v2043
    %v2073 = vpop.f32.mrf.mxu0
    %v2074 = vadd.f32 %v2058, %v2073
    %v2075 = vpop.f32.mrf.mxu0
    %v2076 = vadd.f32 %v2058, %v2075
    %2077 = vmatmul.bf16.gmra.mxu0 %v2044
    %v2078 = vpop.f32.mrf.mxu0
    %v2079 = vadd.f32 %v2058, %v2078
    %v2080 = vpop.f32.mrf.mxu0
    %v2081 = vadd.f32 %v2058, %v2080
    %2082 = vmatmul.bf16.gmra.mxu0 %v2045
    %v2083 = vpop.f32.mrf.mxu0
    %v2084 = vadd.f32 %v2058, %v2083
    %v2085 = vpop.f32.mrf.mxu0
    %v2086 = vadd.f32 %v2058, %v2085
    %2087 = vmatmul.bf16.gmra.mxu0 %v2046
    %v2088 = vpop.f32.mrf.mxu0
    %v2089 = vadd.f32 %v2058, %v2088
    %v2090 = vpop.f32.mrf.mxu0
    %v2091 = vadd.f32 %v2058, %v2090
    %2092 = vmatmul.bf16.gmra.mxu0 %v2047
    %v2093 = vpop.f32.mrf.mxu0
    %v2094 = vadd.f32 %v2058, %v2093
    %v2095 = vpop.f32.mrf.mxu0
    %v2096 = vadd.f32 %v2058, %v2095
    %2097 = vmatmul.bf16.gmra.mxu0 %v2048
    %v2098 = vpop.f32.mrf.mxu0
    %v2099 = vadd.f32 %v2058, %v2098
    %v2100 = vpop.f32.mrf.mxu0
    %v2101 = vadd.f32 %v2058, %v2100
    %2102 = vmatmul.bf16.gmra.mxu0 %v2049
    %v2103 = vpop.f32.mrf.mxu0
    %v2104 = vadd.f32 %v2058, %v2103
    %v2105 = vpop.f32.mrf.mxu0
    %v2106 = vadd.f32 %v2058, %v2105
    %2107 = vdwg.mxu0
    %v2108 = vpack.c.bf16 %v2069, %v2069
    %v2109 = vpack.c.bf16 %v2071, %v2071
    %v2110 = vpack.c.bf16 %v2074, %v2074
    %v2111 = vpack.c.bf16 %v2076, %v2076
    %v2112 = vpack.c.bf16 %v2079, %v2079
    %v2113 = vpack.c.bf16 %v2081, %v2081
    %v2114 = vpack.c.bf16 %v2084, %v2084
    %v2115 = vpack.c.bf16 %v2086, %v2086
    %v2116 = vpack.c.bf16 %v2089, %v2089
    %v2117 = vpack.c.bf16 %v2091, %v2091
    %v2118 = vpack.c.bf16 %v2094, %v2094
    %v2119 = vpack.c.bf16 %v2096, %v2096
    %v2120 = vpack.c.bf16 %v2099, %v2099
    %v2121 = vpack.c.bf16 %v2101, %v2101
    %v2122 = vpack.c.bf16 %v2104, %v2104
    %v2123 = vpack.c.bf16 %v2106, %v2106
    %v2132 = vunpack.c.l.b16 %v2108
    %v2133 = vunpack.c.l.b16 %v2109
    %v2134 = vunpack.c.l.b16 %v2110
    %v2135 = vunpack.c.l.b16 %v2111
    %v2136 = vunpack.c.l.b16 %v2112
    %v2137 = vunpack.c.l.b16 %v2113
    %v2138 = vunpack.c.l.b16 %v2114
    %v2139 = vunpack.c.l.b16 %v2115
    %v2140 = vpack.c.b16 %v2133, %v2132
    %v2141 = vpack.c.b16 %v2135, %v2134
    %v2142 = vpack.c.b16 %v2137, %v2136
    %v2143 = vpack.c.b16 %v2139, %v2138
    %2148 = vmatpush.bf16.msra.mxu0 0
    %2149 = vmatpush.bf16.msra.mxu0 0
    %2150 = vmatpush.bf16.msra.mxu0 0
    %2151 = vmatpush.bf16.msra.mxu0 0
    %2152 = vmatpush.bf16.msra.mxu0 %v2143
    %2153 = vmatpush.bf16.msra.mxu0 %v2142
    %2154 = vmatpush.bf16.msra.mxu0 %v2141
    %2155 = vmatpush.bf16.msra.mxu0 %v2140
    %2156 = vmatmul.bf16.gmra.mxu0 %v1195
    %v2157 = vpop.f32.mrf.mxu0
    %v2158 = vadd.f32 0.0, %v2157
    %v2159 = vpop.f32.mrf.mxu0
    %v2160 = vadd.f32 0.0, %v2159
    %2161 = vmatmul.bf16.gmra.mxu0 %v1198
    %v2162 = vpop.f32.mrf.mxu0
    %v2163 = vadd.f32 0.0, %v2162
    %v2164 = vpop.f32.mrf.mxu0
    %v2165 = vadd.f32 0.0, %v2164
    %2166 = vmatmul.bf16.gmra.mxu0 %v1201
    %v2167 = vpop.f32.mrf.mxu0
    %v2168 = vadd.f32 0.0, %v2167
    %v2169 = vpop.f32.mrf.mxu0
    %v2170 = vadd.f32 0.0, %v2169
    %2171 = vmatmul.bf16.gmra.mxu0 %v1204
    %v2172 = vpop.f32.mrf.mxu0
    %v2173 = vadd.f32 0.0, %v2172
    %v2174 = vpop.f32.mrf.mxu0
    %v2175 = vadd.f32 0.0, %v2174
    %2176 = vdwg.mxu0
    %v2185 = vunpack.c.l.b16 %v2116
    %v2186 = vunpack.c.l.b16 %v2117
    %v2187 = vunpack.c.l.b16 %v2118
    %v2188 = vunpack.c.l.b16 %v2119
    %v2189 = vunpack.c.l.b16 %v2120
    %v2190 = vunpack.c.l.b16 %v2121
    %v2191 = vunpack.c.l.b16 %v2122
    %v2192 = vunpack.c.l.b16 %v2123
    %v2193 = vpack.c.b16 %v2186, %v2185
    %v2194 = vpack.c.b16 %v2188, %v2187
    %v2195 = vpack.c.b16 %v2190, %v2189
    %v2196 = vpack.c.b16 %v2192, %v2191
    %2201 = vmatpush.bf16.msra.mxu0 0
    %2202 = vmatpush.bf16.msra.mxu0 0
    %2203 = vmatpush.bf16.msra.mxu0 0
    %2204 = vmatpush.bf16.msra.mxu0 0
    %2205 = vmatpush.bf16.msra.mxu0 %v2196
    %2206 = vmatpush.bf16.msra.mxu0 %v2195
    %2207 = vmatpush.bf16.msra.mxu0 %v2194
    %2208 = vmatpush.bf16.msra.mxu0 %v2193
    %2209 = vmatmul.bf16.gmra.mxu0 %v1260
    %v2210 = vpop.f32.mrf.mxu0
    %v2211 = vadd.f32 0.0, %v2210
    %v2212 = vpop.f32.mrf.mxu0
    %v2213 = vadd.f32 0.0, %v2212
    %2214 = vmatmul.bf16.gmra.mxu0 %v1263
    %v2215 = vpop.f32.mrf.mxu0
    %v2216 = vadd.f32 0.0, %v2215
    %v2217 = vpop.f32.mrf.mxu0
    %v2218 = vadd.f32 0.0, %v2217
    %2219 = vmatmul.bf16.gmra.mxu0 %v1266
    %v2220 = vpop.f32.mrf.mxu0
    %v2221 = vadd.f32 0.0, %v2220
    %v2222 = vpop.f32.mrf.mxu0
    %v2223 = vadd.f32 0.0, %v2222
    %2224 = vmatmul.bf16.gmra.mxu0 %v1269
    %v2225 = vpop.f32.mrf.mxu0
    %v2226 = vadd.f32 0.0, %v2225
    %v2227 = vpop.f32.mrf.mxu0
    %v2228 = vadd.f32 0.0, %v2227
    %2229 = vdwg.mxu0
    %vm2230 = vcmp.gt.f32.partialorder %v2158, 0.0
    %vm2231 = vcmp.gt.f32.partialorder %v2160, 0.0
    %vm2232 = vcmp.gt.f32.partialorder %v2163, 0.0
    %vm2233 = vcmp.gt.f32.partialorder %v2165, 0.0
    %vm2234 = vcmp.gt.f32.partialorder %v2168, 0.0
    %vm2235 = vcmp.gt.f32.partialorder %v2170, 0.0
    %vm2236 = vcmp.gt.f32.partialorder %v2173, 0.0
    %vm2237 = vcmp.gt.f32.partialorder %v2175, 0.0
    %vm2238 = vcmp.gt.f32.partialorder %v2211, 0.0
    %vm2239 = vcmp.gt.f32.partialorder %v2213, 0.0
    %vm2240 = vcmp.gt.f32.partialorder %v2216, 0.0
    %vm2241 = vcmp.gt.f32.partialorder %v2218, 0.0
    %vm2242 = vcmp.gt.f32.partialorder %v2221, 0.0
    %vm2243 = vcmp.gt.f32.partialorder %v2223, 0.0
    %vm2244 = vcmp.gt.f32.partialorder %v2226, 0.0
    %vm2245 = vcmp.gt.f32.partialorder %v2228, 0.0
    %v2246 = vmul.f32 %v2158, 0.01
    %v2247 = vmul.f32 %v2160, 0.01
    %v2248 = vmul.f32 %v2163, 0.01
    %v2249 = vmul.f32 %v2165, 0.01
    %v2250 = vmul.f32 %v2168, 0.01
    %v2251 = vmul.f32 %v2170, 0.01
    %v2252 = vmul.f32 %v2173, 0.01
    %v2253 = vmul.f32 %v2175, 0.01
    %v2254 = vmul.f32 %v2211, 0.01
    %v2255 = vmul.f32 %v2213, 0.01
    %v2256 = vmul.f32 %v2216, 0.01
    %v2257 = vmul.f32 %v2218, 0.01
    %v2258 = vmul.f32 %v2221, 0.01
    %v2259 = vmul.f32 %v2223, 0.01
    %v2260 = vmul.f32 %v2226, 0.01
    %v2261 = vmul.f32 %v2228, 0.01
    %v2262 = vsel %vm2230, %v2158, %v2246
    %v2263 = vsel %vm2231, %v2160, %v2247
    %v2264 = vsel %vm2232, %v2163, %v2248
    %v2265 = vsel %vm2233, %v2165, %v2249
    %v2266 = vsel %vm2234, %v2168, %v2250
    %v2267 = vsel %vm2235, %v2170, %v2251
    %v2268 = vsel %vm2236, %v2173, %v2252
    %v2269 = vsel %vm2237, %v2175, %v2253
    %v2270 = vsel %vm2238, %v2211, %v2254
    %v2271 = vsel %vm2239, %v2213, %v2255
    %v2272 = vsel %vm2240, %v2216, %v2256
    %v2273 = vsel %vm2241, %v2218, %v2257
    %v2274 = vsel %vm2242, %v2221, %v2258
    %v2275 = vsel %vm2243, %v2223, %v2259
    %v2276 = vsel %vm2244, %v2226, %v2260
    %v2277 = vsel %vm2245, %v2228, %v2261
    %v2278 = vld [vmem:[%s15] sm:$0x1]
    %v2279 = vld [vmem:[%s16] sm:$0x1]
    %v2280 = vld [vmem:[%s17] sm:$0xff]
    %v2281 = vld [vmem:[%s17 + $0x8] sm:$0xff]
    %v2282 = vld [vmem:[%s17 + $0x10] sm:$0xff]
    %v2283 = vld [vmem:[%s17 + $0x18] sm:$0xff]
    %v2284 = vld [vmem:[%s17 + $0x20] sm:$0xff]
    %v2285 = vld [vmem:[%s17 + $0x28] sm:$0xff]
    %v2286 = vld [vmem:[%s17 + $0x30] sm:$0xff]
    %v2287 = vld [vmem:[%s17 + $0x38] sm:$0xff]
    %v2288 = vld [vmem:[%s17 + $0x40] sm:$0xff]
    %v2289 = vld [vmem:[%s17 + $0x48] sm:$0xff]
    %v2290 = vld [vmem:[%s17 + $0x50] sm:$0xff]
    %v2291 = vld [vmem:[%s17 + $0x58] sm:$0xff]
    %v2292 = vld [vmem:[%s17 + $0x60] sm:$0xff]
    %v2293 = vld [vmem:[%s17 + $0x68] sm:$0xff]
    %v2294 = vld [vmem:[%s17 + $0x70] sm:$0xff]
    %v2295 = vld [vmem:[%s17 + $0x78] sm:$0xff]
    %v2296 = vld [vmem:[%s18] sm:$0x1]
    %v2297 = vadd.f32 %v2262, %v2263
    %v2298 = vadd.f32 %v2297, %v2264
    %v2299 = vadd.f32 %v2298, %v2265
    %v2300 = vadd.f32 %v2299, %v2266
    %v2301 = vadd.f32 %v2300, %v2267
    %v2302 = vadd.f32 %v2301, %v2268
    %v2303 = vadd.f32 %v2302, %v2269
    %v2304 = vadd.f32 %v2303, %v2270
    %v2305 = vadd.f32 %v2304, %v2271
    %v2306 = vadd.f32 %v2305, %v2272
    %v2307 = vadd.f32 %v2306, %v2273
    %v2308 = vadd.f32 %v2307, %v2274
    %v2309 = vadd.f32 %v2308, %v2275
    %v2310 = vadd.f32 %v2309, %v2276
    %v2311 = vadd.f32 %v2310, %v2277
    %v2312 = vrot.slane %v2311, 4
    %v2313 = vadd.f32 %v2311, %v2312
    %v2314 = vrot.slane %v2313, 2
    %v2315 = vadd.f32 %v2313, %v2314
    %v2316 = vrot.slane %v2315, 1
    %v2317 = vadd.f32 %v2315, %v2316
    %v2318 = vmul.f32 %v2317, %v963
    %v2319 = vmul.f32 %v2262, %v2262
    %v2320 = vmul.f32 %v2263, %v2263
    %v2321 = vmul.f32 %v2264, %v2264
    %v2322 = vmul.f32 %v2265, %v2265
    %v2323 = vmul.f32 %v2266, %v2266
    %v2324 = vmul.f32 %v2267, %v2267
    %v2325 = vmul.f32 %v2268, %v2268
    %v2326 = vmul.f32 %v2269, %v2269
    %v2327 = vmul.f32 %v2270, %v2270
    %v2328 = vmul.f32 %v2271, %v2271
    %v2329 = vmul.f32 %v2272, %v2272
    %v2330 = vmul.f32 %v2273, %v2273
    %v2331 = vmul.f32 %v2274, %v2274
    %v2332 = vmul.f32 %v2275, %v2275
    %v2333 = vmul.f32 %v2276, %v2276
    %v2334 = vmul.f32 %v2277, %v2277
    %v2335 = vadd.f32 %v2319, %v2320
    %v2336 = vadd.f32 %v2335, %v2321
    %v2337 = vadd.f32 %v2336, %v2322
    %v2338 = vadd.f32 %v2337, %v2323
    %v2339 = vadd.f32 %v2338, %v2324
    %v2340 = vadd.f32 %v2339, %v2325
    %v2341 = vadd.f32 %v2340, %v2326
    %v2342 = vadd.f32 %v2341, %v2327
    %v2343 = vadd.f32 %v2342, %v2328
    %v2344 = vadd.f32 %v2343, %v2329
    %v2345 = vadd.f32 %v2344, %v2330
    %v2346 = vadd.f32 %v2345, %v2331
    %v2347 = vadd.f32 %v2346, %v2332
    %v2348 = vadd.f32 %v2347, %v2333
    %v2349 = vadd.f32 %v2348, %v2334
    %v2350 = vrot.slane %v2349, 4
    %v2351 = vadd.f32 %v2349, %v2350
    %v2352 = vrot.slane %v2351, 2
    %v2353 = vadd.f32 %v2351, %v2352
    %v2354 = vrot.slane %v2353, 1
    %v2355 = vadd.f32 %v2353, %v2354
    %v2356 = vmul.f32 %v2355, %v963
    %v2357 = vmul.f32 %v2318, %v2318
    %v2358 = vsub.f32 %v2356, %v2357
    %v2359 = vmax.f32 %v2358, 0.0
    %v2360 = vadd.f32 %v2359, 1e-05
    %v2361 = vrsqrt.pop %v2360
    %v2362 = vmul.f32 %v2361, %v2360
    %v2363 = vmul.f32 %v2362, %v2361
    %v2364 = vmul.f32 0.5, %v2363
    %v2365 = vsub.f32 1.5, %v2364
    %v2366 = vmul.f32 %v2361, %v2365
    %vm2367 = vweird.f32 %v2360
    %vm2368 = vweird.f32 %v2361
    %vm2369 = vmor %vm2367, %vm2368
    %v2370 = vsel %vm2369, %v2361, %v2366
    %v2371 = vmul.f32 %v2278, %v2370
    %v2372 = vperm.slane %v2371, 0
    %v2373 = vlaneseq
    %v2374 = vshrl.u32 %v2373, 7
    %2376 = vset.pattern.permute.xlu0 %v2374
    %2377 = vperm.xlu0 %2376, %v2372
    %v2378 = vpop.permute.xlu0 %2377
    %v2379 = vlaneseq
    %v2380 = vshrl.u32 %v2379, 7
    %v2381 = vadd.s32 %v2380, 8
    %2382 = vset.pattern.permute.xlu0 %v2381
    %2383 = vperm.xlu0 %2382, %v2372
    %v2384 = vpop.permute.xlu0 %2383
    %v2385 = vlaneseq
    %v2386 = vshrl.u32 %v2385, 7
    %v2387 = vadd.s32 %v2386, 16
    %2388 = vset.pattern.permute.xlu0 %v2387
    %2389 = vperm.xlu0 %2388, %v2372
    %v2390 = vpop.permute.xlu0 %2389
    %v2391 = vlaneseq
    %v2392 = vshrl.u32 %v2391, 7
    %v2393 = vadd.s32 %v2392, 24
    %2394 = vset.pattern.permute.xlu0 %v2393
    %2395 = vperm.xlu0 %2394, %v2372
    %v2396 = vpop.permute.xlu0 %2395
    %v2397 = vlaneseq
    %v2398 = vshrl.u32 %v2397, 7
    %v2399 = vadd.s32 %v2398, 32
    %2400 = vset.pattern.permute.xlu0 %v2399
    %2401 = vperm.xlu0 %2400, %v2372
    %v2402 = vpop.permute.xlu0 %2401
    %v2403 = vlaneseq
    %v2404 = vshrl.u32 %v2403, 7
    %v2405 = vadd.s32 %v2404, 40
    %2406 = vset.pattern.permute.xlu0 %v2405
    %2407 = vperm.xlu0 %2406, %v2372
    %v2408 = vpop.permute.xlu0 %2407
    %v2409 = vlaneseq
    %v2410 = vshrl.u32 %v2409, 7
    %v2411 = vadd.s32 %v2410, 48
    %2412 = vset.pattern.permute.xlu0 %v2411
    %2413 = vperm.xlu0 %2412, %v2372
    %v2414 = vpop.permute.xlu0 %2413
    %v2415 = vlaneseq
    %v2416 = vshrl.u32 %v2415, 7
    %v2417 = vadd.s32 %v2416, 56
    %2418 = vset.pattern.permute.xlu0 %v2417
    %2419 = vperm.xlu0 %2418, %v2372
    %v2420 = vpop.permute.xlu0 %2419
    %v2421 = vlaneseq
    %v2422 = vshrl.u32 %v2421, 7
    %v2423 = vadd.s32 %v2422, 64
    %2424 = vset.pattern.permute.xlu0 %v2423
    %2425 = vperm.xlu0 %2424, %v2372
    %v2426 = vpop.permute.xlu0 %2425
    %v2427 = vlaneseq
    %v2428 = vshrl.u32 %v2427, 7
    %v2429 = vadd.s32 %v2428, 72
    %2430 = vset.pattern.permute.xlu0 %v2429
    %2431 = vperm.xlu0 %2430, %v2372
    %v2432 = vpop.permute.xlu0 %2431
    %v2433 = vlaneseq
    %v2434 = vshrl.u32 %v2433, 7
    %v2435 = vadd.s32 %v2434, 80
    %2436 = vset.pattern.permute.xlu0 %v2435
    %2437 = vperm.xlu0 %2436, %v2372
    %v2438 = vpop.permute.xlu0 %2437
    %v2439 = vlaneseq
    %v2440 = vshrl.u32 %v2439, 7
    %v2441 = vadd.s32 %v2440, 88
    %2442 = vset.pattern.permute.xlu0 %v2441
    %2443 = vperm.xlu0 %2442, %v2372
    %v2444 = vpop.permute.xlu0 %2443
    %v2445 = vlaneseq
    %v2446 = vshrl.u32 %v2445, 7
    %v2447 = vadd.s32 %v2446, 96
    %2448 = vset.pattern.permute.xlu0 %v2447
    %2449 = vperm.xlu0 %2448, %v2372
    %v2450 = vpop.permute.xlu0 %2449
    %v2451 = vlaneseq
    %v2452 = vshrl.u32 %v2451, 7
    %v2453 = vadd.s32 %v2452, 104
    %2454 = vset.pattern.permute.xlu0 %v2453
    %2455 = vperm.xlu0 %2454, %v2372
    %v2456 = vpop.permute.xlu0 %2455
    %v2457 = vlaneseq
    %v2458 = vshrl.u32 %v2457, 7
    %v2459 = vadd.s32 %v2458, 112
    %2460 = vset.pattern.permute.xlu0 %v2459
    %2461 = vperm.xlu0 %2460, %v2372
    %v2462 = vpop.permute.xlu0 %2461
    %v2463 = vlaneseq
    %v2464 = vshrl.u32 %v2463, 7
    %v2465 = vadd.s32 %v2464, 120
    %2466 = vset.pattern.permute.xlu0 %v2465
    %2467 = vperm.xlu0 %2466, %v2372
    %v2468 = vpop.permute.xlu0 %2467
    %v2469 = vmul.f32 %v2280, %v2378
    %v2470 = vmul.f32 %v2281, %v2384
    %v2471 = vmul.f32 %v2282, %v2390
    %v2472 = vmul.f32 %v2283, %v2396
    %v2473 = vmul.f32 %v2284, %v2402
    %v2474 = vmul.f32 %v2285, %v2408
    %v2475 = vmul.f32 %v2286, %v2414
    %v2476 = vmul.f32 %v2287, %v2420
    %v2477 = vmul.f32 %v2288, %v2426
    %v2478 = vmul.f32 %v2289, %v2432
    %v2479 = vmul.f32 %v2290, %v2438
    %v2480 = vmul.f32 %v2291, %v2444
    %v2481 = vmul.f32 %v2292, %v2450
    %v2482 = vmul.f32 %v2293, %v2456
    %v2483 = vmul.f32 %v2294, %v2462
    %v2484 = vmul.f32 %v2295, %v2468
    %v2485 = vmul.f32 %v2318, %v2371
    %v2486 = vsub.f32 %v2279, %v2485
    %2487 = vmatpush.msra.mxu0 %v2295
    %2488 = vmatpush.msra.mxu0 %v2294
    %2489 = vmatpush.msra.mxu0 %v2293
    %2490 = vmatpush.msra.mxu0 %v2292
    %2491 = vmatpush.msra.mxu0 %v2291
    %2492 = vmatpush.msra.mxu0 %v2290
    %2493 = vmatpush.msra.mxu0 %v2289
    %2494 = vmatpush.msra.mxu0 %v2288
    %2495 = vmatpush.msra.mxu0 %v2287
    %2496 = vmatpush.msra.mxu0 %v2286
    %2497 = vmatpush.msra.mxu0 %v2285
    %2498 = vmatpush.msra.mxu0 %v2284
    %2499 = vmatpush.msra.mxu0 %v2283
    %2500 = vmatpush.msra.mxu0 %v2282
    %2501 = vmatpush.msra.mxu0 %v2281
    %2502 = vmatpush.msra.mxu0 %v2280
    %2503 = vmatmul.f32.gmra.mxu0 %v2486
    %v2504 = vpop.f32.mrf.mxu0
    %v2505 = vadd.f32 %v2296, %v2504
    %2506 = vdwg.mxu0
    %v2507 = vpack.c.bf16 %v2263, %v2262
    %v2508 = vpack.c.bf16 %v2265, %v2264
    %v2509 = vpack.c.bf16 %v2267, %v2266
    %v2510 = vpack.c.bf16 %v2269, %v2268
    %v2511 = vpack.c.bf16 %v2271, %v2270
    %v2512 = vpack.c.bf16 %v2273, %v2272
    %v2513 = vpack.c.bf16 %v2275, %v2274
    %v2514 = vpack.c.bf16 %v2277, %v2276
    %v2515 = vpack.c.bf16 %v2470, %v2469
    %v2516 = vpack.c.bf16 %v2472, %v2471
    %v2517 = vpack.c.bf16 %v2474, %v2473
    %v2518 = vpack.c.bf16 %v2476, %v2475
    %v2519 = vpack.c.bf16 %v2478, %v2477
    %v2520 = vpack.c.bf16 %v2480, %v2479
    %v2521 = vpack.c.bf16 %v2482, %v2481
    %v2522 = vpack.c.bf16 %v2484, %v2483
    %v2523 = vperm.slane %v2505, 0
    %2524 = vmatpush.bf16.msra.mxu0 %v2522
    %2525 = vmatpush.bf16.msra.mxu0 %v2521
    %2526 = vmatpush.bf16.msra.mxu0 %v2520
    %2527 = vmatpush.bf16.msra.mxu0 %v2519
    %2528 = vmatpush.bf16.msra.mxu0 %v2518
    %2529 = vmatpush.bf16.msra.mxu0 %v2517
    %2530 = vmatpush.bf16.msra.mxu0 %v2516
    %2531 = vmatpush.bf16.msra.mxu0 %v2515
    %2532 = vmatmul.bf16.gmra.mxu0 %v2507
    %v2533 = vpop.f32.mrf.mxu0
    %v2534 = vadd.f32 %v2523, %v2533
    %v2535 = vpop.f32.mrf.mxu0
    %v2536 = vadd.f32 %v2523, %v2535
    %2537 = vmatmul.bf16.gmra.mxu0 %v2508
    %v2538 = vpop.f32.mrf.mxu0
    %v2539 = vadd.f32 %v2523, %v2538
    %v2540 = vpop.f32.mrf.mxu0
    %v2541 = vadd.f32 %v2523, %v2540
    %2542 = vmatmul.bf16.gmra.mxu0 %v2509
    %v2543 = vpop.f32.mrf.mxu0
    %v2544 = vadd.f32 %v2523, %v2543
    %v2545 = vpop.f32.mrf.mxu0
    %v2546 = vadd.f32 %v2523, %v2545
    %2547 = vmatmul.bf16.gmra.mxu0 %v2510
    %v2548 = vpop.f32.mrf.mxu0
    %v2549 = vadd.f32 %v2523, %v2548
    %v2550 = vpop.f32.mrf.mxu0
    %v2551 = vadd.f32 %v2523, %v2550
    %2552 = vmatmul.bf16.gmra.mxu0 %v2511
    %v2553 = vpop.f32.mrf.mxu0
    %v2554 = vadd.f32 %v2523, %v2553
    %v2555 = vpop.f32.mrf.mxu0
    %v2556 = vadd.f32 %v2523, %v2555
    %2557 = vmatmul.bf16.gmra.mxu0 %v2512
    %v2558 = vpop.f32.mrf.mxu0
    %v2559 = vadd.f32 %v2523, %v2558
    %v2560 = vpop.f32.mrf.mxu0
    %v2561 = vadd.f32 %v2523, %v2560
    %2562 = vmatmul.bf16.gmra.mxu0 %v2513
    %v2563 = vpop.f32.mrf.mxu0
    %v2564 = vadd.f32 %v2523, %v2563
    %v2565 = vpop.f32.mrf.mxu0
    %v2566 = vadd.f32 %v2523, %v2565
    %2567 = vmatmul.bf16.gmra.mxu0 %v2514
    %v2568 = vpop.f32.mrf.mxu0
    %v2569 = vadd.f32 %v2523, %v2568
    %v2570 = vpop.f32.mrf.mxu0
    %v2571 = vadd.f32 %v2523, %v2570
    %2572 = vdwg.mxu0
    %v2573 = vpack.c.bf16 %v2534, %v2534
    %v2574 = vpack.c.bf16 %v2536, %v2536
    %v2575 = vpack.c.bf16 %v2539, %v2539
    %v2576 = vpack.c.bf16 %v2541, %v2541
    %v2577 = vpack.c.bf16 %v2544, %v2544
    %v2578 = vpack.c.bf16 %v2546, %v2546
    %v2579 = vpack.c.bf16 %v2549, %v2549
    %v2580 = vpack.c.bf16 %v2551, %v2551
    %v2581 = vpack.c.bf16 %v2554, %v2554
    %v2582 = vpack.c.bf16 %v2556, %v2556
    %v2583 = vpack.c.bf16 %v2559, %v2559
    %v2584 = vpack.c.bf16 %v2561, %v2561
    %v2585 = vpack.c.bf16 %v2564, %v2564
    %v2586 = vpack.c.bf16 %v2566, %v2566
    %v2587 = vpack.c.bf16 %v2569, %v2569
    %v2588 = vpack.c.bf16 %v2571, %v2571
    %v2591 = vunpack.c.l.b16 %v895
    %v2592 = vunpack.c.l.b16 %v896
    %v2593 = vpack.c.b16 %v2592, %v2591
    %v2602 = vunpack.c.l.b16 %v2573
    %v2603 = vunpack.c.l.b16 %v2574
    %v2604 = vunpack.c.l.b16 %v2575
    %v2605 = vunpack.c.l.b16 %v2576
    %v2606 = vunpack.c.l.b16 %v2577
    %v2607 = vunpack.c.l.b16 %v2578
    %v2608 = vunpack.c.l.b16 %v2579
    %v2609 = vunpack.c.l.b16 %v2580
    %v2610 = vpack.c.b16 %v2603, %v2602
    %v2611 = vpack.c.b16 %v2605, %v2604
    %v2612 = vpack.c.b16 %v2607, %v2606
    %v2613 = vpack.c.b16 %v2609, %v2608
    %v2619 = vsel %vm211, %v2593, 0
    %2621 = vmatpush.bf16.msra.mxu0 0
    %2622 = vmatpush.bf16.msra.mxu0 0
    %2623 = vmatpush.bf16.msra.mxu0 0
    %2624 = vmatpush.bf16.msra.mxu0 0
    %2625 = vmatpush.bf16.msra.mxu0 %v2613
    %2626 = vmatpush.bf16.msra.mxu0 %v2612
    %2627 = vmatpush.bf16.msra.mxu0 %v2611
    %2628 = vmatpush.bf16.msra.mxu0 %v2610
    %2629 = vmatmul.bf16.gmra.mxu0 %v2619
    %v2630 = vpop.f32.mrf.mxu0
    %v2631 = vadd.f32 0.0, %v2630
    %v2632 = vpop.f32.mrf.mxu0
    %v2633 = vadd.f32 0.0, %v2632
    %2634 = vdwg.mxu0
    %v2637 = vunpack.c.l.b16 %v897
    %v2638 = vunpack.c.l.b16 %v898
    %v2639 = vpack.c.b16 %v2638, %v2637
    %v2648 = vunpack.c.l.b16 %v2581
    %v2649 = vunpack.c.l.b16 %v2582
    %v2650 = vunpack.c.l.b16 %v2583
    %v2651 = vunpack.c.l.b16 %v2584
    %v2652 = vunpack.c.l.b16 %v2585
    %v2653 = vunpack.c.l.b16 %v2586
    %v2654 = vunpack.c.l.b16 %v2587
    %v2655 = vunpack.c.l.b16 %v2588
    %v2656 = vpack.c.b16 %v2649, %v2648
    %v2657 = vpack.c.b16 %v2651, %v2650
    %v2658 = vpack.c.b16 %v2653, %v2652
    %v2659 = vpack.c.b16 %v2655, %v2654
    %v2665 = vsel %vm211, %v2639, 0
    %2667 = vmatpush.bf16.msra.mxu0 0
    %2668 = vmatpush.bf16.msra.mxu0 0
    %2669 = vmatpush.bf16.msra.mxu0 0
    %2670 = vmatpush.bf16.msra.mxu0 0
    %2671 = vmatpush.bf16.msra.mxu0 %v2659
    %2672 = vmatpush.bf16.msra.mxu0 %v2658
    %2673 = vmatpush.bf16.msra.mxu0 %v2657
    %2674 = vmatpush.bf16.msra.mxu0 %v2656
    %2675 = vmatmul.bf16.gmra.mxu0 %v2665
    %v2676 = vpop.f32.mrf.mxu0
    %v2677 = vadd.f32 0.0, %v2676
    %v2678 = vpop.f32.mrf.mxu0
    %v2679 = vadd.f32 0.0, %v2678
    %2680 = vdwg.mxu0
    %vm2681 = vcmp.gt.f32.partialorder %v2631, 0.0
    %vm2682 = vcmp.gt.f32.partialorder %v2633, 0.0
    %vm2683 = vcmp.gt.f32.partialorder %v2677, 0.0
    %vm2684 = vcmp.gt.f32.partialorder %v2679, 0.0
    %v2685 = vmul.f32 %v2631, 0.01
    %v2686 = vmul.f32 %v2633, 0.01
    %v2687 = vmul.f32 %v2677, 0.01
    %v2688 = vmul.f32 %v2679, 0.01
    %v2689 = vsel %vm2681, %v2631, %v2685
    %v2690 = vsel %vm2682, %v2633, %v2686
    %v2691 = vsel %vm2683, %v2677, %v2687
    %v2692 = vsel %vm2684, %v2679, %v2688
    %v2693 = vld [vmem:[%s19] sm:$0xff]
    %v2694 = vld [vmem:[%s19 + $0x8] sm:$0xff]
    %v2695 = vld [vmem:[%s19 + $0x10] sm:$0xff]
    %v2696 = vld [vmem:[%s19 + $0x18] sm:$0xff]
    %v2697 = vld [vmem:[%s19 + $0x20] sm:$0xff]
    %v2698 = vld [vmem:[%s19 + $0x28] sm:$0xff]
    %v2699 = vld [vmem:[%s19 + $0x30] sm:$0xff]
    %v2700 = vld [vmem:[%s19 + $0x38] sm:$0xff]
    %v2701 = vld [vmem:[%s20] sm:$0xf]
    %v2702 = vsel %vm211, %v2689, 0.0
    %v2703 = vsel %vm211, %v2690, 0.0
    %v2704 = vadd.f32 %v2702, %v2703
    %v2705 = vrot.slane %v2704, 4
    %v2706 = vadd.f32 %v2704, %v2705
    %v2707 = vrot.slane %v2706, 2
    %v2708 = vadd.f32 %v2706, %v2707
    %v2709 = vrot.slane %v2708, 1
    %v2710 = vadd.f32 %v2708, %v2709
    %v2711 = vsel %vm211, %v2691, 0.0
    %v2712 = vsel %vm211, %v2692, 0.0
    %v2713 = vadd.f32 %v2711, %v2712
    %v2714 = vrot.slane %v2713, 4
    %v2715 = vadd.f32 %v2713, %v2714
    %v2716 = vrot.slane %v2715, 2
    %v2717 = vadd.f32 %v2715, %v2716
    %v2718 = vrot.slane %v2717, 1
    %v2719 = vadd.f32 %v2717, %v2718
    %v2720 = vrcp.pop 16.0
    %v2721 = vmul.f32 16.0, %v2720
    %v2722 = vsub.f32 1.0, %v2721
    %v2723 = vmul.f32 %v2720, %v2722
    %v2724 = vadd.f32 %v2720, %v2723
    %vm2725 = vweird.f32 %v2720
    %v2726 = vsel %vm2725, %v2720, %v2724
    %v2727 = vmul.f32 %v2710, %v2726
    %v2728 = vmul.f32 %v2719, %v2726
    %v2729 = vsel %vm211, %v2689, -inf
    %v2730 = vsel %vm211, %v2690, -inf
    %v2731 = vmax.f32 %v2729, %v2730
    %v2732 = vrot.slane %v2731, 4
    %v2733 = vmax.f32 %v2731, %v2732
    %v2734 = vrot.slane %v2733, 2
    %v2735 = vmax.f32 %v2733, %v2734
    %v2736 = vrot.slane %v2735, 1
    %v2737 = vmax.f32 %v2735, %v2736
    %v2738 = vsel %vm211, %v2691, -inf
    %v2739 = vsel %vm211, %v2692, -inf
    %v2740 = vmax.f32 %v2738, %v2739
    %v2741 = vrot.slane %v2740, 4
    %v2742 = vmax.f32 %v2740, %v2741
    %v2743 = vrot.slane %v2742, 2
    %v2744 = vmax.f32 %v2742, %v2743
    %v2745 = vrot.slane %v2744, 1
    %v2746 = vmax.f32 %v2744, %v2745
    %v2749 = vsel %vm651, %v2728, %v2727
    %v2750 = vsel %vm211, %v2749, 0
    %2752 = vmatpush.msra.mxu0 0.0
    %2753 = vmatpush.msra.mxu0 0.0
    %2754 = vmatpush.msra.mxu0 0.0
    %2755 = vmatpush.msra.mxu0 0.0
    %2756 = vmatpush.msra.mxu0 0.0
    %2757 = vmatpush.msra.mxu0 0.0
    %2758 = vmatpush.msra.mxu0 0.0
    %2759 = vmatpush.msra.mxu0 0.0
    %2760 = vmatpush.msra.mxu0 %v2700
    %2761 = vmatpush.msra.mxu0 %v2699
    %2762 = vmatpush.msra.mxu0 %v2698
    %2763 = vmatpush.msra.mxu0 %v2697
    %2764 = vmatpush.msra.mxu0 %v2696
    %2765 = vmatpush.msra.mxu0 %v2695
    %2766 = vmatpush.msra.mxu0 %v2694
    %2767 = vmatpush.msra.mxu0 %v2693
    %2768 = vmatmul.f32.gmra.mxu0 %v2750
    %v2769 = vpop.f32.mrf.mxu0
    %v2770 = vadd.f32 0.0, %v2769
    %2771 = vdwg.mxu0
    %v2772 = vmax.f32 %v2770, 0.0
    %v2775 = vsel %vm651, %v2746, %v2737
    %v2776 = vsel %vm211, %v2775, 0
    %2778 = vmatpush.msra.mxu0 0.0
    %2779 = vmatpush.msra.mxu0 0.0
    %2780 = vmatpush.msra.mxu0 0.0
    %2781 = vmatpush.msra.mxu0 0.0
    %2782 = vmatpush.msra.mxu0 0.0
    %2783 = vmatpush.msra.mxu0 0.0
    %2784 = vmatpush.msra.mxu0 0.0
    %2785 = vmatpush.msra.mxu0 0.0
    %2786 = vmatpush.msra.mxu0 %v2700
    %2787 = vmatpush.msra.mxu0 %v2699
    %2788 = vmatpush.msra.mxu0 %v2698
    %2789 = vmatpush.msra.mxu0 %v2697
    %2790 = vmatpush.msra.mxu0 %v2696
    %2791 = vmatpush.msra.mxu0 %v2695
    %2792 = vmatpush.msra.mxu0 %v2694
    %2793 = vmatpush.msra.mxu0 %v2693
    %2794 = vmatmul.f32.gmra.mxu0 %v2776
    %v2795 = vpop.f32.mrf.mxu0
    %v2796 = vadd.f32 0.0, %v2795
    %2797 = vdwg.mxu0
    %v2798 = vmax.f32 %v2796, 0.0
    %vm2799 = vcmask 31744
    %v2801 = vsel %vm2799, %v2798, 0
    %v2804 = vsel %vm1101, %v2701, 0
    %2806 = vmatpush.msra.mxu0 0.0
    %2807 = vmatpush.msra.mxu0 0.0
    %2808 = vmatpush.msra.mxu0 0.0
    %2809 = vmatpush.msra.mxu0 0.0
    %2810 = vmatpush.msra.mxu0 0.0
    %2811 = vmatpush.msra.mxu0 0.0
    %2812 = vmatpush.msra.mxu0 0.0
    %2813 = vmatpush.msra.mxu0 0.0
    %2814 = vmatpush.msra.mxu0 0.0
    %2815 = vmatpush.msra.mxu0 0.0
    %2816 = vmatpush.msra.mxu0 0.0
    %2817 = vmatpush.msra.mxu0 0.0
    %2818 = vmatpush.msra.mxu0 0.0
    %2819 = vmatpush.msra.mxu0 0.0
    %2820 = vmatpush.msra.mxu0 0.0
    %2821 = vmatpush.msra.mxu0 %v2804
    %2822 = vmatmul.f32.gmra.mxu0 %v2801
    %v2823 = vpop.f32.mrf.mxu0
    %v2824 = vadd.f32 0.0, %v2823
    %2825 = vdwg.mxu0
    %v2827 = vsel %vm2799, %v2772, 0
    %2829 = vmatpush.msra.mxu0 0.0
    %2830 = vmatpush.msra.mxu0 0.0
    %2831 = vmatpush.msra.mxu0 0.0
    %2832 = vmatpush.msra.mxu0 0.0
    %2833 = vmatpush.msra.mxu0 0.0
    %2834 = vmatpush.msra.mxu0 0.0
    %2835 = vmatpush.msra.mxu0 0.0
    %2836 = vmatpush.msra.mxu0 0.0
    %2837 = vmatpush.msra.mxu0 0.0
    %2838 = vmatpush.msra.mxu0 0.0
    %2839 = vmatpush.msra.mxu0 0.0
    %2840 = vmatpush.msra.mxu0 0.0
    %2841 = vmatpush.msra.mxu0 0.0
    %2842 = vmatpush.msra.mxu0 0.0
    %2843 = vmatpush.msra.mxu0 0.0
    %2844 = vmatpush.msra.mxu0 %v2804
    %2845 = vmatmul.f32.gmra.mxu0 %v2827
    %v2846 = vpop.f32.mrf.mxu0
    %v2847 = vadd.f32 %v2824, %v2846
    %2848 = vdwg.mxu0
    %v2849 = vxor.u32 %v2847, 2147483648
    %v2850 = vmul.f32 %v2849, 1.442695
    %v2851 = vpow.pop %v2850
    %v2852 = vadd.f32 %v2851, 1.0
    %v2853 = vrcp.pop %v2852
    %v2854 = vmul.f32 %v2852, %v2853
    %v2855 = vsub.f32 1.0, %v2854
    %v2856 = vmul.f32 %v2853, %v2855
    %v2857 = vadd.f32 %v2853, %v2856
    %vm2858 = vweird.f32 %v2852
    %vm2859 = vweird.f32 %v2853
    %vm2860 = vmor %vm2858, %vm2859
    %v2861 = vsel %vm2860, %v2853, %v2857
    %v2862 = vand.u32 2147483647, %v2852
    %vm2863 = vcmp.eq.f32.partialorder %v2862, 8.507059e+37
    %v2864 = vand.u32 %v2852, 2147483648
    %v2865 = vor.u32 1.1754944e-38, %v2864
    %v2866 = vsel %vm2863, %v2865, %v2861
    %v2867 = vmul.f32 1.0, %v2866
    %v2869 = vrot.slane %v2867, 1
    %v2870 = vperm.slane %v2867, 0
    %v2871 = vperm.slane %v2869, 0
    %v2874 = vmul.f32 %v2689, %v2870
    %v2875 = vmul.f32 %v2690, %v2870
    %v2876 = vmul.f32 %v2691, %v2871
    %v2877 = vmul.f32 %v2692, %v2871
    %v2878 = vld [vmem:[#allocation13] sm:$0xff]
    %v2879 = vld [vmem:[#allocation13 + $0x8] sm:$0xff]
    %v2880 = vld [vmem:[#allocation13 + $0x10] sm:$0xff]
    %v2881 = vld [vmem:[#allocation13 + $0x18] sm:$0xff]
    %v2882 = vld [vmem:[#allocation13 + $0x20] sm:$0xff]
    %v2883 = vld [vmem:[#allocation13 + $0x28] sm:$0xff]
    %v2884 = vld [vmem:[#allocation13 + $0x30] sm:$0xff]
    %v2885 = vld [vmem:[#allocation13 + $0x38] sm:$0xff]
    %v2886 = vld [vmem:[%s22] sm:$0x1]
    %v2888 = vperm.slane %v2886, 0
    %v2891 = vsel %vm211, %v2874, 0
    %v2894 = vsel %vm211, %v2875, 0
    %v2897 = vsel %vm211, %v2876, 0
    %v2900 = vsel %vm211, %v2877, 0
    %2902 = vmatpush.msra.mxu0 0.0
    %2903 = vmatpush.msra.mxu0 0.0
    %2904 = vmatpush.msra.mxu0 0.0
    %2905 = vmatpush.msra.mxu0 0.0
    %2906 = vmatpush.msra.mxu0 0.0
    %2907 = vmatpush.msra.mxu0 0.0
    %2908 = vmatpush.msra.mxu0 0.0
    %2909 = vmatpush.msra.mxu0 0.0
    %2910 = vmatpush.msra.mxu0 %v2885
    %2911 = vmatpush.msra.mxu0 %v2884
    %2912 = vmatpush.msra.mxu0 %v2883
    %2913 = vmatpush.msra.mxu0 %v2882
    %2914 = vmatpush.msra.mxu0 %v2881
    %2915 = vmatpush.msra.mxu0 %v2880
    %2916 = vmatpush.msra.mxu0 %v2879
    %2917 = vmatpush.msra.mxu0 %v2878
    %2918 = vmatmul.f32.gmra.mxu0 %v2891
    %v2919 = vpop.f32.mrf.mxu0
    %v2920 = vadd.f32 %v2888, %v2919
    %2921 = vmatmul.f32.gmra.mxu0 %v2894
    %v2922 = vpop.f32.mrf.mxu0
    %v2923 = vadd.f32 %v2888, %v2922
    %2924 = vmatmul.f32.gmra.mxu0 %v2897
    %v2925 = vpop.f32.mrf.mxu0
    %v2926 = vadd.f32 %v2888, %v2925
    %2927 = vmatmul.f32.gmra.mxu0 %v2900
    %v2928 = vpop.f32.mrf.mxu0
    %v2929 = vadd.f32 %v2888, %v2928
    %2930 = vdwg.mxu0
    %v2931 = vsel %vm211, %v2920, 0.0
    %v2932 = vsel %vm211, %v2923, 0.0
    %v2933 = vadd.f32 %v2931, %v2932
    %v2934 = vsel %vm211, %v2926, 0.0
    %v2935 = vadd.f32 %v2933, %v2934
    %v2936 = vsel %vm211, %v2929, 0.0
    %v2937 = vadd.f32 %v2935, %v2936
    %v2938 = vrot.slane %v2937, 4
    %v2939 = vadd.f32 %v2937, %v2938
    %v2940 = vrot.slane %v2939, 2
    %v2941 = vadd.f32 %v2939, %v2940
    %v2942 = vrot.slane %v2941, 1
    %v2943 = vadd.f32 %v2941, %v2942
    %v2944 = vrcp.pop 32.0
    %v2945 = vmul.f32 32.0, %v2944
    %v2946 = vsub.f32 1.0, %v2945
    %v2947 = vmul.f32 %v2944, %v2946
    %v2948 = vadd.f32 %v2944, %v2947
    %vm2949 = vweird.f32 %v2944
    %v2950 = vsel %vm2949, %v2944, %v2948
    %v2951 = vmul.f32 %v2943, %v2950
    %v2952 = vmul.f32 %v2920, %v2920
    %v2953 = vmul.f32 %v2923, %v2923
    %v2954 = vmul.f32 %v2926, %v2926
    %v2955 = vmul.f32 %v2929, %v2929
    %v2956 = vsel %vm211, %v2952, 0.0
    %v2957 = vsel %vm211, %v2953, 0.0
    %v2958 = vadd.f32 %v2956, %v2957
    %v2959 = vsel %vm211, %v2954, 0.0
    %v2960 = vadd.f32 %v2958, %v2959
    %v2961 = vsel %vm211, %v2955, 0.0
    %v2962 = vadd.f32 %v2960, %v2961
    %v2963 = vrot.slane %v2962, 4
    %v2964 = vadd.f32 %v2962, %v2963
    %v2965 = vrot.slane %v2964, 2
    %v2966 = vadd.f32 %v2964, %v2965
    %v2967 = vrot.slane %v2966, 1
    %v2968 = vadd.f32 %v2966, %v2967
    %v2969 = vmul.f32 %v2968, %v2950
    %v2970 = vmul.f32 %v2951, %v2951
    %v2971 = vsub.f32 %v2969, %v2970
    %v2972 = vmax.f32 %v2971, 0.0
    %v2973 = vsub.f32 %v2920, %v2951
    %v2974 = vsub.f32 %v2923, %v2951
    %v2975 = vsub.f32 %v2926, %v2951
    %v2976 = vsub.f32 %v2929, %v2951
    %v2977 = vadd.f32 %v2972, 1e-05
    %v2978 = vrsqrt.pop %v2977
    %v2979 = vmul.f32 %v2978, %v2977
    %v2980 = vmul.f32 %v2979, %v2978
    %v2981 = vmul.f32 0.5, %v2980
    %v2982 = vsub.f32 1.5, %v2981
    %v2983 = vmul.f32 %v2978, %v2982
    %vm2984 = vweird.f32 %v2977
    %vm2985 = vweird.f32 %v2978
    %vm2986 = vmor %vm2984, %vm2985
    %v2987 = vsel %vm2986, %v2978, %v2983
    %v2988 = vmul.f32 %v2973, %v2987
    %v2989 = vmul.f32 %v2974, %v2987
    %v2990 = vmul.f32 %v2975, %v2987
    %v2991 = vmul.f32 %v2976, %v2987
    %v2992 = vld [vmem:[%s23] sm:$0x1]
    %v2994 = vperm.slane %v2992, 0
    %v2996 = vmul.f32 %v2988, %v2994
    %v2997 = vmul.f32 %v2989, %v2994
    %v2998 = vmul.f32 %v2990, %v2994
    %v2999 = vmul.f32 %v2991, %v2994
    %v3000 = vld [vmem:[%s24] sm:$0x1]
    %v3002 = vperm.slane %v3000, 0
    %v3004 = vadd.f32 %v2996, %v3002
    %v3005 = vadd.f32 %v2997, %v3002
    %v3006 = vadd.f32 %v2998, %v3002
    %v3007 = vadd.f32 %v2999, %v3002
    %3008 = vst.msk [vmem:[#allocation14] sm:$0xff] %vm211, %v3004
    %3009 = vst.msk [vmem:[#allocation14 + $0x8] sm:$0xff] %vm211, %v3005
    %3010 = vst.msk [vmem:[#allocation14 + $0x10] sm:$0xff] %vm211, %v3006
    %3011 = vst.msk [vmem:[#allocation14 + $0x18] sm:$0xff] %vm211, %v3007
    // Predicated region
    $region130: #{tpu_custom_call.1} parent=1 // pred_check
      _
    $region131: #{tpu_custom_call.1} parent=1 // pred_check_branch
      %3013 = sbr.rel (0) target = $region133
    $region132: #{tpu_custom_call.1} parent=1 // pred_region
      %3015 = vsyncadd [#allocation4], 0
      %s3016 = sshll.u32 [#allocation14], 4
      %s3017 = int_to_ptr.vmem [resolvable:$true] %s3016
      %s3018 = sshll.u32 %s25, 4
      %s3019 = int_to_ptr.hbm [resolvable:$true] %s3018
      %3024 = dma.vmem_to_hbm [thread:$0]  %s3017, 512, %s3019, [#allocation4], 128, 128, 8
    $region133: #{tpu_custom_call.1} parent=1 // pred_fallthru
      _
    // Predicated region
    $region134: #{tpu_custom_call.1} parent=1 // pred_check
      _
    $region135: #{tpu_custom_call.1} parent=1 // pred_check_branch
      %3026 = sbr.rel (0) target = $region137
    $region136: #{tpu_custom_call.1} parent=1 // pred_region
      %3028 = dma.done [#allocation4], 512
    $region137: #{tpu_custom_call.1} parent=1 // pred_fallthru
      _
    %3029 = vsyncpa [#allocation3], 1
    %3030 = vsyncpa [#allocation6], 1
    %3031 = vsyncpa [#allocation9], 1
    %3032 = vsyncpa [#allocation12], 1
    %3033 = vsyncpa [#allocation4], 1

</llo_original>
